<compile_context>
chip_gen: v7x
topology: tpu7x:2x2x1
jax: 0.10.0
libtpu: 0.0.40
codegen_flags: <defaults>
</compile_context>

<pallas_src>
import functools

import jax
import jax.numpy as jnp
from jax import lax
from jax.experimental import pallas as pl
from jax.experimental.pallas import tpu as pltpu


# ----------------------------------------------------------------- helpers ---
def _round_up(x, m):
    return (x + m - 1) // m * m


# ------------------------------------------------------------------ kernel ---
def mlp_kernel(tok_ref, len_ref, w1_ref, b1_ref, w2_ref, b2_ref, w3_ref,
               b3_ref, o_ref, x_ref):
    """Fused bag-of-words + 3-layer MLP for one batch tile.

    tok_ref: (tm, L)   int32 token ids, row b = tokens of batch element b
    len_ref: (tm, 1)   int32 valid lengths
    w*_ref : bf16 weights stored (in, out);  b*_ref: (1, out) f32 biases
    o_ref  : (tm, D_out) f32 logits
    x_ref  : (tm, V)   f32 scratch holding the bag-of-words counts
    """
    tm, L = tok_ref.shape
    V = w1_ref.shape[0]

    # ---- Fused bag-of-words (replaces the XLA scatter-add + dense x in HBM).
    # x[b, v] = number of times token v appears among the first len[b] tokens.
    vocab_ids = lax.broadcasted_iota(jnp.int32, (tm, V), dimension=1)
    lens = len_ref[...]                                    # (tm, 1) int32
    x_ref[...] = jnp.zeros_like(x_ref)
    for t in range(L):                                     # static unroll, L small
        ids = tok_ref[:, t:t + 1]                          # (tm, 1) int32
        hit = (vocab_ids == ids) & (t < lens)              # (tm, V) bool
        x_ref[...] += hit.astype(jnp.float32)

    # Counts are small integers -> exact in bf16 -> bf16 MXU fast path.
    x_bf16 = x_ref[...].astype(jnp.bfloat16)

    # ---- Layer 1: relu(x @ W1 + b1)   (bf16 inputs, f32 accumulation).
    h1 = jnp.dot(x_bf16, w1_ref[...], preferred_element_type=jnp.float32)
    h1 = jnp.maximum(h1 + b1_ref[...], 0.0)
    # TODO(synk): nn.Dropout() is active only in training; identity at inference.

    # ---- Layer 2: relu(h1 @ W2 + b2)  (bf16 MXU path; no f32 matmul emulation).
    h2 = jnp.dot(h1.astype(w2_ref.dtype), w2_ref[...],
                 preferred_element_type=jnp.float32)
    h2 = jnp.maximum(h2 + b2_ref[...], 0.0)

    # ---- Layer 3: h2 @ W3 + b3.
    out = jnp.dot(h2.astype(w3_ref.dtype), w3_ref[...],
                  preferred_element_type=jnp.float32) + b3_ref[...]
    o_ref[...] = out.astype(o_ref.dtype)


# ----------------------------------------------------- one-time weight prep --
def prepare_params(w1, b1, w2, b2, w3, b3, param_dtype=jnp.bfloat16):
    """Model-load-time prep (hoisted out of the per-call forward path).

    Weights are stored (in, out) so the kernel computes x @ W + b (== PyTorch
    x @ W.T + b).  W1's output dim (64) is intentionally NOT padded to 128.
    """
    return dict(
        w1=jnp.asarray(w1, param_dtype),                      # (V,  H1)
        b1=jnp.asarray(b1, jnp.float32).reshape(1, -1),       # (1,  H1)
        w2=jnp.asarray(w2, param_dtype),                      # (H1, H2)
        b2=jnp.asarray(b2, jnp.float32).reshape(1, -1),       # (1,  H2)
        w3=jnp.asarray(w3, param_dtype),                      # (H2, Dout)
        b3=jnp.asarray(b3, jnp.float32).reshape(1, -1),       # (1,  Dout)
    )


# ----------------------------------------------------------------- forward ---
@functools.partial(jax.jit, static_argnames=("block_b",))
def mlp_forward(params, text, text_length, block_b=128):
    """text: (max_len, batch) int32 ids; text_length: (batch,) int32.

    Returns (batch, D_out) float32 logits, matching MLP.forward semantics.
    """
    w1, b1 = params["w1"], params["b1"]
    w2, b2 = params["w2"], params["b2"]
    w3, b3 = params["w3"], params["b3"]
    V, H1 = w1.shape
    H2 = w2.shape[1]
    Dout = w3.shape[1]
    L, B = text.shape

    # Batch tile: clamp to the (sublane-rounded) batch; grows toward an
    # MXU-friendly width for larger batches.
    tm = _round_up(min(block_b, _round_up(B, 8)), 8)
    Bp = _round_up(B, tm)

    # The only per-call glue left: tiny int layout ops on (L, B) token ids.
    tok = jnp.transpose(text).astype(jnp.int32)               # (B, L)
    lens = text_length.astype(jnp.int32).reshape(B, 1)        # (B, 1)
    if Bp != B:
        tok = jnp.pad(tok, ((0, Bp - B), (0, 0)))             # padded rows: id 0
        lens = jnp.pad(lens, ((0, Bp - B), (0, 0)))           # padded rows: len 0

    grid = (Bp // tm,)

    out = pl.pallas_call(
        mlp_kernel,
        out_shape=jax.ShapeDtypeStruct((Bp, Dout), jnp.float32),
        grid_spec=pltpu.PrefetchScalarGridSpec(
            num_scalar_prefetch=0,
            grid=grid,
            in_specs=[
                pl.BlockSpec((tm, L), lambda i: (i, 0)),      # token ids
                pl.BlockSpec((tm, 1), lambda i: (i, 0)),      # lengths
                pl.BlockSpec((V, H1), lambda i: (0, 0)),      # W1 (unpadded, 1 DMA)
                pl.BlockSpec((1, H1), lambda i: (0, 0)),      # b1
                pl.BlockSpec((H1, H2), lambda i: (0, 0)),     # W2 (tiny, resident)
                pl.BlockSpec((1, H2), lambda i: (0, 0)),      # b2
                pl.BlockSpec((H2, Dout), lambda i: (0, 0)),   # W3 (tiny, resident)
                pl.BlockSpec((1, Dout), lambda i: (0, 0)),    # b3
            ],
            out_specs=pl.BlockSpec((tm, Dout), lambda i: (i, 0)),
            scratch_shapes=[pltpu.VMEM((tm, V), jnp.float32)],  # BoW counts
        ),
        compiler_params=pltpu.CompilerParams(
            dimension_semantics=("parallel",),      # batch tiles shard on v7x TCs
            vmem_limit_bytes=32 * 1024 * 1024,      # safe on v5e/v6e/v7x
        ),
    )(tok, lens, w1, b1, w2, b2, w3, b3)

    return out[:B]


# ----------------------------------------------------------------- reference -
def bag_of_words_reference(text, text_length, vocab_size):
    """Dense JAX equivalent of indexTensor2sparseTensor(...).t(), ref-only."""
    max_len, batch = text.shape
    pos = jnp.arange(max_len)[:, None]                              # (L, 1)
    valid = (pos < text_length[None, :]).astype(jnp.float32)        # (L, B)
    cols = jnp.broadcast_to(jnp.arange(batch)[None, :], (max_len, batch))
    bow = jnp.zeros((batch, vocab_size), jnp.float32)
    return bow.at[cols.reshape(-1), text.reshape(-1)].add(valid.reshape(-1))


def init_linear(key, fan_in, fan_out):
    """Deterministic PyTorch-Linear-style init, weight returned as (in, out)."""
    kw, kb = jax.random.split(key)
    bound = 1.0 / jnp.sqrt(float(fan_in))
    w = jax.random.uniform(kw, (fan_in, fan_out), jnp.float32, -bound, bound)
    b = jax.random.uniform(kb, (fan_out,), jnp.float32, -bound, bound)
    return w, b


# --------------------------------------------------------------------- main --
if __name__ == "__main__":
    D_in = 2048        # vocab_size
    D_hidden = 64
    D_out = 4
    batch = 16
    max_len = 12

    key = jax.random.PRNGKey(0)
    k_text, k_len, k1, k2, k3 = jax.random.split(key, 5)

    text = jax.random.randint(k_text, (max_len, batch), 0, D_in, dtype=jnp.int32)
    text_length = jax.random.randint(k_len, (batch,), 1, max_len + 1,
                                     dtype=jnp.int32)

    w1, b1 = init_linear(k1, D_in, D_hidden)
    w2, b2 = init_linear(k2, D_hidden, D_hidden // 2)
    w3, b3 = init_linear(k3, D_hidden // 2, D_out)

    params = prepare_params(w1, b1, w2, b2, w3, b3)   # once, off the hot path

    out = mlp_forward(params, text, text_length)
    out = jax.block_until_ready(out)

    # Correctness check against a plain-JAX reference with the same bf16
    # rounding model as the kernel (f32 accumulation).
    def bf(v):
        return v.astype(jnp.bfloat16).astype(jnp.float32)

    x_ref = bag_of_words_reference(text, text_length, D_in)
    h_ref = jnp.maximum(bf(x_ref) @ bf(w1) + b1, 0.0)
    h_ref = jnp.maximum(bf(h_ref) @ bf(w2) + b2, 0.0)
    out_ref = bf(h_ref) @ bf(w3) + b3

    assert out.shape == (batch, D_out)
    max_err = float(jnp.max(jnp.abs(out - out_ref)))
    assert jnp.allclose(out, out_ref, atol=2e-3, rtol=2e-3), max_err

    print("KERNEL_OK")
</pallas_src>

<mosaic_0001>
module attributes {stable_mosaic.version = 11 : i64} {
  func.func @mlp_kernel(%arg0: i32, %arg1: memref<16x12xi32, #tpu.memory_space<vmem>>, %arg2: memref<16x1xi32, #tpu.memory_space<vmem>>, %arg3: memref<2048x64xbf16, #tpu.memory_space<vmem>>, %arg4: memref<1x64xf32, #tpu.memory_space<vmem>>, %arg5: memref<64x32xbf16, #tpu.memory_space<vmem>>, %arg6: memref<1x32xf32, #tpu.memory_space<vmem>>, %arg7: memref<32x4xbf16, #tpu.memory_space<vmem>>, %arg8: memref<1x4xf32, #tpu.memory_space<vmem>>, %arg9: memref<16x4xf32, #tpu.memory_space<vmem>>, %arg10: memref<16x2048xf32, #tpu.memory_space<vmem>>) attributes {dimension_semantics = [#tpu.dimension_semantics<parallel>], iteration_bounds = array<i64: 1>, scalar_prefetch = 0 : i64, scratch_operands = 1 : i64, tpu.core_type = #tpu.core_type<tc>, window_params = [{transform_indices = @transform_0, window_bounds = array<i64: 16, 12>}, {transform_indices = @transform_1, window_bounds = array<i64: 16, 1>}, {pipeline_mode = #tpu.pipeline_mode<synchronous>, transform_indices = @transform_2, window_bounds = array<i64: 2048, 64>}, {pipeline_mode = #tpu.pipeline_mode<synchronous>, transform_indices = @transform_3, window_bounds = array<i64: 1, 64>}, {pipeline_mode = #tpu.pipeline_mode<synchronous>, transform_indices = @transform_4, window_bounds = array<i64: 64, 32>}, {pipeline_mode = #tpu.pipeline_mode<synchronous>, transform_indices = @transform_5, window_bounds = array<i64: 1, 32>}, {pipeline_mode = #tpu.pipeline_mode<synchronous>, transform_indices = @transform_6, window_bounds = array<i64: 32, 4>}, {pipeline_mode = #tpu.pipeline_mode<synchronous>, transform_indices = @transform_7, window_bounds = array<i64: 1, 4>}, {transform_indices = @transform_8, window_bounds = array<i64: 16, 4>}]} {
    %0 = tpu.iota {dimensions = array<i32: 1>} : vector<16x2048xi32>
    %c0 = arith.constant 0 : index
    %c0_0 = arith.constant 0 : index
    %1 = vector.load %arg2[%c0, %c0_0] : memref<16x1xi32, #tpu.memory_space<vmem>>, vector<16x1xi32>
    %cst = arith.constant 0.000000e+00 : f32
    %2 = vector.broadcast %cst : f32 to vector<16x2048xf32>
    %c0_1 = arith.constant 0 : index
    %c0_2 = arith.constant 0 : index
    %3 = vector.load %arg10[%c0_1, %c0_2] : memref<16x2048xf32, #tpu.memory_space<vmem>>, vector<16x2048xf32>
    tpu.vector_store %arg10[%c0_1, %c0_2], %2 {strides = array<i32>} : memref<16x2048xf32, #tpu.memory_space<vmem>>, vector<16x2048xf32>,
    %c0_3 = arith.constant 0 : index
    %c0_4 = arith.constant 0 : index
    %4 = vector.load %arg1[%c0_3, %c0_4] : memref<16x12xi32, #tpu.memory_space<vmem>>, vector<16x1xi32>
    %5 = vector.broadcast %4 : vector<16x1xi32> to vector<16x2048xi32>
    %6 = arith.cmpi eq, %0, %5 : vector<16x2048xi32>
    %c0_i32 = arith.constant 0 : i32
    %7 = vector.broadcast %c0_i32 : i32 to vector<16x1xi32>
    %8 = arith.cmpi sgt, %1, %7 : vector<16x1xi32>
    %9 = vector.broadcast %8 : vector<16x1xi1> to vector<16x2048xi1>
    %10 = arith.andi %6, %9 : vector<16x2048xi1>
    %c0_5 = arith.constant 0 : index
    %c0_6 = arith.constant 0 : index
    %11 = vector.load %arg10[%c0_5, %c0_6] : memref<16x2048xf32, #tpu.memory_space<vmem>>, vector<16x2048xf32>
    %12 = arith.extui %10 : vector<16x2048xi1> to vector<16x2048xi32>
    %13 = arith.sitofp %12 : vector<16x2048xi32> to vector<16x2048xf32>
    %14 = arith.addf %11, %13 : vector<16x2048xf32>
    %c0_7 = arith.constant 0 : index
    %c0_8 = arith.constant 0 : index
    %15 = vector.load %arg10[%c0_7, %c0_8] : memref<16x2048xf32, #tpu.memory_space<vmem>>, vector<16x2048xf32>
    tpu.vector_store %arg10[%c0_7, %c0_8], %14 {strides = array<i32>} : memref<16x2048xf32, #tpu.memory_space<vmem>>, vector<16x2048xf32>,
    %c0_9 = arith.constant 0 : index
    %c1 = arith.constant 1 : index
    %16 = vector.load %arg1[%c0_9, %c1] : memref<16x12xi32, #tpu.memory_space<vmem>>, vector<16x1xi32>
    %17 = vector.broadcast %16 : vector<16x1xi32> to vector<16x2048xi32>
    %18 = arith.cmpi eq, %0, %17 : vector<16x2048xi32>
    %c1_i32 = arith.constant 1 : i32
    %19 = vector.broadcast %c1_i32 : i32 to vector<16x1xi32>
    %20 = arith.cmpi sgt, %1, %19 : vector<16x1xi32>
    %21 = vector.broadcast %20 : vector<16x1xi1> to vector<16x2048xi1>
    %22 = arith.andi %18, %21 : vector<16x2048xi1>
    %c0_10 = arith.constant 0 : index
    %c0_11 = arith.constant 0 : index
    %23 = vector.load %arg10[%c0_10, %c0_11] : memref<16x2048xf32, #tpu.memory_space<vmem>>, vector<16x2048xf32>
    %24 = arith.extui %22 : vector<16x2048xi1> to vector<16x2048xi32>
    %25 = arith.sitofp %24 : vector<16x2048xi32> to vector<16x2048xf32>
    %26 = arith.addf %23, %25 : vector<16x2048xf32>
    %c0_12 = arith.constant 0 : index
    %c0_13 = arith.constant 0 : index
    %27 = vector.load %arg10[%c0_12, %c0_13] : memref<16x2048xf32, #tpu.memory_space<vmem>>, vector<16x2048xf32>
    tpu.vector_store %arg10[%c0_12, %c0_13], %26 {strides = array<i32>} : memref<16x2048xf32, #tpu.memory_space<vmem>>, vector<16x2048xf32>,
    %c0_14 = arith.constant 0 : index
    %c2 = arith.constant 2 : index
    %28 = vector.load %arg1[%c0_14, %c2] : memref<16x12xi32, #tpu.memory_space<vmem>>, vector<16x1xi32>
    %29 = vector.broadcast %28 : vector<16x1xi32> to vector<16x2048xi32>
    %30 = arith.cmpi eq, %0, %29 : vector<16x2048xi32>
    %c2_i32 = arith.constant 2 : i32
    %31 = vector.broadcast %c2_i32 : i32 to vector<16x1xi32>
    %32 = arith.cmpi sgt, %1, %31 : vector<16x1xi32>
    %33 = vector.broadcast %32 : vector<16x1xi1> to vector<16x2048xi1>
    %34 = arith.andi %30, %33 : vector<16x2048xi1>
    %c0_15 = arith.constant 0 : index
    %c0_16 = arith.constant 0 : index
    %35 = vector.load %arg10[%c0_15, %c0_16] : memref<16x2048xf32, #tpu.memory_space<vmem>>, vector<16x2048xf32>
    %36 = arith.extui %34 : vector<16x2048xi1> to vector<16x2048xi32>
    %37 = arith.sitofp %36 : vector<16x2048xi32> to vector<16x2048xf32>
    %38 = arith.addf %35, %37 : vector<16x2048xf32>
    %c0_17 = arith.constant 0 : index
    %c0_18 = arith.constant 0 : index
    %39 = vector.load %arg10[%c0_17, %c0_18] : memref<16x2048xf32, #tpu.memory_space<vmem>>, vector<16x2048xf32>
    tpu.vector_store %arg10[%c0_17, %c0_18], %38 {strides = array<i32>} : memref<16x2048xf32, #tpu.memory_space<vmem>>, vector<16x2048xf32>,
    %c0_19 = arith.constant 0 : index
    %c3 = arith.constant 3 : index
    %40 = vector.load %arg1[%c0_19, %c3] : memref<16x12xi32, #tpu.memory_space<vmem>>, vector<16x1xi32>
    %41 = vector.broadcast %40 : vector<16x1xi32> to vector<16x2048xi32>
    %42 = arith.cmpi eq, %0, %41 : vector<16x2048xi32>
    %c3_i32 = arith.constant 3 : i32
    %43 = vector.broadcast %c3_i32 : i32 to vector<16x1xi32>
    %44 = arith.cmpi sgt, %1, %43 : vector<16x1xi32>
    %45 = vector.broadcast %44 : vector<16x1xi1> to vector<16x2048xi1>
    %46 = arith.andi %42, %45 : vector<16x2048xi1>
    %c0_20 = arith.constant 0 : index
    %c0_21 = arith.constant 0 : index
    %47 = vector.load %arg10[%c0_20, %c0_21] : memref<16x2048xf32, #tpu.memory_space<vmem>>, vector<16x2048xf32>
    %48 = arith.extui %46 : vector<16x2048xi1> to vector<16x2048xi32>
    %49 = arith.sitofp %48 : vector<16x2048xi32> to vector<16x2048xf32>
    %50 = arith.addf %47, %49 : vector<16x2048xf32>
    %c0_22 = arith.constant 0 : index
    %c0_23 = arith.constant 0 : index
    %51 = vector.load %arg10[%c0_22, %c0_23] : memref<16x2048xf32, #tpu.memory_space<vmem>>, vector<16x2048xf32>
    tpu.vector_store %arg10[%c0_22, %c0_23], %50 {strides = array<i32>} : memref<16x2048xf32, #tpu.memory_space<vmem>>, vector<16x2048xf32>,
    %c0_24 = arith.constant 0 : index
    %c4 = arith.constant 4 : index
    %52 = vector.load %arg1[%c0_24, %c4] : memref<16x12xi32, #tpu.memory_space<vmem>>, vector<16x1xi32>
    %53 = vector.broadcast %52 : vector<16x1xi32> to vector<16x2048xi32>
    %54 = arith.cmpi eq, %0, %53 : vector<16x2048xi32>
    %c4_i32 = arith.constant 4 : i32
    %55 = vector.broadcast %c4_i32 : i32 to vector<16x1xi32>
    %56 = arith.cmpi sgt, %1, %55 : vector<16x1xi32>
    %57 = vector.broadcast %56 : vector<16x1xi1> to vector<16x2048xi1>
    %58 = arith.andi %54, %57 : vector<16x2048xi1>
    %c0_25 = arith.constant 0 : index
    %c0_26 = arith.constant 0 : index
    %59 = vector.load %arg10[%c0_25, %c0_26] : memref<16x2048xf32, #tpu.memory_space<vmem>>, vector<16x2048xf32>
    %60 = arith.extui %58 : vector<16x2048xi1> to vector<16x2048xi32>
    %61 = arith.sitofp %60 : vector<16x2048xi32> to vector<16x2048xf32>
    %62 = arith.addf %59, %61 : vector<16x2048xf32>
    %c0_27 = arith.constant 0 : index
    %c0_28 = arith.constant 0 : index
    %63 = vector.load %arg10[%c0_27, %c0_28] : memref<16x2048xf32, #tpu.memory_space<vmem>>, vector<16x2048xf32>
    tpu.vector_store %arg10[%c0_27, %c0_28], %62 {strides = array<i32>} : memref<16x2048xf32, #tpu.memory_space<vmem>>, vector<16x2048xf32>,
    %c0_29 = arith.constant 0 : index
    %c5 = arith.constant 5 : index
    %64 = vector.load %arg1[%c0_29, %c5] : memref<16x12xi32, #tpu.memory_space<vmem>>, vector<16x1xi32>
    %65 = vector.broadcast %64 : vector<16x1xi32> to vector<16x2048xi32>
    %66 = arith.cmpi eq, %0, %65 : vector<16x2048xi32>
    %c5_i32 = arith.constant 5 : i32
    %67 = vector.broadcast %c5_i32 : i32 to vector<16x1xi32>
    %68 = arith.cmpi sgt, %1, %67 : vector<16x1xi32>
    %69 = vector.broadcast %68 : vector<16x1xi1> to vector<16x2048xi1>
    %70 = arith.andi %66, %69 : vector<16x2048xi1>
    %c0_30 = arith.constant 0 : index
    %c0_31 = arith.constant 0 : index
    %71 = vector.load %arg10[%c0_30, %c0_31] : memref<16x2048xf32, #tpu.memory_space<vmem>>, vector<16x2048xf32>
    %72 = arith.extui %70 : vector<16x2048xi1> to vector<16x2048xi32>
    %73 = arith.sitofp %72 : vector<16x2048xi32> to vector<16x2048xf32>
    %74 = arith.addf %71, %73 : vector<16x2048xf32>
    %c0_32 = arith.constant 0 : index
    %c0_33 = arith.constant 0 : index
    %75 = vector.load %arg10[%c0_32, %c0_33] : memref<16x2048xf32, #tpu.memory_space<vmem>>, vector<16x2048xf32>
    tpu.vector_store %arg10[%c0_32, %c0_33], %74 {strides = array<i32>} : memref<16x2048xf32, #tpu.memory_space<vmem>>, vector<16x2048xf32>,
    %c0_34 = arith.constant 0 : index
    %c6 = arith.constant 6 : index
    %76 = vector.load %arg1[%c0_34, %c6] : memref<16x12xi32, #tpu.memory_space<vmem>>, vector<16x1xi32>
    %77 = vector.broadcast %76 : vector<16x1xi32> to vector<16x2048xi32>
    %78 = arith.cmpi eq, %0, %77 : vector<16x2048xi32>
    %c6_i32 = arith.constant 6 : i32
    %79 = vector.broadcast %c6_i32 : i32 to vector<16x1xi32>
    %80 = arith.cmpi sgt, %1, %79 : vector<16x1xi32>
    %81 = vector.broadcast %80 : vector<16x1xi1> to vector<16x2048xi1>
    %82 = arith.andi %78, %81 : vector<16x2048xi1>
    %c0_35 = arith.constant 0 : index
    %c0_36 = arith.constant 0 : index
    %83 = vector.load %arg10[%c0_35, %c0_36] : memref<16x2048xf32, #tpu.memory_space<vmem>>, vector<16x2048xf32>
    %84 = arith.extui %82 : vector<16x2048xi1> to vector<16x2048xi32>
    %85 = arith.sitofp %84 : vector<16x2048xi32> to vector<16x2048xf32>
    %86 = arith.addf %83, %85 : vector<16x2048xf32>
    %c0_37 = arith.constant 0 : index
    %c0_38 = arith.constant 0 : index
    %87 = vector.load %arg10[%c0_37, %c0_38] : memref<16x2048xf32, #tpu.memory_space<vmem>>, vector<16x2048xf32>
    tpu.vector_store %arg10[%c0_37, %c0_38], %86 {strides = array<i32>} : memref<16x2048xf32, #tpu.memory_space<vmem>>, vector<16x2048xf32>,
    %c0_39 = arith.constant 0 : index
    %c7 = arith.constant 7 : index
    %88 = vector.load %arg1[%c0_39, %c7] : memref<16x12xi32, #tpu.memory_space<vmem>>, vector<16x1xi32>
    %89 = vector.broadcast %88 : vector<16x1xi32> to vector<16x2048xi32>
    %90 = arith.cmpi eq, %0, %89 : vector<16x2048xi32>
    %c7_i32 = arith.constant 7 : i32
    %91 = vector.broadcast %c7_i32 : i32 to vector<16x1xi32>
    %92 = arith.cmpi sgt, %1, %91 : vector<16x1xi32>
    %93 = vector.broadcast %92 : vector<16x1xi1> to vector<16x2048xi1>
    %94 = arith.andi %90, %93 : vector<16x2048xi1>
    %c0_40 = arith.constant 0 : index
    %c0_41 = arith.constant 0 : index
    %95 = vector.load %arg10[%c0_40, %c0_41] : memref<16x2048xf32, #tpu.memory_space<vmem>>, vector<16x2048xf32>
    %96 = arith.extui %94 : vector<16x2048xi1> to vector<16x2048xi32>
    %97 = arith.sitofp %96 : vector<16x2048xi32> to vector<16x2048xf32>
    %98 = arith.addf %95, %97 : vector<16x2048xf32>
    %c0_42 = arith.constant 0 : index
    %c0_43 = arith.constant 0 : index
    %99 = vector.load %arg10[%c0_42, %c0_43] : memref<16x2048xf32, #tpu.memory_space<vmem>>, vector<16x2048xf32>
    tpu.vector_store %arg10[%c0_42, %c0_43], %98 {strides = array<i32>} : memref<16x2048xf32, #tpu.memory_space<vmem>>, vector<16x2048xf32>,
    %c0_44 = arith.constant 0 : index
    %c8 = arith.constant 8 : index
    %100 = vector.load %arg1[%c0_44, %c8] : memref<16x12xi32, #tpu.memory_space<vmem>>, vector<16x1xi32>
    %101 = vector.broadcast %100 : vector<16x1xi32> to vector<16x2048xi32>
    %102 = arith.cmpi eq, %0, %101 : vector<16x2048xi32>
    %c8_i32 = arith.constant 8 : i32
    %103 = vector.broadcast %c8_i32 : i32 to vector<16x1xi32>
    %104 = arith.cmpi sgt, %1, %103 : vector<16x1xi32>
    %105 = vector.broadcast %104 : vector<16x1xi1> to vector<16x2048xi1>
    %106 = arith.andi %102, %105 : vector<16x2048xi1>
    %c0_45 = arith.constant 0 : index
    %c0_46 = arith.constant 0 : index
    %107 = vector.load %arg10[%c0_45, %c0_46] : memref<16x2048xf32, #tpu.memory_space<vmem>>, vector<16x2048xf32>
    %108 = arith.extui %106 : vector<16x2048xi1> to vector<16x2048xi32>
    %109 = arith.sitofp %108 : vector<16x2048xi32> to vector<16x2048xf32>
    %110 = arith.addf %107, %109 : vector<16x2048xf32>
    %c0_47 = arith.constant 0 : index
    %c0_48 = arith.constant 0 : index
    %111 = vector.load %arg10[%c0_47, %c0_48] : memref<16x2048xf32, #tpu.memory_space<vmem>>, vector<16x2048xf32>
    tpu.vector_store %arg10[%c0_47, %c0_48], %110 {strides = array<i32>} : memref<16x2048xf32, #tpu.memory_space<vmem>>, vector<16x2048xf32>,
    %c0_49 = arith.constant 0 : index
    %c9 = arith.constant 9 : index
    %112 = vector.load %arg1[%c0_49, %c9] : memref<16x12xi32, #tpu.memory_space<vmem>>, vector<16x1xi32>
    %113 = vector.broadcast %112 : vector<16x1xi32> to vector<16x2048xi32>
    %114 = arith.cmpi eq, %0, %113 : vector<16x2048xi32>
    %c9_i32 = arith.constant 9 : i32
    %115 = vector.broadcast %c9_i32 : i32 to vector<16x1xi32>
    %116 = arith.cmpi sgt, %1, %115 : vector<16x1xi32>
    %117 = vector.broadcast %116 : vector<16x1xi1> to vector<16x2048xi1>
    %118 = arith.andi %114, %117 : vector<16x2048xi1>
    %c0_50 = arith.constant 0 : index
    %c0_51 = arith.constant 0 : index
    %119 = vector.load %arg10[%c0_50, %c0_51] : memref<16x2048xf32, #tpu.memory_space<vmem>>, vector<16x2048xf32>
    %120 = arith.extui %118 : vector<16x2048xi1> to vector<16x2048xi32>
    %121 = arith.sitofp %120 : vector<16x2048xi32> to vector<16x2048xf32>
    %122 = arith.addf %119, %121 : vector<16x2048xf32>
    %c0_52 = arith.constant 0 : index
    %c0_53 = arith.constant 0 : index
    %123 = vector.load %arg10[%c0_52, %c0_53] : memref<16x2048xf32, #tpu.memory_space<vmem>>, vector<16x2048xf32>
    tpu.vector_store %arg10[%c0_52, %c0_53], %122 {strides = array<i32>} : memref<16x2048xf32, #tpu.memory_space<vmem>>, vector<16x2048xf32>,
    %c0_54 = arith.constant 0 : index
    %c10 = arith.constant 10 : index
    %124 = vector.load %arg1[%c0_54, %c10] : memref<16x12xi32, #tpu.memory_space<vmem>>, vector<16x1xi32>
    %125 = vector.broadcast %124 : vector<16x1xi32> to vector<16x2048xi32>
    %126 = arith.cmpi eq, %0, %125 : vector<16x2048xi32>
    %c10_i32 = arith.constant 10 : i32
    %127 = vector.broadcast %c10_i32 : i32 to vector<16x1xi32>
    %128 = arith.cmpi sgt, %1, %127 : vector<16x1xi32>
    %129 = vector.broadcast %128 : vector<16x1xi1> to vector<16x2048xi1>
    %130 = arith.andi %126, %129 : vector<16x2048xi1>
    %c0_55 = arith.constant 0 : index
    %c0_56 = arith.constant 0 : index
    %131 = vector.load %arg10[%c0_55, %c0_56] : memref<16x2048xf32, #tpu.memory_space<vmem>>, vector<16x2048xf32>
    %132 = arith.extui %130 : vector<16x2048xi1> to vector<16x2048xi32>
    %133 = arith.sitofp %132 : vector<16x2048xi32> to vector<16x2048xf32>
    %134 = arith.addf %131, %133 : vector<16x2048xf32>
    %c0_57 = arith.constant 0 : index
    %c0_58 = arith.constant 0 : index
    %135 = vector.load %arg10[%c0_57, %c0_58] : memref<16x2048xf32, #tpu.memory_space<vmem>>, vector<16x2048xf32>
    tpu.vector_store %arg10[%c0_57, %c0_58], %134 {strides = array<i32>} : memref<16x2048xf32, #tpu.memory_space<vmem>>, vector<16x2048xf32>,
    %c0_59 = arith.constant 0 : index
    %c11 = arith.constant 11 : index
    %136 = vector.load %arg1[%c0_59, %c11] : memref<16x12xi32, #tpu.memory_space<vmem>>, vector<16x1xi32>
    %137 = vector.broadcast %136 : vector<16x1xi32> to vector<16x2048xi32>
    %138 = arith.cmpi eq, %0, %137 : vector<16x2048xi32>
    %c11_i32 = arith.constant 11 : i32
    %139 = vector.broadcast %c11_i32 : i32 to vector<16x1xi32>
    %140 = arith.cmpi sgt, %1, %139 : vector<16x1xi32>
    %141 = vector.broadcast %140 : vector<16x1xi1> to vector<16x2048xi1>
    %142 = arith.andi %138, %141 : vector<16x2048xi1>
    %c0_60 = arith.constant 0 : index
    %c0_61 = arith.constant 0 : index
    %143 = vector.load %arg10[%c0_60, %c0_61] : memref<16x2048xf32, #tpu.memory_space<vmem>>, vector<16x2048xf32>
    %144 = arith.extui %142 : vector<16x2048xi1> to vector<16x2048xi32>
    %145 = arith.sitofp %144 : vector<16x2048xi32> to vector<16x2048xf32>
    %146 = arith.addf %143, %145 : vector<16x2048xf32>
    %c0_62 = arith.constant 0 : index
    %c0_63 = arith.constant 0 : index
    %147 = vector.load %arg10[%c0_62, %c0_63] : memref<16x2048xf32, #tpu.memory_space<vmem>>, vector<16x2048xf32>
    tpu.vector_store %arg10[%c0_62, %c0_63], %146 {strides = array<i32>} : memref<16x2048xf32, #tpu.memory_space<vmem>>, vector<16x2048xf32>,
    %c0_64 = arith.constant 0 : index
    %c0_65 = arith.constant 0 : index
    %148 = vector.load %arg10[%c0_64, %c0_65] : memref<16x2048xf32, #tpu.memory_space<vmem>>, vector<16x2048xf32>
    %149 = arith.truncf %148 : vector<16x2048xf32> to vector<16x2048xbf16>
    %c0_66 = arith.constant 0 : index
    %c0_67 = arith.constant 0 : index
    %150 = vector.load %arg3[%c0_66, %c0_67] : memref<2048x64xbf16, #tpu.memory_space<vmem>>, vector<2048x64xbf16>
    %cst_68 = arith.constant dense<0.000000e+00> : vector<16x64xf32>
    %151 = tpu.matmul %149, %150, %cst_68 {dimension_numbers = #tpu.dot_dimension_numbers<[1], [0], [0], [1], [0, 0, 1, 1], [], []>} : vector<16x2048xbf16>, vector<2048x64xbf16>, vector<16x64xf32> -> vector<16x64xf32>
    %c0_69 = arith.constant 0 : index
    %c0_70 = arith.constant 0 : index
    %152 = vector.load %arg4[%c0_69, %c0_70] : memref<1x64xf32, #tpu.memory_space<vmem>>, vector<1x64xf32>
    %153 = vector.broadcast %152 : vector<1x64xf32> to vector<16x64xf32>
    %154 = arith.addf %151, %153 : vector<16x64xf32>
    %cst_71 = arith.constant 0.000000e+00 : f32
    %155 = vector.broadcast %cst_71 : f32 to vector<16x64xf32>
    %156 = arith.maximumf %154, %155 : vector<16x64xf32>
    %157 = arith.truncf %156 : vector<16x64xf32> to vector<16x64xbf16>
    %c0_72 = arith.constant 0 : index
    %c0_73 = arith.constant 0 : index
    %158 = vector.load %arg5[%c0_72, %c0_73] : memref<64x32xbf16, #tpu.memory_space<vmem>>, vector<64x32xbf16>
    %cst_74 = arith.constant dense<0.000000e+00> : vector<16x32xf32>
    %159 = tpu.matmul %157, %158, %cst_74 {dimension_numbers = #tpu.dot_dimension_numbers<[1], [0], [0], [1], [0, 0, 1, 1], [], []>} : vector<16x64xbf16>, vector<64x32xbf16>, vector<16x32xf32> -> vector<16x32xf32>
    %c0_75 = arith.constant 0 : index
    %c0_76 = arith.constant 0 : index
    %160 = vector.load %arg6[%c0_75, %c0_76] : memref<1x32xf32, #tpu.memory_space<vmem>>, vector<1x32xf32>
    %161 = vector.broadcast %160 : vector<1x32xf32> to vector<16x32xf32>
    %162 = arith.addf %159, %161 : vector<16x32xf32>
    %cst_77 = arith.constant 0.000000e+00 : f32
    %163 = vector.broadcast %cst_77 : f32 to vector<16x32xf32>
    %164 = arith.maximumf %162, %163 : vector<16x32xf32>
    %165 = arith.truncf %164 : vector<16x32xf32> to vector<16x32xbf16>
    %c0_78 = arith.constant 0 : index
    %c0_79 = arith.constant 0 : index
    %166 = vector.load %arg7[%c0_78, %c0_79] : memref<32x4xbf16, #tpu.memory_space<vmem>>, vector<32x4xbf16>
    %cst_80 = arith.constant dense<0.000000e+00> : vector<16x4xf32>
    %167 = tpu.matmul %165, %166, %cst_80 {dimension_numbers = #tpu.dot_dimension_numbers<[1], [0], [0], [1], [0, 0, 1, 1], [], []>} : vector<16x32xbf16>, vector<32x4xbf16>, vector<16x4xf32> -> vector<16x4xf32>
    %c0_81 = arith.constant 0 : index
    %c0_82 = arith.constant 0 : index
    %168 = vector.load %arg8[%c0_81, %c0_82] : memref<1x4xf32, #tpu.memory_space<vmem>>, vector<1x4xf32>
    %169 = vector.broadcast %168 : vector<1x4xf32> to vector<16x4xf32>
    %170 = arith.addf %167, %169 : vector<16x4xf32>
    %c0_83 = arith.constant 0 : index
    %c0_84 = arith.constant 0 : index
    %171 = vector.load %arg9[%c0_83, %c0_84] : memref<16x4xf32, #tpu.memory_space<vmem>>, vector<16x4xf32>
    tpu.vector_store %arg9[%c0_83, %c0_84], %170 {strides = array<i32>} : memref<16x4xf32, #tpu.memory_space<vmem>>, vector<16x4xf32>,
    return
  }
  func.func @transform_0(%arg0: i32) -> (i32, i32) {
    %c0_i32 = arith.constant 0 : i32
    %c0_i32_0 = arith.constant 0 : i32
    return %arg0, %c0_i32 : i32, i32
  }
  func.func @transform_1(%arg0: i32) -> (i32, i32) {
    %c0_i32 = arith.constant 0 : i32
    %c0_i32_0 = arith.constant 0 : i32
    return %arg0, %c0_i32 : i32, i32
  }
  func.func @transform_2(%arg0: i32) -> (i32, i32) {
    %c0_i32 = arith.constant 0 : i32
    %c0_i32_0 = arith.constant 0 : i32
    %c0_i32_1 = arith.constant 0 : i32
    return %c0_i32, %c0_i32_0 : i32, i32
  }
  func.func @transform_3(%arg0: i32) -> (i32, i32) {
    %c0_i32 = arith.constant 0 : i32
    %c0_i32_0 = arith.constant 0 : i32
    %c0_i32_1 = arith.constant 0 : i32
    return %c0_i32, %c0_i32_0 : i32, i32
  }
  func.func @transform_4(%arg0: i32) -> (i32, i32) {
    %c0_i32 = arith.constant 0 : i32
    %c0_i32_0 = arith.constant 0 : i32
    %c0_i32_1 = arith.constant 0 : i32
    return %c0_i32, %c0_i32_0 : i32, i32
  }
  func.func @transform_5(%arg0: i32) -> (i32, i32) {
    %c0_i32 = arith.constant 0 : i32
    %c0_i32_0 = arith.constant 0 : i32
    %c0_i32_1 = arith.constant 0 : i32
    return %c0_i32, %c0_i32_0 : i32, i32
  }
  func.func @transform_6(%arg0: i32) -> (i32, i32) {
    %c0_i32 = arith.constant 0 : i32
    %c0_i32_0 = arith.constant 0 : i32
    %c0_i32_1 = arith.constant 0 : i32
    return %c0_i32, %c0_i32_0 : i32, i32
  }
  func.func @transform_7(%arg0: i32) -> (i32, i32) {
    %c0_i32 = arith.constant 0 : i32
    %c0_i32_0 = arith.constant 0 : i32
    %c0_i32_1 = arith.constant 0 : i32
    return %c0_i32, %c0_i32_0 : i32, i32
  }
  func.func @transform_8(%arg0: i32) -> (i32, i32) {
    %c0_i32 = arith.constant 0 : i32
    %c0_i32_0 = arith.constant 0 : i32
    return %arg0, %c0_i32 : i32, i32
  }
}

</mosaic_0001>

<llo_original>
// kernel: mlp_forward.1
$region0: #{mlp_forward.1}
  #allocation0 [shape = 'u32[]', space=smem, size = 0x4, offset = 0x4, fixed_abs, tag = 'smem constant byte address 0x4 - core index']
  #allocation1 [shape = 'u32[144,128]{1,0:T(1,128)}', space=vmem, size = 0x12000, scoped, tag = 'internal scratch']
  #allocation2 [shape = 'f32[16,2048]{1,0:T(8,128)}', space=vmem, size = 0x20000, scoped, tag = 'scratch operand']
  %s0 = inlined_call_operand.vmem [shape: s32[16,12], index: 0, kind: input, shape index: {}]
  %s1 = inlined_call_operand.vmem [shape: s32[16,1], index: 1, kind: input, shape index: {}]
  %s2 = inlined_call_operand.vmem [shape: bf16[2048,64], index: 2, kind: input, shape index: {}]
  %s3 = inlined_call_operand.vmem [shape: f32[1,64], index: 3, kind: input, shape index: {}]
  %s4 = inlined_call_operand.vmem [shape: bf16[64,32], index: 4, kind: input, shape index: {}]
  %s5 = inlined_call_operand.vmem [shape: f32[1,32], index: 5, kind: input, shape index: {}]
  %s6 = inlined_call_operand.vmem [shape: bf16[32,4], index: 6, kind: input, shape index: {}]
  %s7 = inlined_call_operand.vmem [shape: f32[1,4], index: 7, kind: input, shape index: {}]
  %s8 = inlined_call_operand.vmem [shape: f32[16,4], index: 8, kind: output, shape index: {}]
  %s9 = sld [smem:[#allocation0]]
  $region42: #{mlp_forward.1} parent=0
    _
  %s11 = ssub.s32 1, %s9
  %s12 = scalar_select 0, %s11, %s9
  // Predicated region
  $region2: #{mlp_forward.1} parent=0 // pred_check
    _
  $region3: #{mlp_forward.1} parent=0 // pred_check_branch
    %14 = sbr.rel (0) target = $region5
  $region4: #{mlp_forward.1} parent=0 // pred_region
    _
  $region5: #{mlp_forward.1} parent=0 // pred_fallthru
    _
  // Predicated region
  $region6: #{mlp_forward.1} parent=0 // pred_check
    _
  $region7: #{mlp_forward.1} parent=0 // pred_check_branch
    %16 = sbr.rel (0) target = $region9
  $region8: #{mlp_forward.1} parent=0 // pred_region
    _
  $region9: #{mlp_forward.1} parent=0 // pred_fallthru
    _
  // Predicated region
  $region10: #{mlp_forward.1} parent=0 // pred_check
    _
  $region11: #{mlp_forward.1} parent=0 // pred_check_branch
    %18 = sbr.rel (0) target = $region13
  $region12: #{mlp_forward.1} parent=0 // pred_region
    _
  $region13: #{mlp_forward.1} parent=0 // pred_fallthru
    _
  // Predicated region
  $region14: #{mlp_forward.1} parent=0 // pred_check
    _
  $region15: #{mlp_forward.1} parent=0 // pred_check_branch
    %20 = sbr.rel (0) target = $region17
  $region16: #{mlp_forward.1} parent=0 // pred_region
    _
  $region17: #{mlp_forward.1} parent=0 // pred_fallthru
    _
  // Predicated region
  $region18: #{mlp_forward.1} parent=0 // pred_check
    _
  $region19: #{mlp_forward.1} parent=0 // pred_check_branch
    %22 = sbr.rel (0) target = $region21
  $region20: #{mlp_forward.1} parent=0 // pred_region
    _
  $region21: #{mlp_forward.1} parent=0 // pred_fallthru
    _
  // Predicated region
  $region22: #{mlp_forward.1} parent=0 // pred_check
    _
  $region23: #{mlp_forward.1} parent=0 // pred_check_branch
    %24 = sbr.rel (0) target = $region25
  $region24: #{mlp_forward.1} parent=0 // pred_region
    _
  $region25: #{mlp_forward.1} parent=0 // pred_fallthru
    _
  // Predicated region
  $region26: #{mlp_forward.1} parent=0 // pred_check
    _
  $region27: #{mlp_forward.1} parent=0 // pred_check_branch
    %26 = sbr.rel (0) target = $region29
  $region28: #{mlp_forward.1} parent=0 // pred_region
    _
  $region29: #{mlp_forward.1} parent=0 // pred_fallthru
    _
  // Predicated region
  $region30: #{mlp_forward.1} parent=0 // pred_check
    _
  $region31: #{mlp_forward.1} parent=0 // pred_check_branch
    %28 = sbr.rel (0) target = $region33
  $region32: #{mlp_forward.1} parent=0 // pred_region
    _
  $region33: #{mlp_forward.1} parent=0 // pred_fallthru
    _
  %v30 = vlaneseq
  %v31 = vand.u32 %v30, 127
  %v32 = vadd.s32 %v31, 128
  %v33 = vadd.s32 %v31, 256
  %v34 = vadd.s32 %v31, 384
  %v35 = vadd.s32 %v31, 512
  %v36 = vadd.s32 %v31, 640
  %v37 = vadd.s32 %v31, 768
  %v38 = vadd.s32 %v31, 896
  %v39 = vadd.s32 %v31, 1024
  %v40 = vadd.s32 %v31, 1152
  %v41 = vadd.s32 %v31, 1280
  %v42 = vadd.s32 %v31, 1408
  %v43 = vadd.s32 %v31, 1536
  %v44 = vadd.s32 %v31, 1664
  %v45 = vadd.s32 %v31, 1792
  %v46 = vadd.s32 %v31, 1920
  %v47 = vld [vmem:[%s1] sm:$0xff]
  %v48 = vld [vmem:[%s1 + $0x8] sm:$0xff]
  %49 = vst [vmem:[#allocation2] sm:$0xff] 0.0
  %50 = vst [vmem:[#allocation2 + $0x8] sm:$0xff] 0.0
  %51 = vst [vmem:[#allocation2 + $0x10] sm:$0xff] 0.0
  %52 = vst [vmem:[#allocation2 + $0x18] sm:$0xff] 0.0
  %53 = vst [vmem:[#allocation2 + $0x20] sm:$0xff] 0.0
  %54 = vst [vmem:[#allocation2 + $0x28] sm:$0xff] 0.0
  %55 = vst [vmem:[#allocation2 + $0x30] sm:$0xff] 0.0
  %56 = vst [vmem:[#allocation2 + $0x38] sm:$0xff] 0.0
  %57 = vst [vmem:[#allocation2 + $0x40] sm:$0xff] 0.0
  %58 = vst [vmem:[#allocation2 + $0x48] sm:$0xff] 0.0
  %59 = vst [vmem:[#allocation2 + $0x50] sm:$0xff] 0.0
  %60 = vst [vmem:[#allocation2 + $0x58] sm:$0xff] 0.0
  %61 = vst [vmem:[#allocation2 + $0x60] sm:$0xff] 0.0
  %62 = vst [vmem:[#allocation2 + $0x68] sm:$0xff] 0.0
  %63 = vst [vmem:[#allocation2 + $0x70] sm:$0xff] 0.0
  %64 = vst [vmem:[#allocation2 + $0x78] sm:$0xff] 0.0
  %65 = vst [vmem:[#allocation2 + $0x80] sm:$0xff] 0.0
  %66 = vst [vmem:[#allocation2 + $0x88] sm:$0xff] 0.0
  %67 = vst [vmem:[#allocation2 + $0x90] sm:$0xff] 0.0
  %68 = vst [vmem:[#allocation2 + $0x98] sm:$0xff] 0.0
  %69 = vst [vmem:[#allocation2 + $0xa0] sm:$0xff] 0.0
  %70 = vst [vmem:[#allocation2 + $0xa8] sm:$0xff] 0.0
  %71 = vst [vmem:[#allocation2 + $0xb0] sm:$0xff] 0.0
  %72 = vst [vmem:[#allocation2 + $0xb8] sm:$0xff] 0.0
  %73 = vst [vmem:[#allocation2 + $0xc0] sm:$0xff] 0.0
  %74 = vst [vmem:[#allocation2 + $0xc8] sm:$0xff] 0.0
  %75 = vst [vmem:[#allocation2 + $0xd0] sm:$0xff] 0.0
  %76 = vst [vmem:[#allocation2 + $0xd8] sm:$0xff] 0.0
  %77 = vst [vmem:[#allocation2 + $0xe0] sm:$0xff] 0.0
  %78 = vst [vmem:[#allocation2 + $0xe8] sm:$0xff] 0.0
  %79 = vst [vmem:[#allocation2 + $0xf0] sm:$0xff] 0.0
  %80 = vst [vmem:[#allocation2 + $0xf8] sm:$0xff] 0.0
  %v81 = vld [vmem:[%s0] sm:$0xff]
  %v82 = vld [vmem:[%s0 + $0x8] sm:$0xff]
  %83 = vset.pattern.permute.xlu0 0
  %84 = vperm.xlu0 %83, %v81
  %v85 = vpop.permute.xlu0 %84
  %86 = vset.pattern.permute.xlu0 0
  %87 = vperm.xlu0 %86, %v82
  %v88 = vpop.permute.xlu0 %87
  %vm89 = vcmp.eq.s32.totalorder %v31, %v85
  %vm90 = vcmp.eq.s32.totalorder %v32, %v85
  %vm91 = vcmp.eq.s32.totalorder %v33, %v85
  %vm92 = vcmp.eq.s32.totalorder %v34, %v85
  %vm93 = vcmp.eq.s32.totalorder %v35, %v85
  %vm94 = vcmp.eq.s32.totalorder %v36, %v85
  %vm95 = vcmp.eq.s32.totalorder %v37, %v85
  %vm96 = vcmp.eq.s32.totalorder %v38, %v85
  %vm97 = vcmp.eq.s32.totalorder %v39, %v85
  %vm98 = vcmp.eq.s32.totalorder %v40, %v85
  %vm99 = vcmp.eq.s32.totalorder %v41, %v85
  %vm100 = vcmp.eq.s32.totalorder %v42, %v85
  %vm101 = vcmp.eq.s32.totalorder %v43, %v85
  %vm102 = vcmp.eq.s32.totalorder %v44, %v85
  %vm103 = vcmp.eq.s32.totalorder %v45, %v85
  %vm104 = vcmp.eq.s32.totalorder %v46, %v85
  %vm105 = vcmp.eq.s32.totalorder %v31, %v88
  %vm106 = vcmp.eq.s32.totalorder %v32, %v88
  %vm107 = vcmp.eq.s32.totalorder %v33, %v88
  %vm108 = vcmp.eq.s32.totalorder %v34, %v88
  %vm109 = vcmp.eq.s32.totalorder %v35, %v88
  %vm110 = vcmp.eq.s32.totalorder %v36, %v88
  %vm111 = vcmp.eq.s32.totalorder %v37, %v88
  %vm112 = vcmp.eq.s32.totalorder %v38, %v88
  %vm113 = vcmp.eq.s32.totalorder %v39, %v88
  %vm114 = vcmp.eq.s32.totalorder %v40, %v88
  %vm115 = vcmp.eq.s32.totalorder %v41, %v88
  %vm116 = vcmp.eq.s32.totalorder %v42, %v88
  %vm117 = vcmp.eq.s32.totalorder %v43, %v88
  %vm118 = vcmp.eq.s32.totalorder %v44, %v88
  %vm119 = vcmp.eq.s32.totalorder %v45, %v88
  %vm120 = vcmp.eq.s32.totalorder %v46, %v88
  %vm121 = vcmp.gt.s32.totalorder %v47, 0
  %vm122 = vcmp.gt.s32.totalorder %v48, 0
  %v123 = vsel %vm121, 1, 0
  %v124 = vsel %vm122, 1, 0
  %125 = vset.pattern.permute.xlu0 0
  %126 = vperm.xlu0 %125, %v123
  %v127 = vpop.permute.xlu0 %126
  %128 = vset.pattern.permute.xlu0 0
  %129 = vperm.xlu0 %128, %v124
  %v130 = vpop.permute.xlu0 %129
  %vm131 = vcmp.eq.s32.totalorder %v127, 1
  %vm132 = vcmp.eq.s32.totalorder %v130, 1
  %vm133 = vmand %vm89, %vm131
  %vm134 = vmand %vm90, %vm131
  %vm135 = vmand %vm91, %vm131
  %vm136 = vmand %vm92, %vm131
  %vm137 = vmand %vm93, %vm131
  %vm138 = vmand %vm94, %vm131
  %vm139 = vmand %vm95, %vm131
  %vm140 = vmand %vm96, %vm131
  %vm141 = vmand %vm97, %vm131
  %vm142 = vmand %vm98, %vm131
  %vm143 = vmand %vm99, %vm131
  %vm144 = vmand %vm100, %vm131
  %vm145 = vmand %vm101, %vm131
  %vm146 = vmand %vm102, %vm131
  %vm147 = vmand %vm103, %vm131
  %vm148 = vmand %vm104, %vm131
  %vm149 = vmand %vm105, %vm132
  %vm150 = vmand %vm106, %vm132
  %vm151 = vmand %vm107, %vm132
  %vm152 = vmand %vm108, %vm132
  %vm153 = vmand %vm109, %vm132
  %vm154 = vmand %vm110, %vm132
  %vm155 = vmand %vm111, %vm132
  %vm156 = vmand %vm112, %vm132
  %vm157 = vmand %vm113, %vm132
  %vm158 = vmand %vm114, %vm132
  %vm159 = vmand %vm115, %vm132
  %vm160 = vmand %vm116, %vm132
  %vm161 = vmand %vm117, %vm132
  %vm162 = vmand %vm118, %vm132
  %vm163 = vmand %vm119, %vm132
  %vm164 = vmand %vm120, %vm132
  %v165 = vld [vmem:[#allocation2] sm:$0xff]
  %v166 = vld [vmem:[#allocation2 + $0x8] sm:$0xff]
  %v167 = vld [vmem:[#allocation2 + $0x10] sm:$0xff]
  %v168 = vld [vmem:[#allocation2 + $0x18] sm:$0xff]
  %v169 = vld [vmem:[#allocation2 + $0x20] sm:$0xff]
  %v170 = vld [vmem:[#allocation2 + $0x28] sm:$0xff]
  %v171 = vld [vmem:[#allocation2 + $0x30] sm:$0xff]
  %v172 = vld [vmem:[#allocation2 + $0x38] sm:$0xff]
  %v173 = vld [vmem:[#allocation2 + $0x40] sm:$0xff]
  %v174 = vld [vmem:[#allocation2 + $0x48] sm:$0xff]
  %v175 = vld [vmem:[#allocation2 + $0x50] sm:$0xff]
  %v176 = vld [vmem:[#allocation2 + $0x58] sm:$0xff]
  %v177 = vld [vmem:[#allocation2 + $0x60] sm:$0xff]
  %v178 = vld [vmem:[#allocation2 + $0x68] sm:$0xff]
  %v179 = vld [vmem:[#allocation2 + $0x70] sm:$0xff]
  %v180 = vld [vmem:[#allocation2 + $0x78] sm:$0xff]
  %v181 = vld [vmem:[#allocation2 + $0x80] sm:$0xff]
  %v182 = vld [vmem:[#allocation2 + $0x88] sm:$0xff]
  %v183 = vld [vmem:[#allocation2 + $0x90] sm:$0xff]
  %v184 = vld [vmem:[#allocation2 + $0x98] sm:$0xff]
  %v185 = vld [vmem:[#allocation2 + $0xa0] sm:$0xff]
  %v186 = vld [vmem:[#allocation2 + $0xa8] sm:$0xff]
  %v187 = vld [vmem:[#allocation2 + $0xb0] sm:$0xff]
  %v188 = vld [vmem:[#allocation2 + $0xb8] sm:$0xff]
  %v189 = vld [vmem:[#allocation2 + $0xc0] sm:$0xff]
  %v190 = vld [vmem:[#allocation2 + $0xc8] sm:$0xff]
  %v191 = vld [vmem:[#allocation2 + $0xd0] sm:$0xff]
  %v192 = vld [vmem:[#allocation2 + $0xd8] sm:$0xff]
  %v193 = vld [vmem:[#allocation2 + $0xe0] sm:$0xff]
  %v194 = vld [vmem:[#allocation2 + $0xe8] sm:$0xff]
  %v195 = vld [vmem:[#allocation2 + $0xf0] sm:$0xff]
  %v196 = vld [vmem:[#allocation2 + $0xf8] sm:$0xff]
  %v197 = vsel %vm133, 1, 0
  %v198 = vsel %vm134, 1, 0
  %v199 = vsel %vm135, 1, 0
  %v200 = vsel %vm136, 1, 0
  %v201 = vsel %vm137, 1, 0
  %v202 = vsel %vm138, 1, 0
  %v203 = vsel %vm139, 1, 0
  %v204 = vsel %vm140, 1, 0
  %v205 = vsel %vm141, 1, 0
  %v206 = vsel %vm142, 1, 0
  %v207 = vsel %vm143, 1, 0
  %v208 = vsel %vm144, 1, 0
  %v209 = vsel %vm145, 1, 0
  %v210 = vsel %vm146, 1, 0
  %v211 = vsel %vm147, 1, 0
  %v212 = vsel %vm148, 1, 0
  %v213 = vsel %vm149, 1, 0
  %v214 = vsel %vm150, 1, 0
  %v215 = vsel %vm151, 1, 0
  %v216 = vsel %vm152, 1, 0
  %v217 = vsel %vm153, 1, 0
  %v218 = vsel %vm154, 1, 0
  %v219 = vsel %vm155, 1, 0
  %v220 = vsel %vm156, 1, 0
  %v221 = vsel %vm157, 1, 0
  %v222 = vsel %vm158, 1, 0
  %v223 = vsel %vm159, 1, 0
  %v224 = vsel %vm160, 1, 0
  %v225 = vsel %vm161, 1, 0
  %v226 = vsel %vm162, 1, 0
  %v227 = vsel %vm163, 1, 0
  %v228 = vsel %vm164, 1, 0
  %v229 = vcvt.s32.f32 %v197
  %v230 = vcvt.s32.f32 %v198
  %v231 = vcvt.s32.f32 %v199
  %v232 = vcvt.s32.f32 %v200
  %v233 = vcvt.s32.f32 %v201
  %v234 = vcvt.s32.f32 %v202
  %v235 = vcvt.s32.f32 %v203
  %v236 = vcvt.s32.f32 %v204
  %v237 = vcvt.s32.f32 %v205
  %v238 = vcvt.s32.f32 %v206
  %v239 = vcvt.s32.f32 %v207
  %v240 = vcvt.s32.f32 %v208
  %v241 = vcvt.s32.f32 %v209
  %v242 = vcvt.s32.f32 %v210
  %v243 = vcvt.s32.f32 %v211
  %v244 = vcvt.s32.f32 %v212
  %v245 = vcvt.s32.f32 %v213
  %v246 = vcvt.s32.f32 %v214
  %v247 = vcvt.s32.f32 %v215
  %v248 = vcvt.s32.f32 %v216
  %v249 = vcvt.s32.f32 %v217
  %v250 = vcvt.s32.f32 %v218
  %v251 = vcvt.s32.f32 %v219
  %v252 = vcvt.s32.f32 %v220
  %v253 = vcvt.s32.f32 %v221
  %v254 = vcvt.s32.f32 %v222
  %v255 = vcvt.s32.f32 %v223
  %v256 = vcvt.s32.f32 %v224
  %v257 = vcvt.s32.f32 %v225
  %v258 = vcvt.s32.f32 %v226
  %v259 = vcvt.s32.f32 %v227
  %v260 = vcvt.s32.f32 %v228
  %v261 = vadd.f32 %v165, %v229
  %v262 = vadd.f32 %v166, %v230
  %v263 = vadd.f32 %v167, %v231
  %v264 = vadd.f32 %v168, %v232
  %v265 = vadd.f32 %v169, %v233
  %v266 = vadd.f32 %v170, %v234
  %v267 = vadd.f32 %v171, %v235
  %v268 = vadd.f32 %v172, %v236
  %v269 = vadd.f32 %v173, %v237
  %v270 = vadd.f32 %v174, %v238
  %v271 = vadd.f32 %v175, %v239
  %v272 = vadd.f32 %v176, %v240
  %v273 = vadd.f32 %v177, %v241
  %v274 = vadd.f32 %v178, %v242
  %v275 = vadd.f32 %v179, %v243
  %v276 = vadd.f32 %v180, %v244
  %v277 = vadd.f32 %v181, %v245
  %v278 = vadd.f32 %v182, %v246
  %v279 = vadd.f32 %v183, %v247
  %v280 = vadd.f32 %v184, %v248
  %v281 = vadd.f32 %v185, %v249
  %v282 = vadd.f32 %v186, %v250
  %v283 = vadd.f32 %v187, %v251
  %v284 = vadd.f32 %v188, %v252
  %v285 = vadd.f32 %v189, %v253
  %v286 = vadd.f32 %v190, %v254
  %v287 = vadd.f32 %v191, %v255
  %v288 = vadd.f32 %v192, %v256
  %v289 = vadd.f32 %v193, %v257
  %v290 = vadd.f32 %v194, %v258
  %v291 = vadd.f32 %v195, %v259
  %v292 = vadd.f32 %v196, %v260
  %293 = vst [vmem:[#allocation2] sm:$0xff] %v261
  %294 = vst [vmem:[#allocation2 + $0x8] sm:$0xff] %v262
  %295 = vst [vmem:[#allocation2 + $0x10] sm:$0xff] %v263
  %296 = vst [vmem:[#allocation2 + $0x18] sm:$0xff] %v264
  %297 = vst [vmem:[#allocation2 + $0x20] sm:$0xff] %v265
  %298 = vst [vmem:[#allocation2 + $0x28] sm:$0xff] %v266
  %299 = vst [vmem:[#allocation2 + $0x30] sm:$0xff] %v267
  %300 = vst [vmem:[#allocation2 + $0x38] sm:$0xff] %v268
  %301 = vst [vmem:[#allocation2 + $0x40] sm:$0xff] %v269
  %302 = vst [vmem:[#allocation2 + $0x48] sm:$0xff] %v270
  %303 = vst [vmem:[#allocation2 + $0x50] sm:$0xff] %v271
  %304 = vst [vmem:[#allocation2 + $0x58] sm:$0xff] %v272
  %305 = vst [vmem:[#allocation2 + $0x60] sm:$0xff] %v273
  %306 = vst [vmem:[#allocation2 + $0x68] sm:$0xff] %v274
  %307 = vst [vmem:[#allocation2 + $0x70] sm:$0xff] %v275
  %308 = vst [vmem:[#allocation2 + $0x78] sm:$0xff] %v276
  %309 = vst [vmem:[#allocation2 + $0x80] sm:$0xff] %v277
  %310 = vst [vmem:[#allocation2 + $0x88] sm:$0xff] %v278
  %311 = vst [vmem:[#allocation2 + $0x90] sm:$0xff] %v279
  %312 = vst [vmem:[#allocation2 + $0x98] sm:$0xff] %v280
  %313 = vst [vmem:[#allocation2 + $0xa0] sm:$0xff] %v281
  %314 = vst [vmem:[#allocation2 + $0xa8] sm:$0xff] %v282
  %315 = vst [vmem:[#allocation2 + $0xb0] sm:$0xff] %v283
  %316 = vst [vmem:[#allocation2 + $0xb8] sm:$0xff] %v284
  %317 = vst [vmem:[#allocation2 + $0xc0] sm:$0xff] %v285
  %318 = vst [vmem:[#allocation2 + $0xc8] sm:$0xff] %v286
  %319 = vst [vmem:[#allocation2 + $0xd0] sm:$0xff] %v287
  %320 = vst [vmem:[#allocation2 + $0xd8] sm:$0xff] %v288
  %321 = vst [vmem:[#allocation2 + $0xe0] sm:$0xff] %v289
  %322 = vst [vmem:[#allocation2 + $0xe8] sm:$0xff] %v290
  %323 = vst [vmem:[#allocation2 + $0xf0] sm:$0xff] %v291
  %324 = vst [vmem:[#allocation2 + $0xf8] sm:$0xff] %v292
  %v325 = vld [vmem:[%s0] sm:$0xff]
  %v326 = vld [vmem:[%s0 + $0x8] sm:$0xff]
  %327 = vset.pattern.permute.xlu0 1
  %328 = vperm.xlu0 %327, %v325
  %v329 = vpop.permute.xlu0 %328
  %330 = vset.pattern.permute.xlu0 1
  %331 = vperm.xlu0 %330, %v326
  %v332 = vpop.permute.xlu0 %331
  %vm333 = vcmp.eq.s32.totalorder %v31, %v329
  %vm334 = vcmp.eq.s32.totalorder %v32, %v329
  %vm335 = vcmp.eq.s32.totalorder %v33, %v329
  %vm336 = vcmp.eq.s32.totalorder %v34, %v329
  %vm337 = vcmp.eq.s32.totalorder %v35, %v329
  %vm338 = vcmp.eq.s32.totalorder %v36, %v329
  %vm339 = vcmp.eq.s32.totalorder %v37, %v329
  %vm340 = vcmp.eq.s32.totalorder %v38, %v329
  %vm341 = vcmp.eq.s32.totalorder %v39, %v329
  %vm342 = vcmp.eq.s32.totalorder %v40, %v329
  %vm343 = vcmp.eq.s32.totalorder %v41, %v329
  %vm344 = vcmp.eq.s32.totalorder %v42, %v329
  %vm345 = vcmp.eq.s32.totalorder %v43, %v329
  %vm346 = vcmp.eq.s32.totalorder %v44, %v329
  %vm347 = vcmp.eq.s32.totalorder %v45, %v329
  %vm348 = vcmp.eq.s32.totalorder %v46, %v329
  %vm349 = vcmp.eq.s32.totalorder %v31, %v332
  %vm350 = vcmp.eq.s32.totalorder %v32, %v332
  %vm351 = vcmp.eq.s32.totalorder %v33, %v332
  %vm352 = vcmp.eq.s32.totalorder %v34, %v332
  %vm353 = vcmp.eq.s32.totalorder %v35, %v332
  %vm354 = vcmp.eq.s32.totalorder %v36, %v332
  %vm355 = vcmp.eq.s32.totalorder %v37, %v332
  %vm356 = vcmp.eq.s32.totalorder %v38, %v332
  %vm357 = vcmp.eq.s32.totalorder %v39, %v332
  %vm358 = vcmp.eq.s32.totalorder %v40, %v332
  %vm359 = vcmp.eq.s32.totalorder %v41, %v332
  %vm360 = vcmp.eq.s32.totalorder %v42, %v332
  %vm361 = vcmp.eq.s32.totalorder %v43, %v332
  %vm362 = vcmp.eq.s32.totalorder %v44, %v332
  %vm363 = vcmp.eq.s32.totalorder %v45, %v332
  %vm364 = vcmp.eq.s32.totalorder %v46, %v332
  %vm365 = vcmp.gt.s32.totalorder %v47, 1
  %vm366 = vcmp.gt.s32.totalorder %v48, 1
  %v367 = vsel %vm365, 1, 0
  %v368 = vsel %vm366, 1, 0
  %369 = vset.pattern.permute.xlu0 0
  %370 = vperm.xlu0 %369, %v367
  %v371 = vpop.permute.xlu0 %370
  %372 = vset.pattern.permute.xlu0 0
  %373 = vperm.xlu0 %372, %v368
  %v374 = vpop.permute.xlu0 %373
  %vm375 = vcmp.eq.s32.totalorder %v371, 1
  %vm376 = vcmp.eq.s32.totalorder %v374, 1
  %vm377 = vmand %vm333, %vm375
  %vm378 = vmand %vm334, %vm375
  %vm379 = vmand %vm335, %vm375
  %vm380 = vmand %vm336, %vm375
  %vm381 = vmand %vm337, %vm375
  %vm382 = vmand %vm338, %vm375
  %vm383 = vmand %vm339, %vm375
  %vm384 = vmand %vm340, %vm375
  %vm385 = vmand %vm341, %vm375
  %vm386 = vmand %vm342, %vm375
  %vm387 = vmand %vm343, %vm375
  %vm388 = vmand %vm344, %vm375
  %vm389 = vmand %vm345, %vm375
  %vm390 = vmand %vm346, %vm375
  %vm391 = vmand %vm347, %vm375
  %vm392 = vmand %vm348, %vm375
  %vm393 = vmand %vm349, %vm376
  %vm394 = vmand %vm350, %vm376
  %vm395 = vmand %vm351, %vm376
  %vm396 = vmand %vm352, %vm376
  %vm397 = vmand %vm353, %vm376
  %vm398 = vmand %vm354, %vm376
  %vm399 = vmand %vm355, %vm376
  %vm400 = vmand %vm356, %vm376
  %vm401 = vmand %vm357, %vm376
  %vm402 = vmand %vm358, %vm376
  %vm403 = vmand %vm359, %vm376
  %vm404 = vmand %vm360, %vm376
  %vm405 = vmand %vm361, %vm376
  %vm406 = vmand %vm362, %vm376
  %vm407 = vmand %vm363, %vm376
  %vm408 = vmand %vm364, %vm376
  %v409 = vld [vmem:[#allocation2] sm:$0xff]
  %v410 = vld [vmem:[#allocation2 + $0x8] sm:$0xff]
  %v411 = vld [vmem:[#allocation2 + $0x10] sm:$0xff]
  %v412 = vld [vmem:[#allocation2 + $0x18] sm:$0xff]
  %v413 = vld [vmem:[#allocation2 + $0x20] sm:$0xff]
  %v414 = vld [vmem:[#allocation2 + $0x28] sm:$0xff]
  %v415 = vld [vmem:[#allocation2 + $0x30] sm:$0xff]
  %v416 = vld [vmem:[#allocation2 + $0x38] sm:$0xff]
  %v417 = vld [vmem:[#allocation2 + $0x40] sm:$0xff]
  %v418 = vld [vmem:[#allocation2 + $0x48] sm:$0xff]
  %v419 = vld [vmem:[#allocation2 + $0x50] sm:$0xff]
  %v420 = vld [vmem:[#allocation2 + $0x58] sm:$0xff]
  %v421 = vld [vmem:[#allocation2 + $0x60] sm:$0xff]
  %v422 = vld [vmem:[#allocation2 + $0x68] sm:$0xff]
  %v423 = vld [vmem:[#allocation2 + $0x70] sm:$0xff]
  %v424 = vld [vmem:[#allocation2 + $0x78] sm:$0xff]
  %v425 = vld [vmem:[#allocation2 + $0x80] sm:$0xff]
  %v426 = vld [vmem:[#allocation2 + $0x88] sm:$0xff]
  %v427 = vld [vmem:[#allocation2 + $0x90] sm:$0xff]
  %v428 = vld [vmem:[#allocation2 + $0x98] sm:$0xff]
  %v429 = vld [vmem:[#allocation2 + $0xa0] sm:$0xff]
  %v430 = vld [vmem:[#allocation2 + $0xa8] sm:$0xff]
  %v431 = vld [vmem:[#allocation2 + $0xb0] sm:$0xff]
  %v432 = vld [vmem:[#allocation2 + $0xb8] sm:$0xff]
  %v433 = vld [vmem:[#allocation2 + $0xc0] sm:$0xff]
  %v434 = vld [vmem:[#allocation2 + $0xc8] sm:$0xff]
  %v435 = vld [vmem:[#allocation2 + $0xd0] sm:$0xff]
  %v436 = vld [vmem:[#allocation2 + $0xd8] sm:$0xff]
  %v437 = vld [vmem:[#allocation2 + $0xe0] sm:$0xff]
  %v438 = vld [vmem:[#allocation2 + $0xe8] sm:$0xff]
  %v439 = vld [vmem:[#allocation2 + $0xf0] sm:$0xff]
  %v440 = vld [vmem:[#allocation2 + $0xf8] sm:$0xff]
  %v441 = vsel %vm377, 1, 0
  %v442 = vsel %vm378, 1, 0
  %v443 = vsel %vm379, 1, 0
  %v444 = vsel %vm380, 1, 0
  %v445 = vsel %vm381, 1, 0
  %v446 = vsel %vm382, 1, 0
  %v447 = vsel %vm383, 1, 0
  %v448 = vsel %vm384, 1, 0
  %v449 = vsel %vm385, 1, 0
  %v450 = vsel %vm386, 1, 0
  %v451 = vsel %vm387, 1, 0
  %v452 = vsel %vm388, 1, 0
  %v453 = vsel %vm389, 1, 0
  %v454 = vsel %vm390, 1, 0
  %v455 = vsel %vm391, 1, 0
  %v456 = vsel %vm392, 1, 0
  %v457 = vsel %vm393, 1, 0
  %v458 = vsel %vm394, 1, 0
  %v459 = vsel %vm395, 1, 0
  %v460 = vsel %vm396, 1, 0
  %v461 = vsel %vm397, 1, 0
  %v462 = vsel %vm398, 1, 0
  %v463 = vsel %vm399, 1, 0
  %v464 = vsel %vm400, 1, 0
  %v465 = vsel %vm401, 1, 0
  %v466 = vsel %vm402, 1, 0
  %v467 = vsel %vm403, 1, 0
  %v468 = vsel %vm404, 1, 0
  %v469 = vsel %vm405, 1, 0
  %v470 = vsel %vm406, 1, 0
  %v471 = vsel %vm407, 1, 0
  %v472 = vsel %vm408, 1, 0
  %v473 = vcvt.s32.f32 %v441
  %v474 = vcvt.s32.f32 %v442
  %v475 = vcvt.s32.f32 %v443
  %v476 = vcvt.s32.f32 %v444
  %v477 = vcvt.s32.f32 %v445
  %v478 = vcvt.s32.f32 %v446
  %v479 = vcvt.s32.f32 %v447
  %v480 = vcvt.s32.f32 %v448
  %v481 = vcvt.s32.f32 %v449
  %v482 = vcvt.s32.f32 %v450
  %v483 = vcvt.s32.f32 %v451
  %v484 = vcvt.s32.f32 %v452
  %v485 = vcvt.s32.f32 %v453
  %v486 = vcvt.s32.f32 %v454
  %v487 = vcvt.s32.f32 %v455
  %v488 = vcvt.s32.f32 %v456
  %v489 = vcvt.s32.f32 %v457
  %v490 = vcvt.s32.f32 %v458
  %v491 = vcvt.s32.f32 %v459
  %v492 = vcvt.s32.f32 %v460
  %v493 = vcvt.s32.f32 %v461
  %v494 = vcvt.s32.f32 %v462
  %v495 = vcvt.s32.f32 %v463
  %v496 = vcvt.s32.f32 %v464
  %v497 = vcvt.s32.f32 %v465
  %v498 = vcvt.s32.f32 %v466
  %v499 = vcvt.s32.f32 %v467
  %v500 = vcvt.s32.f32 %v468
  %v501 = vcvt.s32.f32 %v469
  %v502 = vcvt.s32.f32 %v470
  %v503 = vcvt.s32.f32 %v471
  %v504 = vcvt.s32.f32 %v472
  %v505 = vadd.f32 %v409, %v473
  %v506 = vadd.f32 %v410, %v474
  %v507 = vadd.f32 %v411, %v475
  %v508 = vadd.f32 %v412, %v476
  %v509 = vadd.f32 %v413, %v477
  %v510 = vadd.f32 %v414, %v478
  %v511 = vadd.f32 %v415, %v479
  %v512 = vadd.f32 %v416, %v480
  %v513 = vadd.f32 %v417, %v481
  %v514 = vadd.f32 %v418, %v482
  %v515 = vadd.f32 %v419, %v483
  %v516 = vadd.f32 %v420, %v484
  %v517 = vadd.f32 %v421, %v485
  %v518 = vadd.f32 %v422, %v486
  %v519 = vadd.f32 %v423, %v487
  %v520 = vadd.f32 %v424, %v488
  %v521 = vadd.f32 %v425, %v489
  %v522 = vadd.f32 %v426, %v490
  %v523 = vadd.f32 %v427, %v491
  %v524 = vadd.f32 %v428, %v492
  %v525 = vadd.f32 %v429, %v493
  %v526 = vadd.f32 %v430, %v494
  %v527 = vadd.f32 %v431, %v495
  %v528 = vadd.f32 %v432, %v496
  %v529 = vadd.f32 %v433, %v497
  %v530 = vadd.f32 %v434, %v498
  %v531 = vadd.f32 %v435, %v499
  %v532 = vadd.f32 %v436, %v500
  %v533 = vadd.f32 %v437, %v501
  %v534 = vadd.f32 %v438, %v502
  %v535 = vadd.f32 %v439, %v503
  %v536 = vadd.f32 %v440, %v504
  %537 = vst [vmem:[#allocation2] sm:$0xff] %v505
  %538 = vst [vmem:[#allocation2 + $0x8] sm:$0xff] %v506
  %539 = vst [vmem:[#allocation2 + $0x10] sm:$0xff] %v507
  %540 = vst [vmem:[#allocation2 + $0x18] sm:$0xff] %v508
  %541 = vst [vmem:[#allocation2 + $0x20] sm:$0xff] %v509
  %542 = vst [vmem:[#allocation2 + $0x28] sm:$0xff] %v510
  %543 = vst [vmem:[#allocation2 + $0x30] sm:$0xff] %v511
  %544 = vst [vmem:[#allocation2 + $0x38] sm:$0xff] %v512
  %545 = vst [vmem:[#allocation2 + $0x40] sm:$0xff] %v513
  %546 = vst [vmem:[#allocation2 + $0x48] sm:$0xff] %v514
  %547 = vst [vmem:[#allocation2 + $0x50] sm:$0xff] %v515
  %548 = vst [vmem:[#allocation2 + $0x58] sm:$0xff] %v516
  %549 = vst [vmem:[#allocation2 + $0x60] sm:$0xff] %v517
  %550 = vst [vmem:[#allocation2 + $0x68] sm:$0xff] %v518
  %551 = vst [vmem:[#allocation2 + $0x70] sm:$0xff] %v519
  %552 = vst [vmem:[#allocation2 + $0x78] sm:$0xff] %v520
  %553 = vst [vmem:[#allocation2 + $0x80] sm:$0xff] %v521
  %554 = vst [vmem:[#allocation2 + $0x88] sm:$0xff] %v522
  %555 = vst [vmem:[#allocation2 + $0x90] sm:$0xff] %v523
  %556 = vst [vmem:[#allocation2 + $0x98] sm:$0xff] %v524
  %557 = vst [vmem:[#allocation2 + $0xa0] sm:$0xff] %v525
  %558 = vst [vmem:[#allocation2 + $0xa8] sm:$0xff] %v526
  %559 = vst [vmem:[#allocation2 + $0xb0] sm:$0xff] %v527
  %560 = vst [vmem:[#allocation2 + $0xb8] sm:$0xff] %v528
  %561 = vst [vmem:[#allocation2 + $0xc0] sm:$0xff] %v529
  %562 = vst [vmem:[#allocation2 + $0xc8] sm:$0xff] %v530
  %563 = vst [vmem:[#allocation2 + $0xd0] sm:$0xff] %v531
  %564 = vst [vmem:[#allocation2 + $0xd8] sm:$0xff] %v532
  %565 = vst [vmem:[#allocation2 + $0xe0] sm:$0xff] %v533
  %566 = vst [vmem:[#allocation2 + $0xe8] sm:$0xff] %v534
  %567 = vst [vmem:[#allocation2 + $0xf0] sm:$0xff] %v535
  %568 = vst [vmem:[#allocation2 + $0xf8] sm:$0xff] %v536
  %v569 = vld [vmem:[%s0] sm:$0xff]
  %v570 = vld [vmem:[%s0 + $0x8] sm:$0xff]
  %571 = vset.pattern.permute.xlu0 2
  %572 = vperm.xlu0 %571, %v569
  %v573 = vpop.permute.xlu0 %572
  %574 = vset.pattern.permute.xlu0 2
  %575 = vperm.xlu0 %574, %v570
  %v576 = vpop.permute.xlu0 %575
  %vm577 = vcmp.eq.s32.totalorder %v31, %v573
  %vm578 = vcmp.eq.s32.totalorder %v32, %v573
  %vm579 = vcmp.eq.s32.totalorder %v33, %v573
  %vm580 = vcmp.eq.s32.totalorder %v34, %v573
  %vm581 = vcmp.eq.s32.totalorder %v35, %v573
  %vm582 = vcmp.eq.s32.totalorder %v36, %v573
  %vm583 = vcmp.eq.s32.totalorder %v37, %v573
  %vm584 = vcmp.eq.s32.totalorder %v38, %v573
  %vm585 = vcmp.eq.s32.totalorder %v39, %v573
  %vm586 = vcmp.eq.s32.totalorder %v40, %v573
  %vm587 = vcmp.eq.s32.totalorder %v41, %v573
  %vm588 = vcmp.eq.s32.totalorder %v42, %v573
  %vm589 = vcmp.eq.s32.totalorder %v43, %v573
  %vm590 = vcmp.eq.s32.totalorder %v44, %v573
  %vm591 = vcmp.eq.s32.totalorder %v45, %v573
  %vm592 = vcmp.eq.s32.totalorder %v46, %v573
  %vm593 = vcmp.eq.s32.totalorder %v31, %v576
  %vm594 = vcmp.eq.s32.totalorder %v32, %v576
  %vm595 = vcmp.eq.s32.totalorder %v33, %v576
  %vm596 = vcmp.eq.s32.totalorder %v34, %v576
  %vm597 = vcmp.eq.s32.totalorder %v35, %v576
  %vm598 = vcmp.eq.s32.totalorder %v36, %v576
  %vm599 = vcmp.eq.s32.totalorder %v37, %v576
  %vm600 = vcmp.eq.s32.totalorder %v38, %v576
  %vm601 = vcmp.eq.s32.totalorder %v39, %v576
  %vm602 = vcmp.eq.s32.totalorder %v40, %v576
  %vm603 = vcmp.eq.s32.totalorder %v41, %v576
  %vm604 = vcmp.eq.s32.totalorder %v42, %v576
  %vm605 = vcmp.eq.s32.totalorder %v43, %v576
  %vm606 = vcmp.eq.s32.totalorder %v44, %v576
  %vm607 = vcmp.eq.s32.totalorder %v45, %v576
  %vm608 = vcmp.eq.s32.totalorder %v46, %v576
  %vm609 = vcmp.gt.s32.totalorder %v47, 2
  %vm610 = vcmp.gt.s32.totalorder %v48, 2
  %v611 = vsel %vm609, 1, 0
  %v612 = vsel %vm610, 1, 0
  %613 = vset.pattern.permute.xlu0 0
  %614 = vperm.xlu0 %613, %v611
  %v615 = vpop.permute.xlu0 %614
  %616 = vset.pattern.permute.xlu0 0
  %617 = vperm.xlu0 %616, %v612
  %v618 = vpop.permute.xlu0 %617
  %vm619 = vcmp.eq.s32.totalorder %v615, 1
  %vm620 = vcmp.eq.s32.totalorder %v618, 1
  %vm621 = vmand %vm577, %vm619
  %vm622 = vmand %vm578, %vm619
  %vm623 = vmand %vm579, %vm619
  %vm624 = vmand %vm580, %vm619
  %vm625 = vmand %vm581, %vm619
  %vm626 = vmand %vm582, %vm619
  %vm627 = vmand %vm583, %vm619
  %vm628 = vmand %vm584, %vm619
  %vm629 = vmand %vm585, %vm619
  %vm630 = vmand %vm586, %vm619
  %vm631 = vmand %vm587, %vm619
  %vm632 = vmand %vm588, %vm619
  %vm633 = vmand %vm589, %vm619
  %vm634 = vmand %vm590, %vm619
  %vm635 = vmand %vm591, %vm619
  %vm636 = vmand %vm592, %vm619
  %vm637 = vmand %vm593, %vm620
  %vm638 = vmand %vm594, %vm620
  %vm639 = vmand %vm595, %vm620
  %vm640 = vmand %vm596, %vm620
  %vm641 = vmand %vm597, %vm620
  %vm642 = vmand %vm598, %vm620
  %vm643 = vmand %vm599, %vm620
  %vm644 = vmand %vm600, %vm620
  %vm645 = vmand %vm601, %vm620
  %vm646 = vmand %vm602, %vm620
  %vm647 = vmand %vm603, %vm620
  %vm648 = vmand %vm604, %vm620
  %vm649 = vmand %vm605, %vm620
  %vm650 = vmand %vm606, %vm620
  %vm651 = vmand %vm607, %vm620
  %vm652 = vmand %vm608, %vm620
  %v653 = vld [vmem:[#allocation2] sm:$0xff]
  %v654 = vld [vmem:[#allocation2 + $0x8] sm:$0xff]
  %v655 = vld [vmem:[#allocation2 + $0x10] sm:$0xff]
  %v656 = vld [vmem:[#allocation2 + $0x18] sm:$0xff]
  %v657 = vld [vmem:[#allocation2 + $0x20] sm:$0xff]
  %v658 = vld [vmem:[#allocation2 + $0x28] sm:$0xff]
  %v659 = vld [vmem:[#allocation2 + $0x30] sm:$0xff]
  %v660 = vld [vmem:[#allocation2 + $0x38] sm:$0xff]
  %v661 = vld [vmem:[#allocation2 + $0x40] sm:$0xff]
  %v662 = vld [vmem:[#allocation2 + $0x48] sm:$0xff]
  %v663 = vld [vmem:[#allocation2 + $0x50] sm:$0xff]
  %v664 = vld [vmem:[#allocation2 + $0x58] sm:$0xff]
  %v665 = vld [vmem:[#allocation2 + $0x60] sm:$0xff]
  %v666 = vld [vmem:[#allocation2 + $0x68] sm:$0xff]
  %v667 = vld [vmem:[#allocation2 + $0x70] sm:$0xff]
  %v668 = vld [vmem:[#allocation2 + $0x78] sm:$0xff]
  %v669 = vld [vmem:[#allocation2 + $0x80] sm:$0xff]
  %v670 = vld [vmem:[#allocation2 + $0x88] sm:$0xff]
  %v671 = vld [vmem:[#allocation2 + $0x90] sm:$0xff]
  %v672 = vld [vmem:[#allocation2 + $0x98] sm:$0xff]
  %v673 = vld [vmem:[#allocation2 + $0xa0] sm:$0xff]
  %v674 = vld [vmem:[#allocation2 + $0xa8] sm:$0xff]
  %v675 = vld [vmem:[#allocation2 + $0xb0] sm:$0xff]
  %v676 = vld [vmem:[#allocation2 + $0xb8] sm:$0xff]
  %v677 = vld [vmem:[#allocation2 + $0xc0] sm:$0xff]
  %v678 = vld [vmem:[#allocation2 + $0xc8] sm:$0xff]
  %v679 = vld [vmem:[#allocation2 + $0xd0] sm:$0xff]
  %v680 = vld [vmem:[#allocation2 + $0xd8] sm:$0xff]
  %v681 = vld [vmem:[#allocation2 + $0xe0] sm:$0xff]
  %v682 = vld [vmem:[#allocation2 + $0xe8] sm:$0xff]
  %v683 = vld [vmem:[#allocation2 + $0xf0] sm:$0xff]
  %v684 = vld [vmem:[#allocation2 + $0xf8] sm:$0xff]
  %v685 = vsel %vm621, 1, 0
  %v686 = vsel %vm622, 1, 0
  %v687 = vsel %vm623, 1, 0
  %v688 = vsel %vm624, 1, 0
  %v689 = vsel %vm625, 1, 0
  %v690 = vsel %vm626, 1, 0
  %v691 = vsel %vm627, 1, 0
  %v692 = vsel %vm628, 1, 0
  %v693 = vsel %vm629, 1, 0
  %v694 = vsel %vm630, 1, 0
  %v695 = vsel %vm631, 1, 0
  %v696 = vsel %vm632, 1, 0
  %v697 = vsel %vm633, 1, 0
  %v698 = vsel %vm634, 1, 0
  %v699 = vsel %vm635, 1, 0
  %v700 = vsel %vm636, 1, 0
  %v701 = vsel %vm637, 1, 0
  %v702 = vsel %vm638, 1, 0
  %v703 = vsel %vm639, 1, 0
  %v704 = vsel %vm640, 1, 0
  %v705 = vsel %vm641, 1, 0
  %v706 = vsel %vm642, 1, 0
  %v707 = vsel %vm643, 1, 0
  %v708 = vsel %vm644, 1, 0
  %v709 = vsel %vm645, 1, 0
  %v710 = vsel %vm646, 1, 0
  %v711 = vsel %vm647, 1, 0
  %v712 = vsel %vm648, 1, 0
  %v713 = vsel %vm649, 1, 0
  %v714 = vsel %vm650, 1, 0
  %v715 = vsel %vm651, 1, 0
  %v716 = vsel %vm652, 1, 0
  %v717 = vcvt.s32.f32 %v685
  %v718 = vcvt.s32.f32 %v686
  %v719 = vcvt.s32.f32 %v687
  %v720 = vcvt.s32.f32 %v688
  %v721 = vcvt.s32.f32 %v689
  %v722 = vcvt.s32.f32 %v690
  %v723 = vcvt.s32.f32 %v691
  %v724 = vcvt.s32.f32 %v692
  %v725 = vcvt.s32.f32 %v693
  %v726 = vcvt.s32.f32 %v694
  %v727 = vcvt.s32.f32 %v695
  %v728 = vcvt.s32.f32 %v696
  %v729 = vcvt.s32.f32 %v697
  %v730 = vcvt.s32.f32 %v698
  %v731 = vcvt.s32.f32 %v699
  %v732 = vcvt.s32.f32 %v700
  %v733 = vcvt.s32.f32 %v701
  %v734 = vcvt.s32.f32 %v702
  %v735 = vcvt.s32.f32 %v703
  %v736 = vcvt.s32.f32 %v704
  %v737 = vcvt.s32.f32 %v705
  %v738 = vcvt.s32.f32 %v706
  %v739 = vcvt.s32.f32 %v707
  %v740 = vcvt.s32.f32 %v708
  %v741 = vcvt.s32.f32 %v709
  %v742 = vcvt.s32.f32 %v710
  %v743 = vcvt.s32.f32 %v711
  %v744 = vcvt.s32.f32 %v712
  %v745 = vcvt.s32.f32 %v713
  %v746 = vcvt.s32.f32 %v714
  %v747 = vcvt.s32.f32 %v715
  %v748 = vcvt.s32.f32 %v716
  %v749 = vadd.f32 %v653, %v717
  %v750 = vadd.f32 %v654, %v718
  %v751 = vadd.f32 %v655, %v719
  %v752 = vadd.f32 %v656, %v720
  %v753 = vadd.f32 %v657, %v721
  %v754 = vadd.f32 %v658, %v722
  %v755 = vadd.f32 %v659, %v723
  %v756 = vadd.f32 %v660, %v724
  %v757 = vadd.f32 %v661, %v725
  %v758 = vadd.f32 %v662, %v726
  %v759 = vadd.f32 %v663, %v727
  %v760 = vadd.f32 %v664, %v728
  %v761 = vadd.f32 %v665, %v729
  %v762 = vadd.f32 %v666, %v730
  %v763 = vadd.f32 %v667, %v731
  %v764 = vadd.f32 %v668, %v732
  %v765 = vadd.f32 %v669, %v733
  %v766 = vadd.f32 %v670, %v734
  %v767 = vadd.f32 %v671, %v735
  %v768 = vadd.f32 %v672, %v736
  %v769 = vadd.f32 %v673, %v737
  %v770 = vadd.f32 %v674, %v738
  %v771 = vadd.f32 %v675, %v739
  %v772 = vadd.f32 %v676, %v740
  %v773 = vadd.f32 %v677, %v741
  %v774 = vadd.f32 %v678, %v742
  %v775 = vadd.f32 %v679, %v743
  %v776 = vadd.f32 %v680, %v744
  %v777 = vadd.f32 %v681, %v745
  %v778 = vadd.f32 %v682, %v746
  %v779 = vadd.f32 %v683, %v747
  %v780 = vadd.f32 %v684, %v748
  %781 = vst [vmem:[#allocation2] sm:$0xff] %v749
  %782 = vst [vmem:[#allocation2 + $0x8] sm:$0xff] %v750
  %783 = vst [vmem:[#allocation2 + $0x10] sm:$0xff] %v751
  %784 = vst [vmem:[#allocation2 + $0x18] sm:$0xff] %v752
  %785 = vst [vmem:[#allocation2 + $0x20] sm:$0xff] %v753
  %786 = vst [vmem:[#allocation2 + $0x28] sm:$0xff] %v754
  %787 = vst [vmem:[#allocation2 + $0x30] sm:$0xff] %v755
  %788 = vst [vmem:[#allocation2 + $0x38] sm:$0xff] %v756
  %789 = vst [vmem:[#allocation2 + $0x40] sm:$0xff] %v757
  %790 = vst [vmem:[#allocation2 + $0x48] sm:$0xff] %v758
  %791 = vst [vmem:[#allocation2 + $0x50] sm:$0xff] %v759
  %792 = vst [vmem:[#allocation2 + $0x58] sm:$0xff] %v760
  %793 = vst [vmem:[#allocation2 + $0x60] sm:$0xff] %v761
  %794 = vst [vmem:[#allocation2 + $0x68] sm:$0xff] %v762
  %795 = vst [vmem:[#allocation2 + $0x70] sm:$0xff] %v763
  %796 = vst [vmem:[#allocation2 + $0x78] sm:$0xff] %v764
  %797 = vst [vmem:[#allocation2 + $0x80] sm:$0xff] %v765
  %798 = vst [vmem:[#allocation2 + $0x88] sm:$0xff] %v766
  %799 = vst [vmem:[#allocation2 + $0x90] sm:$0xff] %v767
  %800 = vst [vmem:[#allocation2 + $0x98] sm:$0xff] %v768
  %801 = vst [vmem:[#allocation2 + $0xa0] sm:$0xff] %v769
  %802 = vst [vmem:[#allocation2 + $0xa8] sm:$0xff] %v770
  %803 = vst [vmem:[#allocation2 + $0xb0] sm:$0xff] %v771
  %804 = vst [vmem:[#allocation2 + $0xb8] sm:$0xff] %v772
  %805 = vst [vmem:[#allocation2 + $0xc0] sm:$0xff] %v773
  %806 = vst [vmem:[#allocation2 + $0xc8] sm:$0xff] %v774
  %807 = vst [vmem:[#allocation2 + $0xd0] sm:$0xff] %v775
  %808 = vst [vmem:[#allocation2 + $0xd8] sm:$0xff] %v776
  %809 = vst [vmem:[#allocation2 + $0xe0] sm:$0xff] %v777
  %810 = vst [vmem:[#allocation2 + $0xe8] sm:$0xff] %v778
  %811 = vst [vmem:[#allocation2 + $0xf0] sm:$0xff] %v779
  %812 = vst [vmem:[#allocation2 + $0xf8] sm:$0xff] %v780
  %v813 = vld [vmem:[%s0] sm:$0xff]
  %v814 = vld [vmem:[%s0 + $0x8] sm:$0xff]
  %815 = vset.pattern.permute.xlu0 3
  %816 = vperm.xlu0 %815, %v813
  %v817 = vpop.permute.xlu0 %816
  %818 = vset.pattern.permute.xlu0 3
  %819 = vperm.xlu0 %818, %v814
  %v820 = vpop.permute.xlu0 %819
  %vm821 = vcmp.eq.s32.totalorder %v31, %v817
  %vm822 = vcmp.eq.s32.totalorder %v32, %v817
  %vm823 = vcmp.eq.s32.totalorder %v33, %v817
  %vm824 = vcmp.eq.s32.totalorder %v34, %v817
  %vm825 = vcmp.eq.s32.totalorder %v35, %v817
  %vm826 = vcmp.eq.s32.totalorder %v36, %v817
  %vm827 = vcmp.eq.s32.totalorder %v37, %v817
  %vm828 = vcmp.eq.s32.totalorder %v38, %v817
  %vm829 = vcmp.eq.s32.totalorder %v39, %v817
  %vm830 = vcmp.eq.s32.totalorder %v40, %v817
  %vm831 = vcmp.eq.s32.totalorder %v41, %v817
  %vm832 = vcmp.eq.s32.totalorder %v42, %v817
  %vm833 = vcmp.eq.s32.totalorder %v43, %v817
  %vm834 = vcmp.eq.s32.totalorder %v44, %v817
  %vm835 = vcmp.eq.s32.totalorder %v45, %v817
  %vm836 = vcmp.eq.s32.totalorder %v46, %v817
  %vm837 = vcmp.eq.s32.totalorder %v31, %v820
  %vm838 = vcmp.eq.s32.totalorder %v32, %v820
  %vm839 = vcmp.eq.s32.totalorder %v33, %v820
  %vm840 = vcmp.eq.s32.totalorder %v34, %v820
  %vm841 = vcmp.eq.s32.totalorder %v35, %v820
  %vm842 = vcmp.eq.s32.totalorder %v36, %v820
  %vm843 = vcmp.eq.s32.totalorder %v37, %v820
  %vm844 = vcmp.eq.s32.totalorder %v38, %v820
  %vm845 = vcmp.eq.s32.totalorder %v39, %v820
  %vm846 = vcmp.eq.s32.totalorder %v40, %v820
  %vm847 = vcmp.eq.s32.totalorder %v41, %v820
  %vm848 = vcmp.eq.s32.totalorder %v42, %v820
  %vm849 = vcmp.eq.s32.totalorder %v43, %v820
  %vm850 = vcmp.eq.s32.totalorder %v44, %v820
  %vm851 = vcmp.eq.s32.totalorder %v45, %v820
  %vm852 = vcmp.eq.s32.totalorder %v46, %v820
  %vm853 = vcmp.gt.s32.totalorder %v47, 3
  %vm854 = vcmp.gt.s32.totalorder %v48, 3
  %v855 = vsel %vm853, 1, 0
  %v856 = vsel %vm854, 1, 0
  %857 = vset.pattern.permute.xlu0 0
  %858 = vperm.xlu0 %857, %v855
  %v859 = vpop.permute.xlu0 %858
  %860 = vset.pattern.permute.xlu0 0
  %861 = vperm.xlu0 %860, %v856
  %v862 = vpop.permute.xlu0 %861
  %vm863 = vcmp.eq.s32.totalorder %v859, 1
  %vm864 = vcmp.eq.s32.totalorder %v862, 1
  %vm865 = vmand %vm821, %vm863
  %vm866 = vmand %vm822, %vm863
  %vm867 = vmand %vm823, %vm863
  %vm868 = vmand %vm824, %vm863
  %vm869 = vmand %vm825, %vm863
  %vm870 = vmand %vm826, %vm863
  %vm871 = vmand %vm827, %vm863
  %vm872 = vmand %vm828, %vm863
  %vm873 = vmand %vm829, %vm863
  %vm874 = vmand %vm830, %vm863
  %vm875 = vmand %vm831, %vm863
  %vm876 = vmand %vm832, %vm863
  %vm877 = vmand %vm833, %vm863
  %vm878 = vmand %vm834, %vm863
  %vm879 = vmand %vm835, %vm863
  %vm880 = vmand %vm836, %vm863
  %vm881 = vmand %vm837, %vm864
  %vm882 = vmand %vm838, %vm864
  %vm883 = vmand %vm839, %vm864
  %vm884 = vmand %vm840, %vm864
  %vm885 = vmand %vm841, %vm864
  %vm886 = vmand %vm842, %vm864
  %vm887 = vmand %vm843, %vm864
  %vm888 = vmand %vm844, %vm864
  %vm889 = vmand %vm845, %vm864
  %vm890 = vmand %vm846, %vm864
  %vm891 = vmand %vm847, %vm864
  %vm892 = vmand %vm848, %vm864
  %vm893 = vmand %vm849, %vm864
  %vm894 = vmand %vm850, %vm864
  %vm895 = vmand %vm851, %vm864
  %vm896 = vmand %vm852, %vm864
  %v897 = vld [vmem:[#allocation2] sm:$0xff]
  %v898 = vld [vmem:[#allocation2 + $0x8] sm:$0xff]
  %v899 = vld [vmem:[#allocation2 + $0x10] sm:$0xff]
  %v900 = vld [vmem:[#allocation2 + $0x18] sm:$0xff]
  %v901 = vld [vmem:[#allocation2 + $0x20] sm:$0xff]
  %v902 = vld [vmem:[#allocation2 + $0x28] sm:$0xff]
  %v903 = vld [vmem:[#allocation2 + $0x30] sm:$0xff]
  %v904 = vld [vmem:[#allocation2 + $0x38] sm:$0xff]
  %v905 = vld [vmem:[#allocation2 + $0x40] sm:$0xff]
  %v906 = vld [vmem:[#allocation2 + $0x48] sm:$0xff]
  %v907 = vld [vmem:[#allocation2 + $0x50] sm:$0xff]
  %v908 = vld [vmem:[#allocation2 + $0x58] sm:$0xff]
  %v909 = vld [vmem:[#allocation2 + $0x60] sm:$0xff]
  %v910 = vld [vmem:[#allocation2 + $0x68] sm:$0xff]
  %v911 = vld [vmem:[#allocation2 + $0x70] sm:$0xff]
  %v912 = vld [vmem:[#allocation2 + $0x78] sm:$0xff]
  %v913 = vld [vmem:[#allocation2 + $0x80] sm:$0xff]
  %v914 = vld [vmem:[#allocation2 + $0x88] sm:$0xff]
  %v915 = vld [vmem:[#allocation2 + $0x90] sm:$0xff]
  %v916 = vld [vmem:[#allocation2 + $0x98] sm:$0xff]
  %v917 = vld [vmem:[#allocation2 + $0xa0] sm:$0xff]
  %v918 = vld [vmem:[#allocation2 + $0xa8] sm:$0xff]
  %v919 = vld [vmem:[#allocation2 + $0xb0] sm:$0xff]
  %v920 = vld [vmem:[#allocation2 + $0xb8] sm:$0xff]
  %v921 = vld [vmem:[#allocation2 + $0xc0] sm:$0xff]
  %v922 = vld [vmem:[#allocation2 + $0xc8] sm:$0xff]
  %v923 = vld [vmem:[#allocation2 + $0xd0] sm:$0xff]
  %v924 = vld [vmem:[#allocation2 + $0xd8] sm:$0xff]
  %v925 = vld [vmem:[#allocation2 + $0xe0] sm:$0xff]
  %v926 = vld [vmem:[#allocation2 + $0xe8] sm:$0xff]
  %v927 = vld [vmem:[#allocation2 + $0xf0] sm:$0xff]
  %v928 = vld [vmem:[#allocation2 + $0xf8] sm:$0xff]
  %v929 = vsel %vm865, 1, 0
  %v930 = vsel %vm866, 1, 0
  %v931 = vsel %vm867, 1, 0
  %v932 = vsel %vm868, 1, 0
  %v933 = vsel %vm869, 1, 0
  %v934 = vsel %vm870, 1, 0
  %v935 = vsel %vm871, 1, 0
  %v936 = vsel %vm872, 1, 0
  %v937 = vsel %vm873, 1, 0
  %v938 = vsel %vm874, 1, 0
  %v939 = vsel %vm875, 1, 0
  %v940 = vsel %vm876, 1, 0
  %v941 = vsel %vm877, 1, 0
  %v942 = vsel %vm878, 1, 0
  %v943 = vsel %vm879, 1, 0
  %v944 = vsel %vm880, 1, 0
  %v945 = vsel %vm881, 1, 0
  %v946 = vsel %vm882, 1, 0
  %v947 = vsel %vm883, 1, 0
  %v948 = vsel %vm884, 1, 0
  %v949 = vsel %vm885, 1, 0
  %v950 = vsel %vm886, 1, 0
  %v951 = vsel %vm887, 1, 0
  %v952 = vsel %vm888, 1, 0
  %v953 = vsel %vm889, 1, 0
  %v954 = vsel %vm890, 1, 0
  %v955 = vsel %vm891, 1, 0
  %v956 = vsel %vm892, 1, 0
  %v957 = vsel %vm893, 1, 0
  %v958 = vsel %vm894, 1, 0
  %v959 = vsel %vm895, 1, 0
  %v960 = vsel %vm896, 1, 0
  %v961 = vcvt.s32.f32 %v929
  %v962 = vcvt.s32.f32 %v930
  %v963 = vcvt.s32.f32 %v931
  %v964 = vcvt.s32.f32 %v932
  %v965 = vcvt.s32.f32 %v933
  %v966 = vcvt.s32.f32 %v934
  %v967 = vcvt.s32.f32 %v935
  %v968 = vcvt.s32.f32 %v936
  %v969 = vcvt.s32.f32 %v937
  %v970 = vcvt.s32.f32 %v938
  %v971 = vcvt.s32.f32 %v939
  %v972 = vcvt.s32.f32 %v940
  %v973 = vcvt.s32.f32 %v941
  %v974 = vcvt.s32.f32 %v942
  %v975 = vcvt.s32.f32 %v943
  %v976 = vcvt.s32.f32 %v944
  %v977 = vcvt.s32.f32 %v945
  %v978 = vcvt.s32.f32 %v946
  %v979 = vcvt.s32.f32 %v947
  %v980 = vcvt.s32.f32 %v948
  %v981 = vcvt.s32.f32 %v949
  %v982 = vcvt.s32.f32 %v950
  %v983 = vcvt.s32.f32 %v951
  %v984 = vcvt.s32.f32 %v952
  %v985 = vcvt.s32.f32 %v953
  %v986 = vcvt.s32.f32 %v954
  %v987 = vcvt.s32.f32 %v955
  %v988 = vcvt.s32.f32 %v956
  %v989 = vcvt.s32.f32 %v957
  %v990 = vcvt.s32.f32 %v958
  %v991 = vcvt.s32.f32 %v959
  %v992 = vcvt.s32.f32 %v960
  %v993 = vadd.f32 %v897, %v961
  %v994 = vadd.f32 %v898, %v962
  %v995 = vadd.f32 %v899, %v963
  %v996 = vadd.f32 %v900, %v964
  %v997 = vadd.f32 %v901, %v965
  %v998 = vadd.f32 %v902, %v966
  %v999 = vadd.f32 %v903, %v967
  %v1000 = vadd.f32 %v904, %v968
  %v1001 = vadd.f32 %v905, %v969
  %v1002 = vadd.f32 %v906, %v970
  %v1003 = vadd.f32 %v907, %v971
  %v1004 = vadd.f32 %v908, %v972
  %v1005 = vadd.f32 %v909, %v973
  %v1006 = vadd.f32 %v910, %v974
  %v1007 = vadd.f32 %v911, %v975
  %v1008 = vadd.f32 %v912, %v976
  %v1009 = vadd.f32 %v913, %v977
  %v1010 = vadd.f32 %v914, %v978
  %v1011 = vadd.f32 %v915, %v979
  %v1012 = vadd.f32 %v916, %v980
  %v1013 = vadd.f32 %v917, %v981
  %v1014 = vadd.f32 %v918, %v982
  %v1015 = vadd.f32 %v919, %v983
  %v1016 = vadd.f32 %v920, %v984
  %v1017 = vadd.f32 %v921, %v985
  %v1018 = vadd.f32 %v922, %v986
  %v1019 = vadd.f32 %v923, %v987
  %v1020 = vadd.f32 %v924, %v988
  %v1021 = vadd.f32 %v925, %v989
  %v1022 = vadd.f32 %v926, %v990
  %v1023 = vadd.f32 %v927, %v991
  %v1024 = vadd.f32 %v928, %v992
  %1025 = vst [vmem:[#allocation2] sm:$0xff] %v993
  %1026 = vst [vmem:[#allocation2 + $0x8] sm:$0xff] %v994
  %1027 = vst [vmem:[#allocation2 + $0x10] sm:$0xff] %v995
  %1028 = vst [vmem:[#allocation2 + $0x18] sm:$0xff] %v996
  %1029 = vst [vmem:[#allocation2 + $0x20] sm:$0xff] %v997
  %1030 = vst [vmem:[#allocation2 + $0x28] sm:$0xff] %v998
  %1031 = vst [vmem:[#allocation2 + $0x30] sm:$0xff] %v999
  %1032 = vst [vmem:[#allocation2 + $0x38] sm:$0xff] %v1000
  %1033 = vst [vmem:[#allocation2 + $0x40] sm:$0xff] %v1001
  %1034 = vst [vmem:[#allocation2 + $0x48] sm:$0xff] %v1002
  %1035 = vst [vmem:[#allocation2 + $0x50] sm:$0xff] %v1003
  %1036 = vst [vmem:[#allocation2 + $0x58] sm:$0xff] %v1004
  %1037 = vst [vmem:[#allocation2 + $0x60] sm:$0xff] %v1005
  %1038 = vst [vmem:[#allocation2 + $0x68] sm:$0xff] %v1006
  %1039 = vst [vmem:[#allocation2 + $0x70] sm:$0xff] %v1007
  %1040 = vst [vmem:[#allocation2 + $0x78] sm:$0xff] %v1008
  %1041 = vst [vmem:[#allocation2 + $0x80] sm:$0xff] %v1009
  %1042 = vst [vmem:[#allocation2 + $0x88] sm:$0xff] %v1010
  %1043 = vst [vmem:[#allocation2 + $0x90] sm:$0xff] %v1011
  %1044 = vst [vmem:[#allocation2 + $0x98] sm:$0xff] %v1012
  %1045 = vst [vmem:[#allocation2 + $0xa0] sm:$0xff] %v1013
  %1046 = vst [vmem:[#allocation2 + $0xa8] sm:$0xff] %v1014
  %1047 = vst [vmem:[#allocation2 + $0xb0] sm:$0xff] %v1015
  %1048 = vst [vmem:[#allocation2 + $0xb8] sm:$0xff] %v1016
  %1049 = vst [vmem:[#allocation2 + $0xc0] sm:$0xff] %v1017
  %1050 = vst [vmem:[#allocation2 + $0xc8] sm:$0xff] %v1018
  %1051 = vst [vmem:[#allocation2 + $0xd0] sm:$0xff] %v1019
  %1052 = vst [vmem:[#allocation2 + $0xd8] sm:$0xff] %v1020
  %1053 = vst [vmem:[#allocation2 + $0xe0] sm:$0xff] %v1021
  %1054 = vst [vmem:[#allocation2 + $0xe8] sm:$0xff] %v1022
  %1055 = vst [vmem:[#allocation2 + $0xf0] sm:$0xff] %v1023
  %1056 = vst [vmem:[#allocation2 + $0xf8] sm:$0xff] %v1024
  %v1057 = vld [vmem:[%s0] sm:$0xff]
  %v1058 = vld [vmem:[%s0 + $0x8] sm:$0xff]
  %1059 = vset.pattern.permute.xlu0 4
  %1060 = vperm.xlu0 %1059, %v1057
  %v1061 = vpop.permute.xlu0 %1060
  %1062 = vset.pattern.permute.xlu0 4
  %1063 = vperm.xlu0 %1062, %v1058
  %v1064 = vpop.permute.xlu0 %1063
  %vm1065 = vcmp.eq.s32.totalorder %v31, %v1061
  %vm1066 = vcmp.eq.s32.totalorder %v32, %v1061
  %vm1067 = vcmp.eq.s32.totalorder %v33, %v1061
  %vm1068 = vcmp.eq.s32.totalorder %v34, %v1061
  %vm1069 = vcmp.eq.s32.totalorder %v35, %v1061
  %vm1070 = vcmp.eq.s32.totalorder %v36, %v1061
  %vm1071 = vcmp.eq.s32.totalorder %v37, %v1061
  %vm1072 = vcmp.eq.s32.totalorder %v38, %v1061
  %vm1073 = vcmp.eq.s32.totalorder %v39, %v1061
  %vm1074 = vcmp.eq.s32.totalorder %v40, %v1061
  %vm1075 = vcmp.eq.s32.totalorder %v41, %v1061
  %vm1076 = vcmp.eq.s32.totalorder %v42, %v1061
  %vm1077 = vcmp.eq.s32.totalorder %v43, %v1061
  %vm1078 = vcmp.eq.s32.totalorder %v44, %v1061
  %vm1079 = vcmp.eq.s32.totalorder %v45, %v1061
  %vm1080 = vcmp.eq.s32.totalorder %v46, %v1061
  %vm1081 = vcmp.eq.s32.totalorder %v31, %v1064
  %vm1082 = vcmp.eq.s32.totalorder %v32, %v1064
  %vm1083 = vcmp.eq.s32.totalorder %v33, %v1064
  %vm1084 = vcmp.eq.s32.totalorder %v34, %v1064
  %vm1085 = vcmp.eq.s32.totalorder %v35, %v1064
  %vm1086 = vcmp.eq.s32.totalorder %v36, %v1064
  %vm1087 = vcmp.eq.s32.totalorder %v37, %v1064
  %vm1088 = vcmp.eq.s32.totalorder %v38, %v1064
  %vm1089 = vcmp.eq.s32.totalorder %v39, %v1064
  %vm1090 = vcmp.eq.s32.totalorder %v40, %v1064
  %vm1091 = vcmp.eq.s32.totalorder %v41, %v1064
  %vm1092 = vcmp.eq.s32.totalorder %v42, %v1064
  %vm1093 = vcmp.eq.s32.totalorder %v43, %v1064
  %vm1094 = vcmp.eq.s32.totalorder %v44, %v1064
  %vm1095 = vcmp.eq.s32.totalorder %v45, %v1064
  %vm1096 = vcmp.eq.s32.totalorder %v46, %v1064
  %vm1097 = vcmp.gt.s32.totalorder %v47, 4
  %vm1098 = vcmp.gt.s32.totalorder %v48, 4
  %v1099 = vsel %vm1097, 1, 0
  %v1100 = vsel %vm1098, 1, 0
  %1101 = vset.pattern.permute.xlu0 0
  %1102 = vperm.xlu0 %1101, %v1099
  %v1103 = vpop.permute.xlu0 %1102
  %1104 = vset.pattern.permute.xlu0 0
  %1105 = vperm.xlu0 %1104, %v1100
  %v1106 = vpop.permute.xlu0 %1105
  %vm1107 = vcmp.eq.s32.totalorder %v1103, 1
  %vm1108 = vcmp.eq.s32.totalorder %v1106, 1
  %vm1109 = vmand %vm1065, %vm1107
  %vm1110 = vmand %vm1066, %vm1107
  %vm1111 = vmand %vm1067, %vm1107
  %vm1112 = vmand %vm1068, %vm1107
  %vm1113 = vmand %vm1069, %vm1107
  %vm1114 = vmand %vm1070, %vm1107
  %vm1115 = vmand %vm1071, %vm1107
  %vm1116 = vmand %vm1072, %vm1107
  %vm1117 = vmand %vm1073, %vm1107
  %vm1118 = vmand %vm1074, %vm1107
  %vm1119 = vmand %vm1075, %vm1107
  %vm1120 = vmand %vm1076, %vm1107
  %vm1121 = vmand %vm1077, %vm1107
  %vm1122 = vmand %vm1078, %vm1107
  %vm1123 = vmand %vm1079, %vm1107
  %vm1124 = vmand %vm1080, %vm1107
  %vm1125 = vmand %vm1081, %vm1108
  %vm1126 = vmand %vm1082, %vm1108
  %vm1127 = vmand %vm1083, %vm1108
  %vm1128 = vmand %vm1084, %vm1108
  %vm1129 = vmand %vm1085, %vm1108
  %vm1130 = vmand %vm1086, %vm1108
  %vm1131 = vmand %vm1087, %vm1108
  %vm1132 = vmand %vm1088, %vm1108
  %vm1133 = vmand %vm1089, %vm1108
  %vm1134 = vmand %vm1090, %vm1108
  %vm1135 = vmand %vm1091, %vm1108
  %vm1136 = vmand %vm1092, %vm1108
  %vm1137 = vmand %vm1093, %vm1108
  %vm1138 = vmand %vm1094, %vm1108
  %vm1139 = vmand %vm1095, %vm1108
  %vm1140 = vmand %vm1096, %vm1108
  %v1141 = vld [vmem:[#allocation2] sm:$0xff]
  %v1142 = vld [vmem:[#allocation2 + $0x8] sm:$0xff]
  %v1143 = vld [vmem:[#allocation2 + $0x10] sm:$0xff]
  %v1144 = vld [vmem:[#allocation2 + $0x18] sm:$0xff]
  %v1145 = vld [vmem:[#allocation2 + $0x20] sm:$0xff]
  %v1146 = vld [vmem:[#allocation2 + $0x28] sm:$0xff]
  %v1147 = vld [vmem:[#allocation2 + $0x30] sm:$0xff]
  %v1148 = vld [vmem:[#allocation2 + $0x38] sm:$0xff]
  %v1149 = vld [vmem:[#allocation2 + $0x40] sm:$0xff]
  %v1150 = vld [vmem:[#allocation2 + $0x48] sm:$0xff]
  %v1151 = vld [vmem:[#allocation2 + $0x50] sm:$0xff]
  %v1152 = vld [vmem:[#allocation2 + $0x58] sm:$0xff]
  %v1153 = vld [vmem:[#allocation2 + $0x60] sm:$0xff]
  %v1154 = vld [vmem:[#allocation2 + $0x68] sm:$0xff]
  %v1155 = vld [vmem:[#allocation2 + $0x70] sm:$0xff]
  %v1156 = vld [vmem:[#allocation2 + $0x78] sm:$0xff]
  %v1157 = vld [vmem:[#allocation2 + $0x80] sm:$0xff]
  %v1158 = vld [vmem:[#allocation2 + $0x88] sm:$0xff]
  %v1159 = vld [vmem:[#allocation2 + $0x90] sm:$0xff]
  %v1160 = vld [vmem:[#allocation2 + $0x98] sm:$0xff]
  %v1161 = vld [vmem:[#allocation2 + $0xa0] sm:$0xff]
  %v1162 = vld [vmem:[#allocation2 + $0xa8] sm:$0xff]
  %v1163 = vld [vmem:[#allocation2 + $0xb0] sm:$0xff]
  %v1164 = vld [vmem:[#allocation2 + $0xb8] sm:$0xff]
  %v1165 = vld [vmem:[#allocation2 + $0xc0] sm:$0xff]
  %v1166 = vld [vmem:[#allocation2 + $0xc8] sm:$0xff]
  %v1167 = vld [vmem:[#allocation2 + $0xd0] sm:$0xff]
  %v1168 = vld [vmem:[#allocation2 + $0xd8] sm:$0xff]
  %v1169 = vld [vmem:[#allocation2 + $0xe0] sm:$0xff]
  %v1170 = vld [vmem:[#allocation2 + $0xe8] sm:$0xff]
  %v1171 = vld [vmem:[#allocation2 + $0xf0] sm:$0xff]
  %v1172 = vld [vmem:[#allocation2 + $0xf8] sm:$0xff]
  %v1173 = vsel %vm1109, 1, 0
  %v1174 = vsel %vm1110, 1, 0
  %v1175 = vsel %vm1111, 1, 0
  %v1176 = vsel %vm1112, 1, 0
  %v1177 = vsel %vm1113, 1, 0
  %v1178 = vsel %vm1114, 1, 0
  %v1179 = vsel %vm1115, 1, 0
  %v1180 = vsel %vm1116, 1, 0
  %v1181 = vsel %vm1117, 1, 0
  %v1182 = vsel %vm1118, 1, 0
  %v1183 = vsel %vm1119, 1, 0
  %v1184 = vsel %vm1120, 1, 0
  %v1185 = vsel %vm1121, 1, 0
  %v1186 = vsel %vm1122, 1, 0
  %v1187 = vsel %vm1123, 1, 0
  %v1188 = vsel %vm1124, 1, 0
  %v1189 = vsel %vm1125, 1, 0
  %v1190 = vsel %vm1126, 1, 0
  %v1191 = vsel %vm1127, 1, 0
  %v1192 = vsel %vm1128, 1, 0
  %v1193 = vsel %vm1129, 1, 0
  %v1194 = vsel %vm1130, 1, 0
  %v1195 = vsel %vm1131, 1, 0
  %v1196 = vsel %vm1132, 1, 0
  %v1197 = vsel %vm1133, 1, 0
  %v1198 = vsel %vm1134, 1, 0
  %v1199 = vsel %vm1135, 1, 0
  %v1200 = vsel %vm1136, 1, 0
  %v1201 = vsel %vm1137, 1, 0
  %v1202 = vsel %vm1138, 1, 0
  %v1203 = vsel %vm1139, 1, 0
  %v1204 = vsel %vm1140, 1, 0
  %v1205 = vcvt.s32.f32 %v1173
  %v1206 = vcvt.s32.f32 %v1174
  %v1207 = vcvt.s32.f32 %v1175
  %v1208 = vcvt.s32.f32 %v1176
  %v1209 = vcvt.s32.f32 %v1177
  %v1210 = vcvt.s32.f32 %v1178
  %v1211 = vcvt.s32.f32 %v1179
  %v1212 = vcvt.s32.f32 %v1180
  %v1213 = vcvt.s32.f32 %v1181
  %v1214 = vcvt.s32.f32 %v1182
  %v1215 = vcvt.s32.f32 %v1183
  %v1216 = vcvt.s32.f32 %v1184
  %v1217 = vcvt.s32.f32 %v1185
  %v1218 = vcvt.s32.f32 %v1186
  %v1219 = vcvt.s32.f32 %v1187
  %v1220 = vcvt.s32.f32 %v1188
  %v1221 = vcvt.s32.f32 %v1189
  %v1222 = vcvt.s32.f32 %v1190
  %v1223 = vcvt.s32.f32 %v1191
  %v1224 = vcvt.s32.f32 %v1192
  %v1225 = vcvt.s32.f32 %v1193
  %v1226 = vcvt.s32.f32 %v1194
  %v1227 = vcvt.s32.f32 %v1195
  %v1228 = vcvt.s32.f32 %v1196
  %v1229 = vcvt.s32.f32 %v1197
  %v1230 = vcvt.s32.f32 %v1198
  %v1231 = vcvt.s32.f32 %v1199
  %v1232 = vcvt.s32.f32 %v1200
  %v1233 = vcvt.s32.f32 %v1201
  %v1234 = vcvt.s32.f32 %v1202
  %v1235 = vcvt.s32.f32 %v1203
  %v1236 = vcvt.s32.f32 %v1204
  %v1237 = vadd.f32 %v1141, %v1205
  %v1238 = vadd.f32 %v1142, %v1206
  %v1239 = vadd.f32 %v1143, %v1207
  %v1240 = vadd.f32 %v1144, %v1208
  %v1241 = vadd.f32 %v1145, %v1209
  %v1242 = vadd.f32 %v1146, %v1210
  %v1243 = vadd.f32 %v1147, %v1211
  %v1244 = vadd.f32 %v1148, %v1212
  %v1245 = vadd.f32 %v1149, %v1213
  %v1246 = vadd.f32 %v1150, %v1214
  %v1247 = vadd.f32 %v1151, %v1215
  %v1248 = vadd.f32 %v1152, %v1216
  %v1249 = vadd.f32 %v1153, %v1217
  %v1250 = vadd.f32 %v1154, %v1218
  %v1251 = vadd.f32 %v1155, %v1219
  %v1252 = vadd.f32 %v1156, %v1220
  %v1253 = vadd.f32 %v1157, %v1221
  %v1254 = vadd.f32 %v1158, %v1222
  %v1255 = vadd.f32 %v1159, %v1223
  %v1256 = vadd.f32 %v1160, %v1224
  %v1257 = vadd.f32 %v1161, %v1225
  %v1258 = vadd.f32 %v1162, %v1226
  %v1259 = vadd.f32 %v1163, %v1227
  %v1260 = vadd.f32 %v1164, %v1228
  %v1261 = vadd.f32 %v1165, %v1229
  %v1262 = vadd.f32 %v1166, %v1230
  %v1263 = vadd.f32 %v1167, %v1231
  %v1264 = vadd.f32 %v1168, %v1232
  %v1265 = vadd.f32 %v1169, %v1233
  %v1266 = vadd.f32 %v1170, %v1234
  %v1267 = vadd.f32 %v1171, %v1235
  %v1268 = vadd.f32 %v1172, %v1236
  %1269 = vst [vmem:[#allocation2] sm:$0xff] %v1237
  %1270 = vst [vmem:[#allocation2 + $0x8] sm:$0xff] %v1238
  %1271 = vst [vmem:[#allocation2 + $0x10] sm:$0xff] %v1239
  %1272 = vst [vmem:[#allocation2 + $0x18] sm:$0xff] %v1240
  %1273 = vst [vmem:[#allocation2 + $0x20] sm:$0xff] %v1241
  %1274 = vst [vmem:[#allocation2 + $0x28] sm:$0xff] %v1242
  %1275 = vst [vmem:[#allocation2 + $0x30] sm:$0xff] %v1243
  %1276 = vst [vmem:[#allocation2 + $0x38] sm:$0xff] %v1244
  %1277 = vst [vmem:[#allocation2 + $0x40] sm:$0xff] %v1245
  %1278 = vst [vmem:[#allocation2 + $0x48] sm:$0xff] %v1246
  %1279 = vst [vmem:[#allocation2 + $0x50] sm:$0xff] %v1247
  %1280 = vst [vmem:[#allocation2 + $0x58] sm:$0xff] %v1248
  %1281 = vst [vmem:[#allocation2 + $0x60] sm:$0xff] %v1249
  %1282 = vst [vmem:[#allocation2 + $0x68] sm:$0xff] %v1250
  %1283 = vst [vmem:[#allocation2 + $0x70] sm:$0xff] %v1251
  %1284 = vst [vmem:[#allocation2 + $0x78] sm:$0xff] %v1252
  %1285 = vst [vmem:[#allocation2 + $0x80] sm:$0xff] %v1253
  %1286 = vst [vmem:[#allocation2 + $0x88] sm:$0xff] %v1254
  %1287 = vst [vmem:[#allocation2 + $0x90] sm:$0xff] %v1255
  %1288 = vst [vmem:[#allocation2 + $0x98] sm:$0xff] %v1256
  %1289 = vst [vmem:[#allocation2 + $0xa0] sm:$0xff] %v1257
  %1290 = vst [vmem:[#allocation2 + $0xa8] sm:$0xff] %v1258
  %1291 = vst [vmem:[#allocation2 + $0xb0] sm:$0xff] %v1259
  %1292 = vst [vmem:[#allocation2 + $0xb8] sm:$0xff] %v1260
  %1293 = vst [vmem:[#allocation2 + $0xc0] sm:$0xff] %v1261
  %1294 = vst [vmem:[#allocation2 + $0xc8] sm:$0xff] %v1262
  %1295 = vst [vmem:[#allocation2 + $0xd0] sm:$0xff] %v1263
  %1296 = vst [vmem:[#allocation2 + $0xd8] sm:$0xff] %v1264
  %1297 = vst [vmem:[#allocation2 + $0xe0] sm:$0xff] %v1265
  %1298 = vst [vmem:[#allocation2 + $0xe8] sm:$0xff] %v1266
  %1299 = vst [vmem:[#allocation2 + $0xf0] sm:$0xff] %v1267
  %1300 = vst [vmem:[#allocation2 + $0xf8] sm:$0xff] %v1268
  %v1301 = vld [vmem:[%s0] sm:$0xff]
  %v1302 = vld [vmem:[%s0 + $0x8] sm:$0xff]
  %1303 = vset.pattern.permute.xlu0 5
  %1304 = vperm.xlu0 %1303, %v1301
  %v1305 = vpop.permute.xlu0 %1304
  %1306 = vset.pattern.permute.xlu0 5
  %1307 = vperm.xlu0 %1306, %v1302
  %v1308 = vpop.permute.xlu0 %1307
  %vm1309 = vcmp.eq.s32.totalorder %v31, %v1305
  %vm1310 = vcmp.eq.s32.totalorder %v32, %v1305
  %vm1311 = vcmp.eq.s32.totalorder %v33, %v1305
  %vm1312 = vcmp.eq.s32.totalorder %v34, %v1305
  %vm1313 = vcmp.eq.s32.totalorder %v35, %v1305
  %vm1314 = vcmp.eq.s32.totalorder %v36, %v1305
  %vm1315 = vcmp.eq.s32.totalorder %v37, %v1305
  %vm1316 = vcmp.eq.s32.totalorder %v38, %v1305
  %vm1317 = vcmp.eq.s32.totalorder %v39, %v1305
  %vm1318 = vcmp.eq.s32.totalorder %v40, %v1305
  %vm1319 = vcmp.eq.s32.totalorder %v41, %v1305
  %vm1320 = vcmp.eq.s32.totalorder %v42, %v1305
  %vm1321 = vcmp.eq.s32.totalorder %v43, %v1305
  %vm1322 = vcmp.eq.s32.totalorder %v44, %v1305
  %vm1323 = vcmp.eq.s32.totalorder %v45, %v1305
  %vm1324 = vcmp.eq.s32.totalorder %v46, %v1305
  %vm1325 = vcmp.eq.s32.totalorder %v31, %v1308
  %vm1326 = vcmp.eq.s32.totalorder %v32, %v1308
  %vm1327 = vcmp.eq.s32.totalorder %v33, %v1308
  %vm1328 = vcmp.eq.s32.totalorder %v34, %v1308
  %vm1329 = vcmp.eq.s32.totalorder %v35, %v1308
  %vm1330 = vcmp.eq.s32.totalorder %v36, %v1308
  %vm1331 = vcmp.eq.s32.totalorder %v37, %v1308
  %vm1332 = vcmp.eq.s32.totalorder %v38, %v1308
  %vm1333 = vcmp.eq.s32.totalorder %v39, %v1308
  %vm1334 = vcmp.eq.s32.totalorder %v40, %v1308
  %vm1335 = vcmp.eq.s32.totalorder %v41, %v1308
  %vm1336 = vcmp.eq.s32.totalorder %v42, %v1308
  %vm1337 = vcmp.eq.s32.totalorder %v43, %v1308
  %vm1338 = vcmp.eq.s32.totalorder %v44, %v1308
  %vm1339 = vcmp.eq.s32.totalorder %v45, %v1308
  %vm1340 = vcmp.eq.s32.totalorder %v46, %v1308
  %vm1341 = vcmp.gt.s32.totalorder %v47, 5
  %vm1342 = vcmp.gt.s32.totalorder %v48, 5
  %v1343 = vsel %vm1341, 1, 0
  %v1344 = vsel %vm1342, 1, 0
  %1345 = vset.pattern.permute.xlu0 0
  %1346 = vperm.xlu0 %1345, %v1343
  %v1347 = vpop.permute.xlu0 %1346
  %1348 = vset.pattern.permute.xlu0 0
  %1349 = vperm.xlu0 %1348, %v1344
  %v1350 = vpop.permute.xlu0 %1349
  %vm1351 = vcmp.eq.s32.totalorder %v1347, 1
  %vm1352 = vcmp.eq.s32.totalorder %v1350, 1
  %vm1353 = vmand %vm1309, %vm1351
  %vm1354 = vmand %vm1310, %vm1351
  %vm1355 = vmand %vm1311, %vm1351
  %vm1356 = vmand %vm1312, %vm1351
  %vm1357 = vmand %vm1313, %vm1351
  %vm1358 = vmand %vm1314, %vm1351
  %vm1359 = vmand %vm1315, %vm1351
  %vm1360 = vmand %vm1316, %vm1351
  %vm1361 = vmand %vm1317, %vm1351
  %vm1362 = vmand %vm1318, %vm1351
  %vm1363 = vmand %vm1319, %vm1351
  %vm1364 = vmand %vm1320, %vm1351
  %vm1365 = vmand %vm1321, %vm1351
  %vm1366 = vmand %vm1322, %vm1351
  %vm1367 = vmand %vm1323, %vm1351
  %vm1368 = vmand %vm1324, %vm1351
  %vm1369 = vmand %vm1325, %vm1352
  %vm1370 = vmand %vm1326, %vm1352
  %vm1371 = vmand %vm1327, %vm1352
  %vm1372 = vmand %vm1328, %vm1352
  %vm1373 = vmand %vm1329, %vm1352
  %vm1374 = vmand %vm1330, %vm1352
  %vm1375 = vmand %vm1331, %vm1352
  %vm1376 = vmand %vm1332, %vm1352
  %vm1377 = vmand %vm1333, %vm1352
  %vm1378 = vmand %vm1334, %vm1352
  %vm1379 = vmand %vm1335, %vm1352
  %vm1380 = vmand %vm1336, %vm1352
  %vm1381 = vmand %vm1337, %vm1352
  %vm1382 = vmand %vm1338, %vm1352
  %vm1383 = vmand %vm1339, %vm1352
  %vm1384 = vmand %vm1340, %vm1352
  %v1385 = vld [vmem:[#allocation2] sm:$0xff]
  %v1386 = vld [vmem:[#allocation2 + $0x8] sm:$0xff]
  %v1387 = vld [vmem:[#allocation2 + $0x10] sm:$0xff]
  %v1388 = vld [vmem:[#allocation2 + $0x18] sm:$0xff]
  %v1389 = vld [vmem:[#allocation2 + $0x20] sm:$0xff]
  %v1390 = vld [vmem:[#allocation2 + $0x28] sm:$0xff]
  %v1391 = vld [vmem:[#allocation2 + $0x30] sm:$0xff]
  %v1392 = vld [vmem:[#allocation2 + $0x38] sm:$0xff]
  %v1393 = vld [vmem:[#allocation2 + $0x40] sm:$0xff]
  %v1394 = vld [vmem:[#allocation2 + $0x48] sm:$0xff]
  %v1395 = vld [vmem:[#allocation2 + $0x50] sm:$0xff]
  %v1396 = vld [vmem:[#allocation2 + $0x58] sm:$0xff]
  %v1397 = vld [vmem:[#allocation2 + $0x60] sm:$0xff]
  %v1398 = vld [vmem:[#allocation2 + $0x68] sm:$0xff]
  %v1399 = vld [vmem:[#allocation2 + $0x70] sm:$0xff]
  %v1400 = vld [vmem:[#allocation2 + $0x78] sm:$0xff]
  %v1401 = vld [vmem:[#allocation2 + $0x80] sm:$0xff]
  %v1402 = vld [vmem:[#allocation2 + $0x88] sm:$0xff]
  %v1403 = vld [vmem:[#allocation2 + $0x90] sm:$0xff]
  %v1404 = vld [vmem:[#allocation2 + $0x98] sm:$0xff]
  %v1405 = vld [vmem:[#allocation2 + $0xa0] sm:$0xff]
  %v1406 = vld [vmem:[#allocation2 + $0xa8] sm:$0xff]
  %v1407 = vld [vmem:[#allocation2 + $0xb0] sm:$0xff]
  %v1408 = vld [vmem:[#allocation2 + $0xb8] sm:$0xff]
  %v1409 = vld [vmem:[#allocation2 + $0xc0] sm:$0xff]
  %v1410 = vld [vmem:[#allocation2 + $0xc8] sm:$0xff]
  %v1411 = vld [vmem:[#allocation2 + $0xd0] sm:$0xff]
  %v1412 = vld [vmem:[#allocation2 + $0xd8] sm:$0xff]
  %v1413 = vld [vmem:[#allocation2 + $0xe0] sm:$0xff]
  %v1414 = vld [vmem:[#allocation2 + $0xe8] sm:$0xff]
  %v1415 = vld [vmem:[#allocation2 + $0xf0] sm:$0xff]
  %v1416 = vld [vmem:[#allocation2 + $0xf8] sm:$0xff]
  %v1417 = vsel %vm1353, 1, 0
  %v1418 = vsel %vm1354, 1, 0
  %v1419 = vsel %vm1355, 1, 0
  %v1420 = vsel %vm1356, 1, 0
  %v1421 = vsel %vm1357, 1, 0
  %v1422 = vsel %vm1358, 1, 0
  %v1423 = vsel %vm1359, 1, 0
  %v1424 = vsel %vm1360, 1, 0
  %v1425 = vsel %vm1361, 1, 0
  %v1426 = vsel %vm1362, 1, 0
  %v1427 = vsel %vm1363, 1, 0
  %v1428 = vsel %vm1364, 1, 0
  %v1429 = vsel %vm1365, 1, 0
  %v1430 = vsel %vm1366, 1, 0
  %v1431 = vsel %vm1367, 1, 0
  %v1432 = vsel %vm1368, 1, 0
  %v1433 = vsel %vm1369, 1, 0
  %v1434 = vsel %vm1370, 1, 0
  %v1435 = vsel %vm1371, 1, 0
  %v1436 = vsel %vm1372, 1, 0
  %v1437 = vsel %vm1373, 1, 0
  %v1438 = vsel %vm1374, 1, 0
  %v1439 = vsel %vm1375, 1, 0
  %v1440 = vsel %vm1376, 1, 0
  %v1441 = vsel %vm1377, 1, 0
  %v1442 = vsel %vm1378, 1, 0
  %v1443 = vsel %vm1379, 1, 0
  %v1444 = vsel %vm1380, 1, 0
  %v1445 = vsel %vm1381, 1, 0
  %v1446 = vsel %vm1382, 1, 0
  %v1447 = vsel %vm1383, 1, 0
  %v1448 = vsel %vm1384, 1, 0
  %v1449 = vcvt.s32.f32 %v1417
  %v1450 = vcvt.s32.f32 %v1418
  %v1451 = vcvt.s32.f32 %v1419
  %v1452 = vcvt.s32.f32 %v1420
  %v1453 = vcvt.s32.f32 %v1421
  %v1454 = vcvt.s32.f32 %v1422
  %v1455 = vcvt.s32.f32 %v1423
  %v1456 = vcvt.s32.f32 %v1424
  %v1457 = vcvt.s32.f32 %v1425
  %v1458 = vcvt.s32.f32 %v1426
  %v1459 = vcvt.s32.f32 %v1427
  %v1460 = vcvt.s32.f32 %v1428
  %v1461 = vcvt.s32.f32 %v1429
  %v1462 = vcvt.s32.f32 %v1430
  %v1463 = vcvt.s32.f32 %v1431
  %v1464 = vcvt.s32.f32 %v1432
  %v1465 = vcvt.s32.f32 %v1433
  %v1466 = vcvt.s32.f32 %v1434
  %v1467 = vcvt.s32.f32 %v1435
  %v1468 = vcvt.s32.f32 %v1436
  %v1469 = vcvt.s32.f32 %v1437
  %v1470 = vcvt.s32.f32 %v1438
  %v1471 = vcvt.s32.f32 %v1439
  %v1472 = vcvt.s32.f32 %v1440
  %v1473 = vcvt.s32.f32 %v1441
  %v1474 = vcvt.s32.f32 %v1442
  %v1475 = vcvt.s32.f32 %v1443
  %v1476 = vcvt.s32.f32 %v1444
  %v1477 = vcvt.s32.f32 %v1445
  %v1478 = vcvt.s32.f32 %v1446
  %v1479 = vcvt.s32.f32 %v1447
  %v1480 = vcvt.s32.f32 %v1448
  %v1481 = vadd.f32 %v1385, %v1449
  %v1482 = vadd.f32 %v1386, %v1450
  %v1483 = vadd.f32 %v1387, %v1451
  %v1484 = vadd.f32 %v1388, %v1452
  %v1485 = vadd.f32 %v1389, %v1453
  %v1486 = vadd.f32 %v1390, %v1454
  %v1487 = vadd.f32 %v1391, %v1455
  %v1488 = vadd.f32 %v1392, %v1456
  %v1489 = vadd.f32 %v1393, %v1457
  %v1490 = vadd.f32 %v1394, %v1458
  %v1491 = vadd.f32 %v1395, %v1459
  %v1492 = vadd.f32 %v1396, %v1460
  %v1493 = vadd.f32 %v1397, %v1461
  %v1494 = vadd.f32 %v1398, %v1462
  %v1495 = vadd.f32 %v1399, %v1463
  %v1496 = vadd.f32 %v1400, %v1464
  %v1497 = vadd.f32 %v1401, %v1465
  %v1498 = vadd.f32 %v1402, %v1466
  %v1499 = vadd.f32 %v1403, %v1467
  %v1500 = vadd.f32 %v1404, %v1468
  %v1501 = vadd.f32 %v1405, %v1469
  %v1502 = vadd.f32 %v1406, %v1470
  %v1503 = vadd.f32 %v1407, %v1471
  %v1504 = vadd.f32 %v1408, %v1472
  %v1505 = vadd.f32 %v1409, %v1473
  %v1506 = vadd.f32 %v1410, %v1474
  %v1507 = vadd.f32 %v1411, %v1475
  %v1508 = vadd.f32 %v1412, %v1476
  %v1509 = vadd.f32 %v1413, %v1477
  %v1510 = vadd.f32 %v1414, %v1478
  %v1511 = vadd.f32 %v1415, %v1479
  %v1512 = vadd.f32 %v1416, %v1480
  %1513 = vst [vmem:[#allocation2] sm:$0xff] %v1481
  %1514 = vst [vmem:[#allocation2 + $0x8] sm:$0xff] %v1482
  %1515 = vst [vmem:[#allocation2 + $0x10] sm:$0xff] %v1483
  %1516 = vst [vmem:[#allocation2 + $0x18] sm:$0xff] %v1484
  %1517 = vst [vmem:[#allocation2 + $0x20] sm:$0xff] %v1485
  %1518 = vst [vmem:[#allocation2 + $0x28] sm:$0xff] %v1486
  %1519 = vst [vmem:[#allocation2 + $0x30] sm:$0xff] %v1487
  %1520 = vst [vmem:[#allocation2 + $0x38] sm:$0xff] %v1488
  %1521 = vst [vmem:[#allocation2 + $0x40] sm:$0xff] %v1489
  %1522 = vst [vmem:[#allocation2 + $0x48] sm:$0xff] %v1490
  %1523 = vst [vmem:[#allocation2 + $0x50] sm:$0xff] %v1491
  %1524 = vst [vmem:[#allocation2 + $0x58] sm:$0xff] %v1492
  %1525 = vst [vmem:[#allocation2 + $0x60] sm:$0xff] %v1493
  %1526 = vst [vmem:[#allocation2 + $0x68] sm:$0xff] %v1494
  %1527 = vst [vmem:[#allocation2 + $0x70] sm:$0xff] %v1495
  %1528 = vst [vmem:[#allocation2 + $0x78] sm:$0xff] %v1496
  %1529 = vst [vmem:[#allocation2 + $0x80] sm:$0xff] %v1497
  %1530 = vst [vmem:[#allocation2 + $0x88] sm:$0xff] %v1498
  %1531 = vst [vmem:[#allocation2 + $0x90] sm:$0xff] %v1499
  %1532 = vst [vmem:[#allocation2 + $0x98] sm:$0xff] %v1500
  %1533 = vst [vmem:[#allocation2 + $0xa0] sm:$0xff] %v1501
  %1534 = vst [vmem:[#allocation2 + $0xa8] sm:$0xff] %v1502
  %1535 = vst [vmem:[#allocation2 + $0xb0] sm:$0xff] %v1503
  %1536 = vst [vmem:[#allocation2 + $0xb8] sm:$0xff] %v1504
  %1537 = vst [vmem:[#allocation2 + $0xc0] sm:$0xff] %v1505
  %1538 = vst [vmem:[#allocation2 + $0xc8] sm:$0xff] %v1506
  %1539 = vst [vmem:[#allocation2 + $0xd0] sm:$0xff] %v1507
  %1540 = vst [vmem:[#allocation2 + $0xd8] sm:$0xff] %v1508
  %1541 = vst [vmem:[#allocation2 + $0xe0] sm:$0xff] %v1509
  %1542 = vst [vmem:[#allocation2 + $0xe8] sm:$0xff] %v1510
  %1543 = vst [vmem:[#allocation2 + $0xf0] sm:$0xff] %v1511
  %1544 = vst [vmem:[#allocation2 + $0xf8] sm:$0xff] %v1512
  %v1545 = vld [vmem:[%s0] sm:$0xff]
  %v1546 = vld [vmem:[%s0 + $0x8] sm:$0xff]
  %1547 = vset.pattern.permute.xlu0 6
  %1548 = vperm.xlu0 %1547, %v1545
  %v1549 = vpop.permute.xlu0 %1548
  %1550 = vset.pattern.permute.xlu0 6
  %1551 = vperm.xlu0 %1550, %v1546
  %v1552 = vpop.permute.xlu0 %1551
  %vm1553 = vcmp.eq.s32.totalorder %v31, %v1549
  %vm1554 = vcmp.eq.s32.totalorder %v32, %v1549
  %vm1555 = vcmp.eq.s32.totalorder %v33, %v1549
  %vm1556 = vcmp.eq.s32.totalorder %v34, %v1549
  %vm1557 = vcmp.eq.s32.totalorder %v35, %v1549
  %vm1558 = vcmp.eq.s32.totalorder %v36, %v1549
  %vm1559 = vcmp.eq.s32.totalorder %v37, %v1549
  %vm1560 = vcmp.eq.s32.totalorder %v38, %v1549
  %vm1561 = vcmp.eq.s32.totalorder %v39, %v1549
  %vm1562 = vcmp.eq.s32.totalorder %v40, %v1549
  %vm1563 = vcmp.eq.s32.totalorder %v41, %v1549
  %vm1564 = vcmp.eq.s32.totalorder %v42, %v1549
  %vm1565 = vcmp.eq.s32.totalorder %v43, %v1549
  %vm1566 = vcmp.eq.s32.totalorder %v44, %v1549
  %vm1567 = vcmp.eq.s32.totalorder %v45, %v1549
  %vm1568 = vcmp.eq.s32.totalorder %v46, %v1549
  %vm1569 = vcmp.eq.s32.totalorder %v31, %v1552
  %vm1570 = vcmp.eq.s32.totalorder %v32, %v1552
  %vm1571 = vcmp.eq.s32.totalorder %v33, %v1552
  %vm1572 = vcmp.eq.s32.totalorder %v34, %v1552
  %vm1573 = vcmp.eq.s32.totalorder %v35, %v1552
  %vm1574 = vcmp.eq.s32.totalorder %v36, %v1552
  %vm1575 = vcmp.eq.s32.totalorder %v37, %v1552
  %vm1576 = vcmp.eq.s32.totalorder %v38, %v1552
  %vm1577 = vcmp.eq.s32.totalorder %v39, %v1552
  %vm1578 = vcmp.eq.s32.totalorder %v40, %v1552
  %vm1579 = vcmp.eq.s32.totalorder %v41, %v1552
  %vm1580 = vcmp.eq.s32.totalorder %v42, %v1552
  %vm1581 = vcmp.eq.s32.totalorder %v43, %v1552
  %vm1582 = vcmp.eq.s32.totalorder %v44, %v1552
  %vm1583 = vcmp.eq.s32.totalorder %v45, %v1552
  %vm1584 = vcmp.eq.s32.totalorder %v46, %v1552
  %vm1585 = vcmp.gt.s32.totalorder %v47, 6
  %vm1586 = vcmp.gt.s32.totalorder %v48, 6
  %v1587 = vsel %vm1585, 1, 0
  %v1588 = vsel %vm1586, 1, 0
  %1589 = vset.pattern.permute.xlu0 0
  %1590 = vperm.xlu0 %1589, %v1587
  %v1591 = vpop.permute.xlu0 %1590
  %1592 = vset.pattern.permute.xlu0 0
  %1593 = vperm.xlu0 %1592, %v1588
  %v1594 = vpop.permute.xlu0 %1593
  %vm1595 = vcmp.eq.s32.totalorder %v1591, 1
  %vm1596 = vcmp.eq.s32.totalorder %v1594, 1
  %vm1597 = vmand %vm1553, %vm1595
  %vm1598 = vmand %vm1554, %vm1595
  %vm1599 = vmand %vm1555, %vm1595
  %vm1600 = vmand %vm1556, %vm1595
  %vm1601 = vmand %vm1557, %vm1595
  %vm1602 = vmand %vm1558, %vm1595
  %vm1603 = vmand %vm1559, %vm1595
  %vm1604 = vmand %vm1560, %vm1595
  %vm1605 = vmand %vm1561, %vm1595
  %vm1606 = vmand %vm1562, %vm1595
  %vm1607 = vmand %vm1563, %vm1595
  %vm1608 = vmand %vm1564, %vm1595
  %vm1609 = vmand %vm1565, %vm1595
  %vm1610 = vmand %vm1566, %vm1595
  %vm1611 = vmand %vm1567, %vm1595
  %vm1612 = vmand %vm1568, %vm1595
  %vm1613 = vmand %vm1569, %vm1596
  %vm1614 = vmand %vm1570, %vm1596
  %vm1615 = vmand %vm1571, %vm1596
  %vm1616 = vmand %vm1572, %vm1596
  %vm1617 = vmand %vm1573, %vm1596
  %vm1618 = vmand %vm1574, %vm1596
  %vm1619 = vmand %vm1575, %vm1596
  %vm1620 = vmand %vm1576, %vm1596
  %vm1621 = vmand %vm1577, %vm1596
  %vm1622 = vmand %vm1578, %vm1596
  %vm1623 = vmand %vm1579, %vm1596
  %vm1624 = vmand %vm1580, %vm1596
  %vm1625 = vmand %vm1581, %vm1596
  %vm1626 = vmand %vm1582, %vm1596
  %vm1627 = vmand %vm1583, %vm1596
  %vm1628 = vmand %vm1584, %vm1596
  %v1629 = vld [vmem:[#allocation2] sm:$0xff]
  %v1630 = vld [vmem:[#allocation2 + $0x8] sm:$0xff]
  %v1631 = vld [vmem:[#allocation2 + $0x10] sm:$0xff]
  %v1632 = vld [vmem:[#allocation2 + $0x18] sm:$0xff]
  %v1633 = vld [vmem:[#allocation2 + $0x20] sm:$0xff]
  %v1634 = vld [vmem:[#allocation2 + $0x28] sm:$0xff]
  %v1635 = vld [vmem:[#allocation2 + $0x30] sm:$0xff]
  %v1636 = vld [vmem:[#allocation2 + $0x38] sm:$0xff]
  %v1637 = vld [vmem:[#allocation2 + $0x40] sm:$0xff]
  %v1638 = vld [vmem:[#allocation2 + $0x48] sm:$0xff]
  %v1639 = vld [vmem:[#allocation2 + $0x50] sm:$0xff]
  %v1640 = vld [vmem:[#allocation2 + $0x58] sm:$0xff]
  %v1641 = vld [vmem:[#allocation2 + $0x60] sm:$0xff]
  %v1642 = vld [vmem:[#allocation2 + $0x68] sm:$0xff]
  %v1643 = vld [vmem:[#allocation2 + $0x70] sm:$0xff]
  %v1644 = vld [vmem:[#allocation2 + $0x78] sm:$0xff]
  %v1645 = vld [vmem:[#allocation2 + $0x80] sm:$0xff]
  %v1646 = vld [vmem:[#allocation2 + $0x88] sm:$0xff]
  %v1647 = vld [vmem:[#allocation2 + $0x90] sm:$0xff]
  %v1648 = vld [vmem:[#allocation2 + $0x98] sm:$0xff]
  %v1649 = vld [vmem:[#allocation2 + $0xa0] sm:$0xff]
  %v1650 = vld [vmem:[#allocation2 + $0xa8] sm:$0xff]
  %v1651 = vld [vmem:[#allocation2 + $0xb0] sm:$0xff]
  %v1652 = vld [vmem:[#allocation2 + $0xb8] sm:$0xff]
  %v1653 = vld [vmem:[#allocation2 + $0xc0] sm:$0xff]
  %v1654 = vld [vmem:[#allocation2 + $0xc8] sm:$0xff]
  %v1655 = vld [vmem:[#allocation2 + $0xd0] sm:$0xff]
  %v1656 = vld [vmem:[#allocation2 + $0xd8] sm:$0xff]
  %v1657 = vld [vmem:[#allocation2 + $0xe0] sm:$0xff]
  %v1658 = vld [vmem:[#allocation2 + $0xe8] sm:$0xff]
  %v1659 = vld [vmem:[#allocation2 + $0xf0] sm:$0xff]
  %v1660 = vld [vmem:[#allocation2 + $0xf8] sm:$0xff]
  %v1661 = vsel %vm1597, 1, 0
  %v1662 = vsel %vm1598, 1, 0
  %v1663 = vsel %vm1599, 1, 0
  %v1664 = vsel %vm1600, 1, 0
  %v1665 = vsel %vm1601, 1, 0
  %v1666 = vsel %vm1602, 1, 0
  %v1667 = vsel %vm1603, 1, 0
  %v1668 = vsel %vm1604, 1, 0
  %v1669 = vsel %vm1605, 1, 0
  %v1670 = vsel %vm1606, 1, 0
  %v1671 = vsel %vm1607, 1, 0
  %v1672 = vsel %vm1608, 1, 0
  %v1673 = vsel %vm1609, 1, 0
  %v1674 = vsel %vm1610, 1, 0
  %v1675 = vsel %vm1611, 1, 0
  %v1676 = vsel %vm1612, 1, 0
  %v1677 = vsel %vm1613, 1, 0
  %v1678 = vsel %vm1614, 1, 0
  %v1679 = vsel %vm1615, 1, 0
  %v1680 = vsel %vm1616, 1, 0
  %v1681 = vsel %vm1617, 1, 0
  %v1682 = vsel %vm1618, 1, 0
  %v1683 = vsel %vm1619, 1, 0
  %v1684 = vsel %vm1620, 1, 0
  %v1685 = vsel %vm1621, 1, 0
  %v1686 = vsel %vm1622, 1, 0
  %v1687 = vsel %vm1623, 1, 0
  %v1688 = vsel %vm1624, 1, 0
  %v1689 = vsel %vm1625, 1, 0
  %v1690 = vsel %vm1626, 1, 0
  %v1691 = vsel %vm1627, 1, 0
  %v1692 = vsel %vm1628, 1, 0
  %v1693 = vcvt.s32.f32 %v1661
  %v1694 = vcvt.s32.f32 %v1662
  %v1695 = vcvt.s32.f32 %v1663
  %v1696 = vcvt.s32.f32 %v1664
  %v1697 = vcvt.s32.f32 %v1665
  %v1698 = vcvt.s32.f32 %v1666
  %v1699 = vcvt.s32.f32 %v1667
  %v1700 = vcvt.s32.f32 %v1668
  %v1701 = vcvt.s32.f32 %v1669
  %v1702 = vcvt.s32.f32 %v1670
  %v1703 = vcvt.s32.f32 %v1671
  %v1704 = vcvt.s32.f32 %v1672
  %v1705 = vcvt.s32.f32 %v1673
  %v1706 = vcvt.s32.f32 %v1674
  %v1707 = vcvt.s32.f32 %v1675
  %v1708 = vcvt.s32.f32 %v1676
  %v1709 = vcvt.s32.f32 %v1677
  %v1710 = vcvt.s32.f32 %v1678
  %v1711 = vcvt.s32.f32 %v1679
  %v1712 = vcvt.s32.f32 %v1680
  %v1713 = vcvt.s32.f32 %v1681
  %v1714 = vcvt.s32.f32 %v1682
  %v1715 = vcvt.s32.f32 %v1683
  %v1716 = vcvt.s32.f32 %v1684
  %v1717 = vcvt.s32.f32 %v1685
  %v1718 = vcvt.s32.f32 %v1686
  %v1719 = vcvt.s32.f32 %v1687
  %v1720 = vcvt.s32.f32 %v1688
  %v1721 = vcvt.s32.f32 %v1689
  %v1722 = vcvt.s32.f32 %v1690
  %v1723 = vcvt.s32.f32 %v1691
  %v1724 = vcvt.s32.f32 %v1692
  %v1725 = vadd.f32 %v1629, %v1693
  %v1726 = vadd.f32 %v1630, %v1694
  %v1727 = vadd.f32 %v1631, %v1695
  %v1728 = vadd.f32 %v1632, %v1696
  %v1729 = vadd.f32 %v1633, %v1697
  %v1730 = vadd.f32 %v1634, %v1698
  %v1731 = vadd.f32 %v1635, %v1699
  %v1732 = vadd.f32 %v1636, %v1700
  %v1733 = vadd.f32 %v1637, %v1701
  %v1734 = vadd.f32 %v1638, %v1702
  %v1735 = vadd.f32 %v1639, %v1703
  %v1736 = vadd.f32 %v1640, %v1704
  %v1737 = vadd.f32 %v1641, %v1705
  %v1738 = vadd.f32 %v1642, %v1706
  %v1739 = vadd.f32 %v1643, %v1707
  %v1740 = vadd.f32 %v1644, %v1708
  %v1741 = vadd.f32 %v1645, %v1709
  %v1742 = vadd.f32 %v1646, %v1710
  %v1743 = vadd.f32 %v1647, %v1711
  %v1744 = vadd.f32 %v1648, %v1712
  %v1745 = vadd.f32 %v1649, %v1713
  %v1746 = vadd.f32 %v1650, %v1714
  %v1747 = vadd.f32 %v1651, %v1715
  %v1748 = vadd.f32 %v1652, %v1716
  %v1749 = vadd.f32 %v1653, %v1717
  %v1750 = vadd.f32 %v1654, %v1718
  %v1751 = vadd.f32 %v1655, %v1719
  %v1752 = vadd.f32 %v1656, %v1720
  %v1753 = vadd.f32 %v1657, %v1721
  %v1754 = vadd.f32 %v1658, %v1722
  %v1755 = vadd.f32 %v1659, %v1723
  %v1756 = vadd.f32 %v1660, %v1724
  %1757 = vst [vmem:[#allocation2] sm:$0xff] %v1725
  %1758 = vst [vmem:[#allocation2 + $0x8] sm:$0xff] %v1726
  %1759 = vst [vmem:[#allocation2 + $0x10] sm:$0xff] %v1727
  %1760 = vst [vmem:[#allocation2 + $0x18] sm:$0xff] %v1728
  %1761 = vst [vmem:[#allocation2 + $0x20] sm:$0xff] %v1729
  %1762 = vst [vmem:[#allocation2 + $0x28] sm:$0xff] %v1730
  %1763 = vst [vmem:[#allocation2 + $0x30] sm:$0xff] %v1731
  %1764 = vst [vmem:[#allocation2 + $0x38] sm:$0xff] %v1732
  %1765 = vst [vmem:[#allocation2 + $0x40] sm:$0xff] %v1733
  %1766 = vst [vmem:[#allocation2 + $0x48] sm:$0xff] %v1734
  %1767 = vst [vmem:[#allocation2 + $0x50] sm:$0xff] %v1735
  %1768 = vst [vmem:[#allocation2 + $0x58] sm:$0xff] %v1736
  %1769 = vst [vmem:[#allocation2 + $0x60] sm:$0xff] %v1737
  %1770 = vst [vmem:[#allocation2 + $0x68] sm:$0xff] %v1738
  %1771 = vst [vmem:[#allocation2 + $0x70] sm:$0xff] %v1739
  %1772 = vst [vmem:[#allocation2 + $0x78] sm:$0xff] %v1740
  %1773 = vst [vmem:[#allocation2 + $0x80] sm:$0xff] %v1741
  %1774 = vst [vmem:[#allocation2 + $0x88] sm:$0xff] %v1742
  %1775 = vst [vmem:[#allocation2 + $0x90] sm:$0xff] %v1743
  %1776 = vst [vmem:[#allocation2 + $0x98] sm:$0xff] %v1744
  %1777 = vst [vmem:[#allocation2 + $0xa0] sm:$0xff] %v1745
  %1778 = vst [vmem:[#allocation2 + $0xa8] sm:$0xff] %v1746
  %1779 = vst [vmem:[#allocation2 + $0xb0] sm:$0xff] %v1747
  %1780 = vst [vmem:[#allocation2 + $0xb8] sm:$0xff] %v1748
  %1781 = vst [vmem:[#allocation2 + $0xc0] sm:$0xff] %v1749
  %1782 = vst [vmem:[#allocation2 + $0xc8] sm:$0xff] %v1750
  %1783 = vst [vmem:[#allocation2 + $0xd0] sm:$0xff] %v1751
  %1784 = vst [vmem:[#allocation2 + $0xd8] sm:$0xff] %v1752
  %1785 = vst [vmem:[#allocation2 + $0xe0] sm:$0xff] %v1753
  %1786 = vst [vmem:[#allocation2 + $0xe8] sm:$0xff] %v1754
  %1787 = vst [vmem:[#allocation2 + $0xf0] sm:$0xff] %v1755
  %1788 = vst [vmem:[#allocation2 + $0xf8] sm:$0xff] %v1756
  %v1789 = vld [vmem:[%s0] sm:$0xff]
  %v1790 = vld [vmem:[%s0 + $0x8] sm:$0xff]
  %1791 = vset.pattern.permute.xlu0 7
  %1792 = vperm.xlu0 %1791, %v1789
  %v1793 = vpop.permute.xlu0 %1792
  %1794 = vset.pattern.permute.xlu0 7
  %1795 = vperm.xlu0 %1794, %v1790
  %v1796 = vpop.permute.xlu0 %1795
  %vm1797 = vcmp.eq.s32.totalorder %v31, %v1793
  %vm1798 = vcmp.eq.s32.totalorder %v32, %v1793
  %vm1799 = vcmp.eq.s32.totalorder %v33, %v1793
  %vm1800 = vcmp.eq.s32.totalorder %v34, %v1793
  %vm1801 = vcmp.eq.s32.totalorder %v35, %v1793
  %vm1802 = vcmp.eq.s32.totalorder %v36, %v1793
  %vm1803 = vcmp.eq.s32.totalorder %v37, %v1793
  %vm1804 = vcmp.eq.s32.totalorder %v38, %v1793
  %vm1805 = vcmp.eq.s32.totalorder %v39, %v1793
  %vm1806 = vcmp.eq.s32.totalorder %v40, %v1793
  %vm1807 = vcmp.eq.s32.totalorder %v41, %v1793
  %vm1808 = vcmp.eq.s32.totalorder %v42, %v1793
  %vm1809 = vcmp.eq.s32.totalorder %v43, %v1793
  %vm1810 = vcmp.eq.s32.totalorder %v44, %v1793
  %vm1811 = vcmp.eq.s32.totalorder %v45, %v1793
  %vm1812 = vcmp.eq.s32.totalorder %v46, %v1793
  %vm1813 = vcmp.eq.s32.totalorder %v31, %v1796
  %vm1814 = vcmp.eq.s32.totalorder %v32, %v1796
  %vm1815 = vcmp.eq.s32.totalorder %v33, %v1796
  %vm1816 = vcmp.eq.s32.totalorder %v34, %v1796
  %vm1817 = vcmp.eq.s32.totalorder %v35, %v1796
  %vm1818 = vcmp.eq.s32.totalorder %v36, %v1796
  %vm1819 = vcmp.eq.s32.totalorder %v37, %v1796
  %vm1820 = vcmp.eq.s32.totalorder %v38, %v1796
  %vm1821 = vcmp.eq.s32.totalorder %v39, %v1796
  %vm1822 = vcmp.eq.s32.totalorder %v40, %v1796
  %vm1823 = vcmp.eq.s32.totalorder %v41, %v1796
  %vm1824 = vcmp.eq.s32.totalorder %v42, %v1796
  %vm1825 = vcmp.eq.s32.totalorder %v43, %v1796
  %vm1826 = vcmp.eq.s32.totalorder %v44, %v1796
  %vm1827 = vcmp.eq.s32.totalorder %v45, %v1796
  %vm1828 = vcmp.eq.s32.totalorder %v46, %v1796
  %vm1829 = vcmp.gt.s32.totalorder %v47, 7
  %vm1830 = vcmp.gt.s32.totalorder %v48, 7
  %v1831 = vsel %vm1829, 1, 0
  %v1832 = vsel %vm1830, 1, 0
  %1833 = vset.pattern.permute.xlu0 0
  %1834 = vperm.xlu0 %1833, %v1831
  %v1835 = vpop.permute.xlu0 %1834
  %1836 = vset.pattern.permute.xlu0 0
  %1837 = vperm.xlu0 %1836, %v1832
  %v1838 = vpop.permute.xlu0 %1837
  %vm1839 = vcmp.eq.s32.totalorder %v1835, 1
  %vm1840 = vcmp.eq.s32.totalorder %v1838, 1
  %vm1841 = vmand %vm1797, %vm1839
  %vm1842 = vmand %vm1798, %vm1839
  %vm1843 = vmand %vm1799, %vm1839
  %vm1844 = vmand %vm1800, %vm1839
  %vm1845 = vmand %vm1801, %vm1839
  %vm1846 = vmand %vm1802, %vm1839
  %vm1847 = vmand %vm1803, %vm1839
  %vm1848 = vmand %vm1804, %vm1839
  %vm1849 = vmand %vm1805, %vm1839
  %vm1850 = vmand %vm1806, %vm1839
  %vm1851 = vmand %vm1807, %vm1839
  %vm1852 = vmand %vm1808, %vm1839
  %vm1853 = vmand %vm1809, %vm1839
  %vm1854 = vmand %vm1810, %vm1839
  %vm1855 = vmand %vm1811, %vm1839
  %vm1856 = vmand %vm1812, %vm1839
  %vm1857 = vmand %vm1813, %vm1840
  %vm1858 = vmand %vm1814, %vm1840
  %vm1859 = vmand %vm1815, %vm1840
  %vm1860 = vmand %vm1816, %vm1840
  %vm1861 = vmand %vm1817, %vm1840
  %vm1862 = vmand %vm1818, %vm1840
  %vm1863 = vmand %vm1819, %vm1840
  %vm1864 = vmand %vm1820, %vm1840
  %vm1865 = vmand %vm1821, %vm1840
  %vm1866 = vmand %vm1822, %vm1840
  %vm1867 = vmand %vm1823, %vm1840
  %vm1868 = vmand %vm1824, %vm1840
  %vm1869 = vmand %vm1825, %vm1840
  %vm1870 = vmand %vm1826, %vm1840
  %vm1871 = vmand %vm1827, %vm1840
  %vm1872 = vmand %vm1828, %vm1840
  %v1873 = vld [vmem:[#allocation2] sm:$0xff]
  %v1874 = vld [vmem:[#allocation2 + $0x8] sm:$0xff]
  %v1875 = vld [vmem:[#allocation2 + $0x10] sm:$0xff]
  %v1876 = vld [vmem:[#allocation2 + $0x18] sm:$0xff]
  %v1877 = vld [vmem:[#allocation2 + $0x20] sm:$0xff]
  %v1878 = vld [vmem:[#allocation2 + $0x28] sm:$0xff]
  %v1879 = vld [vmem:[#allocation2 + $0x30] sm:$0xff]
  %v1880 = vld [vmem:[#allocation2 + $0x38] sm:$0xff]
  %v1881 = vld [vmem:[#allocation2 + $0x40] sm:$0xff]
  %v1882 = vld [vmem:[#allocation2 + $0x48] sm:$0xff]
  %v1883 = vld [vmem:[#allocation2 + $0x50] sm:$0xff]
  %v1884 = vld [vmem:[#allocation2 + $0x58] sm:$0xff]
  %v1885 = vld [vmem:[#allocation2 + $0x60] sm:$0xff]
  %v1886 = vld [vmem:[#allocation2 + $0x68] sm:$0xff]
  %v1887 = vld [vmem:[#allocation2 + $0x70] sm:$0xff]
  %v1888 = vld [vmem:[#allocation2 + $0x78] sm:$0xff]
  %v1889 = vld [vmem:[#allocation2 + $0x80] sm:$0xff]
  %v1890 = vld [vmem:[#allocation2 + $0x88] sm:$0xff]
  %v1891 = vld [vmem:[#allocation2 + $0x90] sm:$0xff]
  %v1892 = vld [vmem:[#allocation2 + $0x98] sm:$0xff]
  %v1893 = vld [vmem:[#allocation2 + $0xa0] sm:$0xff]
  %v1894 = vld [vmem:[#allocation2 + $0xa8] sm:$0xff]
  %v1895 = vld [vmem:[#allocation2 + $0xb0] sm:$0xff]
  %v1896 = vld [vmem:[#allocation2 + $0xb8] sm:$0xff]
  %v1897 = vld [vmem:[#allocation2 + $0xc0] sm:$0xff]
  %v1898 = vld [vmem:[#allocation2 + $0xc8] sm:$0xff]
  %v1899 = vld [vmem:[#allocation2 + $0xd0] sm:$0xff]
  %v1900 = vld [vmem:[#allocation2 + $0xd8] sm:$0xff]
  %v1901 = vld [vmem:[#allocation2 + $0xe0] sm:$0xff]
  %v1902 = vld [vmem:[#allocation2 + $0xe8] sm:$0xff]
  %v1903 = vld [vmem:[#allocation2 + $0xf0] sm:$0xff]
  %v1904 = vld [vmem:[#allocation2 + $0xf8] sm:$0xff]
  %v1905 = vsel %vm1841, 1, 0
  %v1906 = vsel %vm1842, 1, 0
  %v1907 = vsel %vm1843, 1, 0
  %v1908 = vsel %vm1844, 1, 0
  %v1909 = vsel %vm1845, 1, 0
  %v1910 = vsel %vm1846, 1, 0
  %v1911 = vsel %vm1847, 1, 0
  %v1912 = vsel %vm1848, 1, 0
  %v1913 = vsel %vm1849, 1, 0
  %v1914 = vsel %vm1850, 1, 0
  %v1915 = vsel %vm1851, 1, 0
  %v1916 = vsel %vm1852, 1, 0
  %v1917 = vsel %vm1853, 1, 0
  %v1918 = vsel %vm1854, 1, 0
  %v1919 = vsel %vm1855, 1, 0
  %v1920 = vsel %vm1856, 1, 0
  %v1921 = vsel %vm1857, 1, 0
  %v1922 = vsel %vm1858, 1, 0
  %v1923 = vsel %vm1859, 1, 0
  %v1924 = vsel %vm1860, 1, 0
  %v1925 = vsel %vm1861, 1, 0
  %v1926 = vsel %vm1862, 1, 0
  %v1927 = vsel %vm1863, 1, 0
  %v1928 = vsel %vm1864, 1, 0
  %v1929 = vsel %vm1865, 1, 0
  %v1930 = vsel %vm1866, 1, 0
  %v1931 = vsel %vm1867, 1, 0
  %v1932 = vsel %vm1868, 1, 0
  %v1933 = vsel %vm1869, 1, 0
  %v1934 = vsel %vm1870, 1, 0
  %v1935 = vsel %vm1871, 1, 0
  %v1936 = vsel %vm1872, 1, 0
  %v1937 = vcvt.s32.f32 %v1905
  %v1938 = vcvt.s32.f32 %v1906
  %v1939 = vcvt.s32.f32 %v1907
  %v1940 = vcvt.s32.f32 %v1908
  %v1941 = vcvt.s32.f32 %v1909
  %v1942 = vcvt.s32.f32 %v1910
  %v1943 = vcvt.s32.f32 %v1911
  %v1944 = vcvt.s32.f32 %v1912
  %v1945 = vcvt.s32.f32 %v1913
  %v1946 = vcvt.s32.f32 %v1914
  %v1947 = vcvt.s32.f32 %v1915
  %v1948 = vcvt.s32.f32 %v1916
  %v1949 = vcvt.s32.f32 %v1917
  %v1950 = vcvt.s32.f32 %v1918
  %v1951 = vcvt.s32.f32 %v1919
  %v1952 = vcvt.s32.f32 %v1920
  %v1953 = vcvt.s32.f32 %v1921
  %v1954 = vcvt.s32.f32 %v1922
  %v1955 = vcvt.s32.f32 %v1923
  %v1956 = vcvt.s32.f32 %v1924
  %v1957 = vcvt.s32.f32 %v1925
  %v1958 = vcvt.s32.f32 %v1926
  %v1959 = vcvt.s32.f32 %v1927
  %v1960 = vcvt.s32.f32 %v1928
  %v1961 = vcvt.s32.f32 %v1929
  %v1962 = vcvt.s32.f32 %v1930
  %v1963 = vcvt.s32.f32 %v1931
  %v1964 = vcvt.s32.f32 %v1932
  %v1965 = vcvt.s32.f32 %v1933
  %v1966 = vcvt.s32.f32 %v1934
  %v1967 = vcvt.s32.f32 %v1935
  %v1968 = vcvt.s32.f32 %v1936
  %v1969 = vadd.f32 %v1873, %v1937
  %v1970 = vadd.f32 %v1874, %v1938
  %v1971 = vadd.f32 %v1875, %v1939
  %v1972 = vadd.f32 %v1876, %v1940
  %v1973 = vadd.f32 %v1877, %v1941
  %v1974 = vadd.f32 %v1878, %v1942
  %v1975 = vadd.f32 %v1879, %v1943
  %v1976 = vadd.f32 %v1880, %v1944
  %v1977 = vadd.f32 %v1881, %v1945
  %v1978 = vadd.f32 %v1882, %v1946
  %v1979 = vadd.f32 %v1883, %v1947
  %v1980 = vadd.f32 %v1884, %v1948
  %v1981 = vadd.f32 %v1885, %v1949
  %v1982 = vadd.f32 %v1886, %v1950
  %v1983 = vadd.f32 %v1887, %v1951
  %v1984 = vadd.f32 %v1888, %v1952
  %v1985 = vadd.f32 %v1889, %v1953
  %v1986 = vadd.f32 %v1890, %v1954
  %v1987 = vadd.f32 %v1891, %v1955
  %v1988 = vadd.f32 %v1892, %v1956
  %v1989 = vadd.f32 %v1893, %v1957
  %v1990 = vadd.f32 %v1894, %v1958
  %v1991 = vadd.f32 %v1895, %v1959
  %v1992 = vadd.f32 %v1896, %v1960
  %v1993 = vadd.f32 %v1897, %v1961
  %v1994 = vadd.f32 %v1898, %v1962
  %v1995 = vadd.f32 %v1899, %v1963
  %v1996 = vadd.f32 %v1900, %v1964
  %v1997 = vadd.f32 %v1901, %v1965
  %v1998 = vadd.f32 %v1902, %v1966
  %v1999 = vadd.f32 %v1903, %v1967
  %v2000 = vadd.f32 %v1904, %v1968
  %2001 = vst [vmem:[#allocation2] sm:$0xff] %v1969
  %2002 = vst [vmem:[#allocation2 + $0x8] sm:$0xff] %v1970
  %2003 = vst [vmem:[#allocation2 + $0x10] sm:$0xff] %v1971
  %2004 = vst [vmem:[#allocation2 + $0x18] sm:$0xff] %v1972
  %2005 = vst [vmem:[#allocation2 + $0x20] sm:$0xff] %v1973
  %2006 = vst [vmem:[#allocation2 + $0x28] sm:$0xff] %v1974
  %2007 = vst [vmem:[#allocation2 + $0x30] sm:$0xff] %v1975
  %2008 = vst [vmem:[#allocation2 + $0x38] sm:$0xff] %v1976
  %2009 = vst [vmem:[#allocation2 + $0x40] sm:$0xff] %v1977
  %2010 = vst [vmem:[#allocation2 + $0x48] sm:$0xff] %v1978
  %2011 = vst [vmem:[#allocation2 + $0x50] sm:$0xff] %v1979
  %2012 = vst [vmem:[#allocation2 + $0x58] sm:$0xff] %v1980
  %2013 = vst [vmem:[#allocation2 + $0x60] sm:$0xff] %v1981
  %2014 = vst [vmem:[#allocation2 + $0x68] sm:$0xff] %v1982
  %2015 = vst [vmem:[#allocation2 + $0x70] sm:$0xff] %v1983
  %2016 = vst [vmem:[#allocation2 + $0x78] sm:$0xff] %v1984
  %2017 = vst [vmem:[#allocation2 + $0x80] sm:$0xff] %v1985
  %2018 = vst [vmem:[#allocation2 + $0x88] sm:$0xff] %v1986
  %2019 = vst [vmem:[#allocation2 + $0x90] sm:$0xff] %v1987
  %2020 = vst [vmem:[#allocation2 + $0x98] sm:$0xff] %v1988
  %2021 = vst [vmem:[#allocation2 + $0xa0] sm:$0xff] %v1989
  %2022 = vst [vmem:[#allocation2 + $0xa8] sm:$0xff] %v1990
  %2023 = vst [vmem:[#allocation2 + $0xb0] sm:$0xff] %v1991
  %2024 = vst [vmem:[#allocation2 + $0xb8] sm:$0xff] %v1992
  %2025 = vst [vmem:[#allocation2 + $0xc0] sm:$0xff] %v1993
  %2026 = vst [vmem:[#allocation2 + $0xc8] sm:$0xff] %v1994
  %2027 = vst [vmem:[#allocation2 + $0xd0] sm:$0xff] %v1995
  %2028 = vst [vmem:[#allocation2 + $0xd8] sm:$0xff] %v1996
  %2029 = vst [vmem:[#allocation2 + $0xe0] sm:$0xff] %v1997
  %2030 = vst [vmem:[#allocation2 + $0xe8] sm:$0xff] %v1998
  %2031 = vst [vmem:[#allocation2 + $0xf0] sm:$0xff] %v1999
  %2032 = vst [vmem:[#allocation2 + $0xf8] sm:$0xff] %v2000
  %v2033 = vld [vmem:[%s0] sm:$0xff]
  %v2034 = vld [vmem:[%s0 + $0x8] sm:$0xff]
  %2035 = vset.pattern.permute.xlu0 8
  %2036 = vperm.xlu0 %2035, %v2033
  %v2037 = vpop.permute.xlu0 %2036
  %2038 = vset.pattern.permute.xlu0 8
  %2039 = vperm.xlu0 %2038, %v2034
  %v2040 = vpop.permute.xlu0 %2039
  %vm2041 = vcmp.eq.s32.totalorder %v31, %v2037
  %vm2042 = vcmp.eq.s32.totalorder %v32, %v2037
  %vm2043 = vcmp.eq.s32.totalorder %v33, %v2037
  %vm2044 = vcmp.eq.s32.totalorder %v34, %v2037
  %vm2045 = vcmp.eq.s32.totalorder %v35, %v2037
  %vm2046 = vcmp.eq.s32.totalorder %v36, %v2037
  %vm2047 = vcmp.eq.s32.totalorder %v37, %v2037
  %vm2048 = vcmp.eq.s32.totalorder %v38, %v2037
  %vm2049 = vcmp.eq.s32.totalorder %v39, %v2037
  %vm2050 = vcmp.eq.s32.totalorder %v40, %v2037
  %vm2051 = vcmp.eq.s32.totalorder %v41, %v2037
  %vm2052 = vcmp.eq.s32.totalorder %v42, %v2037
  %vm2053 = vcmp.eq.s32.totalorder %v43, %v2037
  %vm2054 = vcmp.eq.s32.totalorder %v44, %v2037
  %vm2055 = vcmp.eq.s32.totalorder %v45, %v2037
  %vm2056 = vcmp.eq.s32.totalorder %v46, %v2037
  %vm2057 = vcmp.eq.s32.totalorder %v31, %v2040
  %vm2058 = vcmp.eq.s32.totalorder %v32, %v2040
  %vm2059 = vcmp.eq.s32.totalorder %v33, %v2040
  %vm2060 = vcmp.eq.s32.totalorder %v34, %v2040
  %vm2061 = vcmp.eq.s32.totalorder %v35, %v2040
  %vm2062 = vcmp.eq.s32.totalorder %v36, %v2040
  %vm2063 = vcmp.eq.s32.totalorder %v37, %v2040
  %vm2064 = vcmp.eq.s32.totalorder %v38, %v2040
  %vm2065 = vcmp.eq.s32.totalorder %v39, %v2040
  %vm2066 = vcmp.eq.s32.totalorder %v40, %v2040
  %vm2067 = vcmp.eq.s32.totalorder %v41, %v2040
  %vm2068 = vcmp.eq.s32.totalorder %v42, %v2040
  %vm2069 = vcmp.eq.s32.totalorder %v43, %v2040
  %vm2070 = vcmp.eq.s32.totalorder %v44, %v2040
  %vm2071 = vcmp.eq.s32.totalorder %v45, %v2040
  %vm2072 = vcmp.eq.s32.totalorder %v46, %v2040
  %vm2073 = vcmp.gt.s32.totalorder %v47, 8
  %vm2074 = vcmp.gt.s32.totalorder %v48, 8
  %v2075 = vsel %vm2073, 1, 0
  %v2076 = vsel %vm2074, 1, 0
  %2077 = vset.pattern.permute.xlu0 0
  %2078 = vperm.xlu0 %2077, %v2075
  %v2079 = vpop.permute.xlu0 %2078
  %2080 = vset.pattern.permute.xlu0 0
  %2081 = vperm.xlu0 %2080, %v2076
  %v2082 = vpop.permute.xlu0 %2081
  %vm2083 = vcmp.eq.s32.totalorder %v2079, 1
  %vm2084 = vcmp.eq.s32.totalorder %v2082, 1
  %vm2085 = vmand %vm2041, %vm2083
  %vm2086 = vmand %vm2042, %vm2083
  %vm2087 = vmand %vm2043, %vm2083
  %vm2088 = vmand %vm2044, %vm2083
  %vm2089 = vmand %vm2045, %vm2083
  %vm2090 = vmand %vm2046, %vm2083
  %vm2091 = vmand %vm2047, %vm2083
  %vm2092 = vmand %vm2048, %vm2083
  %vm2093 = vmand %vm2049, %vm2083
  %vm2094 = vmand %vm2050, %vm2083
  %vm2095 = vmand %vm2051, %vm2083
  %vm2096 = vmand %vm2052, %vm2083
  %vm2097 = vmand %vm2053, %vm2083
  %vm2098 = vmand %vm2054, %vm2083
  %vm2099 = vmand %vm2055, %vm2083
  %vm2100 = vmand %vm2056, %vm2083
  %vm2101 = vmand %vm2057, %vm2084
  %vm2102 = vmand %vm2058, %vm2084
  %vm2103 = vmand %vm2059, %vm2084
  %vm2104 = vmand %vm2060, %vm2084
  %vm2105 = vmand %vm2061, %vm2084
  %vm2106 = vmand %vm2062, %vm2084
  %vm2107 = vmand %vm2063, %vm2084
  %vm2108 = vmand %vm2064, %vm2084
  %vm2109 = vmand %vm2065, %vm2084
  %vm2110 = vmand %vm2066, %vm2084
  %vm2111 = vmand %vm2067, %vm2084
  %vm2112 = vmand %vm2068, %vm2084
  %vm2113 = vmand %vm2069, %vm2084
  %vm2114 = vmand %vm2070, %vm2084
  %vm2115 = vmand %vm2071, %vm2084
  %vm2116 = vmand %vm2072, %vm2084
  %v2117 = vld [vmem:[#allocation2] sm:$0xff]
  %v2118 = vld [vmem:[#allocation2 + $0x8] sm:$0xff]
  %v2119 = vld [vmem:[#allocation2 + $0x10] sm:$0xff]
  %v2120 = vld [vmem:[#allocation2 + $0x18] sm:$0xff]
  %v2121 = vld [vmem:[#allocation2 + $0x20] sm:$0xff]
  %v2122 = vld [vmem:[#allocation2 + $0x28] sm:$0xff]
  %v2123 = vld [vmem:[#allocation2 + $0x30] sm:$0xff]
  %v2124 = vld [vmem:[#allocation2 + $0x38] sm:$0xff]
  %v2125 = vld [vmem:[#allocation2 + $0x40] sm:$0xff]
  %v2126 = vld [vmem:[#allocation2 + $0x48] sm:$0xff]
  %v2127 = vld [vmem:[#allocation2 + $0x50] sm:$0xff]
  %v2128 = vld [vmem:[#allocation2 + $0x58] sm:$0xff]
  %v2129 = vld [vmem:[#allocation2 + $0x60] sm:$0xff]
  %v2130 = vld [vmem:[#allocation2 + $0x68] sm:$0xff]
  %v2131 = vld [vmem:[#allocation2 + $0x70] sm:$0xff]
  %v2132 = vld [vmem:[#allocation2 + $0x78] sm:$0xff]
  %v2133 = vld [vmem:[#allocation2 + $0x80] sm:$0xff]
  %v2134 = vld [vmem:[#allocation2 + $0x88] sm:$0xff]
  %v2135 = vld [vmem:[#allocation2 + $0x90] sm:$0xff]
  %v2136 = vld [vmem:[#allocation2 + $0x98] sm:$0xff]
  %v2137 = vld [vmem:[#allocation2 + $0xa0] sm:$0xff]
  %v2138 = vld [vmem:[#allocation2 + $0xa8] sm:$0xff]
  %v2139 = vld [vmem:[#allocation2 + $0xb0] sm:$0xff]
  %v2140 = vld [vmem:[#allocation2 + $0xb8] sm:$0xff]
  %v2141 = vld [vmem:[#allocation2 + $0xc0] sm:$0xff]
  %v2142 = vld [vmem:[#allocation2 + $0xc8] sm:$0xff]
  %v2143 = vld [vmem:[#allocation2 + $0xd0] sm:$0xff]
  %v2144 = vld [vmem:[#allocation2 + $0xd8] sm:$0xff]
  %v2145 = vld [vmem:[#allocation2 + $0xe0] sm:$0xff]
  %v2146 = vld [vmem:[#allocation2 + $0xe8] sm:$0xff]
  %v2147 = vld [vmem:[#allocation2 + $0xf0] sm:$0xff]
  %v2148 = vld [vmem:[#allocation2 + $0xf8] sm:$0xff]
  %v2149 = vsel %vm2085, 1, 0
  %v2150 = vsel %vm2086, 1, 0
  %v2151 = vsel %vm2087, 1, 0
  %v2152 = vsel %vm2088, 1, 0
  %v2153 = vsel %vm2089, 1, 0
  %v2154 = vsel %vm2090, 1, 0
  %v2155 = vsel %vm2091, 1, 0
  %v2156 = vsel %vm2092, 1, 0
  %v2157 = vsel %vm2093, 1, 0
  %v2158 = vsel %vm2094, 1, 0
  %v2159 = vsel %vm2095, 1, 0
  %v2160 = vsel %vm2096, 1, 0
  %v2161 = vsel %vm2097, 1, 0
  %v2162 = vsel %vm2098, 1, 0
  %v2163 = vsel %vm2099, 1, 0
  %v2164 = vsel %vm2100, 1, 0
  %v2165 = vsel %vm2101, 1, 0
  %v2166 = vsel %vm2102, 1, 0
  %v2167 = vsel %vm2103, 1, 0
  %v2168 = vsel %vm2104, 1, 0
  %v2169 = vsel %vm2105, 1, 0
  %v2170 = vsel %vm2106, 1, 0
  %v2171 = vsel %vm2107, 1, 0
  %v2172 = vsel %vm2108, 1, 0
  %v2173 = vsel %vm2109, 1, 0
  %v2174 = vsel %vm2110, 1, 0
  %v2175 = vsel %vm2111, 1, 0
  %v2176 = vsel %vm2112, 1, 0
  %v2177 = vsel %vm2113, 1, 0
  %v2178 = vsel %vm2114, 1, 0
  %v2179 = vsel %vm2115, 1, 0
  %v2180 = vsel %vm2116, 1, 0
  %v2181 = vcvt.s32.f32 %v2149
  %v2182 = vcvt.s32.f32 %v2150
  %v2183 = vcvt.s32.f32 %v2151
  %v2184 = vcvt.s32.f32 %v2152
  %v2185 = vcvt.s32.f32 %v2153
  %v2186 = vcvt.s32.f32 %v2154
  %v2187 = vcvt.s32.f32 %v2155
  %v2188 = vcvt.s32.f32 %v2156
  %v2189 = vcvt.s32.f32 %v2157
  %v2190 = vcvt.s32.f32 %v2158
  %v2191 = vcvt.s32.f32 %v2159
  %v2192 = vcvt.s32.f32 %v2160
  %v2193 = vcvt.s32.f32 %v2161
  %v2194 = vcvt.s32.f32 %v2162
  %v2195 = vcvt.s32.f32 %v2163
  %v2196 = vcvt.s32.f32 %v2164
  %v2197 = vcvt.s32.f32 %v2165
  %v2198 = vcvt.s32.f32 %v2166
  %v2199 = vcvt.s32.f32 %v2167
  %v2200 = vcvt.s32.f32 %v2168
  %v2201 = vcvt.s32.f32 %v2169
  %v2202 = vcvt.s32.f32 %v2170
  %v2203 = vcvt.s32.f32 %v2171
  %v2204 = vcvt.s32.f32 %v2172
  %v2205 = vcvt.s32.f32 %v2173
  %v2206 = vcvt.s32.f32 %v2174
  %v2207 = vcvt.s32.f32 %v2175
  %v2208 = vcvt.s32.f32 %v2176
  %v2209 = vcvt.s32.f32 %v2177
  %v2210 = vcvt.s32.f32 %v2178
  %v2211 = vcvt.s32.f32 %v2179
  %v2212 = vcvt.s32.f32 %v2180
  %v2213 = vadd.f32 %v2117, %v2181
  %v2214 = vadd.f32 %v2118, %v2182
  %v2215 = vadd.f32 %v2119, %v2183
  %v2216 = vadd.f32 %v2120, %v2184
  %v2217 = vadd.f32 %v2121, %v2185
  %v2218 = vadd.f32 %v2122, %v2186
  %v2219 = vadd.f32 %v2123, %v2187
  %v2220 = vadd.f32 %v2124, %v2188
  %v2221 = vadd.f32 %v2125, %v2189
  %v2222 = vadd.f32 %v2126, %v2190
  %v2223 = vadd.f32 %v2127, %v2191
  %v2224 = vadd.f32 %v2128, %v2192
  %v2225 = vadd.f32 %v2129, %v2193
  %v2226 = vadd.f32 %v2130, %v2194
  %v2227 = vadd.f32 %v2131, %v2195
  %v2228 = vadd.f32 %v2132, %v2196
  %v2229 = vadd.f32 %v2133, %v2197
  %v2230 = vadd.f32 %v2134, %v2198
  %v2231 = vadd.f32 %v2135, %v2199
  %v2232 = vadd.f32 %v2136, %v2200
  %v2233 = vadd.f32 %v2137, %v2201
  %v2234 = vadd.f32 %v2138, %v2202
  %v2235 = vadd.f32 %v2139, %v2203
  %v2236 = vadd.f32 %v2140, %v2204
  %v2237 = vadd.f32 %v2141, %v2205
  %v2238 = vadd.f32 %v2142, %v2206
  %v2239 = vadd.f32 %v2143, %v2207
  %v2240 = vadd.f32 %v2144, %v2208
  %v2241 = vadd.f32 %v2145, %v2209
  %v2242 = vadd.f32 %v2146, %v2210
  %v2243 = vadd.f32 %v2147, %v2211
  %v2244 = vadd.f32 %v2148, %v2212
  %2245 = vst [vmem:[#allocation2] sm:$0xff] %v2213
  %2246 = vst [vmem:[#allocation2 + $0x8] sm:$0xff] %v2214
  %2247 = vst [vmem:[#allocation2 + $0x10] sm:$0xff] %v2215
  %2248 = vst [vmem:[#allocation2 + $0x18] sm:$0xff] %v2216
  %2249 = vst [vmem:[#allocation2 + $0x20] sm:$0xff] %v2217
  %2250 = vst [vmem:[#allocation2 + $0x28] sm:$0xff] %v2218
  %2251 = vst [vmem:[#allocation2 + $0x30] sm:$0xff] %v2219
  %2252 = vst [vmem:[#allocation2 + $0x38] sm:$0xff] %v2220
  %2253 = vst [vmem:[#allocation2 + $0x40] sm:$0xff] %v2221
  %2254 = vst [vmem:[#allocation2 + $0x48] sm:$0xff] %v2222
  %2255 = vst [vmem:[#allocation2 + $0x50] sm:$0xff] %v2223
  %2256 = vst [vmem:[#allocation2 + $0x58] sm:$0xff] %v2224
  %2257 = vst [vmem:[#allocation2 + $0x60] sm:$0xff] %v2225
  %2258 = vst [vmem:[#allocation2 + $0x68] sm:$0xff] %v2226
  %2259 = vst [vmem:[#allocation2 + $0x70] sm:$0xff] %v2227
  %2260 = vst [vmem:[#allocation2 + $0x78] sm:$0xff] %v2228
  %2261 = vst [vmem:[#allocation2 + $0x80] sm:$0xff] %v2229
  %2262 = vst [vmem:[#allocation2 + $0x88] sm:$0xff] %v2230
  %2263 = vst [vmem:[#allocation2 + $0x90] sm:$0xff] %v2231
  %2264 = vst [vmem:[#allocation2 + $0x98] sm:$0xff] %v2232
  %2265 = vst [vmem:[#allocation2 + $0xa0] sm:$0xff] %v2233
  %2266 = vst [vmem:[#allocation2 + $0xa8] sm:$0xff] %v2234
  %2267 = vst [vmem:[#allocation2 + $0xb0] sm:$0xff] %v2235
  %2268 = vst [vmem:[#allocation2 + $0xb8] sm:$0xff] %v2236
  %2269 = vst [vmem:[#allocation2 + $0xc0] sm:$0xff] %v2237
  %2270 = vst [vmem:[#allocation2 + $0xc8] sm:$0xff] %v2238
  %2271 = vst [vmem:[#allocation2 + $0xd0] sm:$0xff] %v2239
  %2272 = vst [vmem:[#allocation2 + $0xd8] sm:$0xff] %v2240
  %2273 = vst [vmem:[#allocation2 + $0xe0] sm:$0xff] %v2241
  %2274 = vst [vmem:[#allocation2 + $0xe8] sm:$0xff] %v2242
  %2275 = vst [vmem:[#allocation2 + $0xf0] sm:$0xff] %v2243
  %2276 = vst [vmem:[#allocation2 + $0xf8] sm:$0xff] %v2244
  %v2277 = vld [vmem:[%s0] sm:$0xff]
  %v2278 = vld [vmem:[%s0 + $0x8] sm:$0xff]
  %2279 = vset.pattern.permute.xlu0 9
  %2280 = vperm.xlu0 %2279, %v2277
  %v2281 = vpop.permute.xlu0 %2280
  %2282 = vset.pattern.permute.xlu0 9
  %2283 = vperm.xlu0 %2282, %v2278
  %v2284 = vpop.permute.xlu0 %2283
  %vm2285 = vcmp.eq.s32.totalorder %v31, %v2281
  %vm2286 = vcmp.eq.s32.totalorder %v32, %v2281
  %vm2287 = vcmp.eq.s32.totalorder %v33, %v2281
  %vm2288 = vcmp.eq.s32.totalorder %v34, %v2281
  %vm2289 = vcmp.eq.s32.totalorder %v35, %v2281
  %vm2290 = vcmp.eq.s32.totalorder %v36, %v2281
  %vm2291 = vcmp.eq.s32.totalorder %v37, %v2281
  %vm2292 = vcmp.eq.s32.totalorder %v38, %v2281
  %vm2293 = vcmp.eq.s32.totalorder %v39, %v2281
  %vm2294 = vcmp.eq.s32.totalorder %v40, %v2281
  %vm2295 = vcmp.eq.s32.totalorder %v41, %v2281
  %vm2296 = vcmp.eq.s32.totalorder %v42, %v2281
  %vm2297 = vcmp.eq.s32.totalorder %v43, %v2281
  %vm2298 = vcmp.eq.s32.totalorder %v44, %v2281
  %vm2299 = vcmp.eq.s32.totalorder %v45, %v2281
  %vm2300 = vcmp.eq.s32.totalorder %v46, %v2281
  %vm2301 = vcmp.eq.s32.totalorder %v31, %v2284
  %vm2302 = vcmp.eq.s32.totalorder %v32, %v2284
  %vm2303 = vcmp.eq.s32.totalorder %v33, %v2284
  %vm2304 = vcmp.eq.s32.totalorder %v34, %v2284
  %vm2305 = vcmp.eq.s32.totalorder %v35, %v2284
  %vm2306 = vcmp.eq.s32.totalorder %v36, %v2284
  %vm2307 = vcmp.eq.s32.totalorder %v37, %v2284
  %vm2308 = vcmp.eq.s32.totalorder %v38, %v2284
  %vm2309 = vcmp.eq.s32.totalorder %v39, %v2284
  %vm2310 = vcmp.eq.s32.totalorder %v40, %v2284
  %vm2311 = vcmp.eq.s32.totalorder %v41, %v2284
  %vm2312 = vcmp.eq.s32.totalorder %v42, %v2284
  %vm2313 = vcmp.eq.s32.totalorder %v43, %v2284
  %vm2314 = vcmp.eq.s32.totalorder %v44, %v2284
  %vm2315 = vcmp.eq.s32.totalorder %v45, %v2284
  %vm2316 = vcmp.eq.s32.totalorder %v46, %v2284
  %vm2317 = vcmp.gt.s32.totalorder %v47, 9
  %vm2318 = vcmp.gt.s32.totalorder %v48, 9
  %v2319 = vsel %vm2317, 1, 0
  %v2320 = vsel %vm2318, 1, 0
  %2321 = vset.pattern.permute.xlu0 0
  %2322 = vperm.xlu0 %2321, %v2319
  %v2323 = vpop.permute.xlu0 %2322
  %2324 = vset.pattern.permute.xlu0 0
  %2325 = vperm.xlu0 %2324, %v2320
  %v2326 = vpop.permute.xlu0 %2325
  %vm2327 = vcmp.eq.s32.totalorder %v2323, 1
  %vm2328 = vcmp.eq.s32.totalorder %v2326, 1
  %vm2329 = vmand %vm2285, %vm2327
  %vm2330 = vmand %vm2286, %vm2327
  %vm2331 = vmand %vm2287, %vm2327
  %vm2332 = vmand %vm2288, %vm2327
  %vm2333 = vmand %vm2289, %vm2327
  %vm2334 = vmand %vm2290, %vm2327
  %vm2335 = vmand %vm2291, %vm2327
  %vm2336 = vmand %vm2292, %vm2327
  %vm2337 = vmand %vm2293, %vm2327
  %vm2338 = vmand %vm2294, %vm2327
  %vm2339 = vmand %vm2295, %vm2327
  %vm2340 = vmand %vm2296, %vm2327
  %vm2341 = vmand %vm2297, %vm2327
  %vm2342 = vmand %vm2298, %vm2327
  %vm2343 = vmand %vm2299, %vm2327
  %vm2344 = vmand %vm2300, %vm2327
  %vm2345 = vmand %vm2301, %vm2328
  %vm2346 = vmand %vm2302, %vm2328
  %vm2347 = vmand %vm2303, %vm2328
  %vm2348 = vmand %vm2304, %vm2328
  %vm2349 = vmand %vm2305, %vm2328
  %vm2350 = vmand %vm2306, %vm2328
  %vm2351 = vmand %vm2307, %vm2328
  %vm2352 = vmand %vm2308, %vm2328
  %vm2353 = vmand %vm2309, %vm2328
  %vm2354 = vmand %vm2310, %vm2328
  %vm2355 = vmand %vm2311, %vm2328
  %vm2356 = vmand %vm2312, %vm2328
  %vm2357 = vmand %vm2313, %vm2328
  %vm2358 = vmand %vm2314, %vm2328
  %vm2359 = vmand %vm2315, %vm2328
  %vm2360 = vmand %vm2316, %vm2328
  %v2361 = vld [vmem:[#allocation2] sm:$0xff]
  %v2362 = vld [vmem:[#allocation2 + $0x8] sm:$0xff]
  %v2363 = vld [vmem:[#allocation2 + $0x10] sm:$0xff]
  %v2364 = vld [vmem:[#allocation2 + $0x18] sm:$0xff]
  %v2365 = vld [vmem:[#allocation2 + $0x20] sm:$0xff]
  %v2366 = vld [vmem:[#allocation2 + $0x28] sm:$0xff]
  %v2367 = vld [vmem:[#allocation2 + $0x30] sm:$0xff]
  %v2368 = vld [vmem:[#allocation2 + $0x38] sm:$0xff]
  %v2369 = vld [vmem:[#allocation2 + $0x40] sm:$0xff]
  %v2370 = vld [vmem:[#allocation2 + $0x48] sm:$0xff]
  %v2371 = vld [vmem:[#allocation2 + $0x50] sm:$0xff]
  %v2372 = vld [vmem:[#allocation2 + $0x58] sm:$0xff]
  %v2373 = vld [vmem:[#allocation2 + $0x60] sm:$0xff]
  %v2374 = vld [vmem:[#allocation2 + $0x68] sm:$0xff]
  %v2375 = vld [vmem:[#allocation2 + $0x70] sm:$0xff]
  %v2376 = vld [vmem:[#allocation2 + $0x78] sm:$0xff]
  %v2377 = vld [vmem:[#allocation2 + $0x80] sm:$0xff]
  %v2378 = vld [vmem:[#allocation2 + $0x88] sm:$0xff]
  %v2379 = vld [vmem:[#allocation2 + $0x90] sm:$0xff]
  %v2380 = vld [vmem:[#allocation2 + $0x98] sm:$0xff]
  %v2381 = vld [vmem:[#allocation2 + $0xa0] sm:$0xff]
  %v2382 = vld [vmem:[#allocation2 + $0xa8] sm:$0xff]
  %v2383 = vld [vmem:[#allocation2 + $0xb0] sm:$0xff]
  %v2384 = vld [vmem:[#allocation2 + $0xb8] sm:$0xff]
  %v2385 = vld [vmem:[#allocation2 + $0xc0] sm:$0xff]
  %v2386 = vld [vmem:[#allocation2 + $0xc8] sm:$0xff]
  %v2387 = vld [vmem:[#allocation2 + $0xd0] sm:$0xff]
  %v2388 = vld [vmem:[#allocation2 + $0xd8] sm:$0xff]
  %v2389 = vld [vmem:[#allocation2 + $0xe0] sm:$0xff]
  %v2390 = vld [vmem:[#allocation2 + $0xe8] sm:$0xff]
  %v2391 = vld [vmem:[#allocation2 + $0xf0] sm:$0xff]
  %v2392 = vld [vmem:[#allocation2 + $0xf8] sm:$0xff]
  %v2393 = vsel %vm2329, 1, 0
  %v2394 = vsel %vm2330, 1, 0
  %v2395 = vsel %vm2331, 1, 0
  %v2396 = vsel %vm2332, 1, 0
  %v2397 = vsel %vm2333, 1, 0
  %v2398 = vsel %vm2334, 1, 0
  %v2399 = vsel %vm2335, 1, 0
  %v2400 = vsel %vm2336, 1, 0
  %v2401 = vsel %vm2337, 1, 0
  %v2402 = vsel %vm2338, 1, 0
  %v2403 = vsel %vm2339, 1, 0
  %v2404 = vsel %vm2340, 1, 0
  %v2405 = vsel %vm2341, 1, 0
  %v2406 = vsel %vm2342, 1, 0
  %v2407 = vsel %vm2343, 1, 0
  %v2408 = vsel %vm2344, 1, 0
  %v2409 = vsel %vm2345, 1, 0
  %v2410 = vsel %vm2346, 1, 0
  %v2411 = vsel %vm2347, 1, 0
  %v2412 = vsel %vm2348, 1, 0
  %v2413 = vsel %vm2349, 1, 0
  %v2414 = vsel %vm2350, 1, 0
  %v2415 = vsel %vm2351, 1, 0
  %v2416 = vsel %vm2352, 1, 0
  %v2417 = vsel %vm2353, 1, 0
  %v2418 = vsel %vm2354, 1, 0
  %v2419 = vsel %vm2355, 1, 0
  %v2420 = vsel %vm2356, 1, 0
  %v2421 = vsel %vm2357, 1, 0
  %v2422 = vsel %vm2358, 1, 0
  %v2423 = vsel %vm2359, 1, 0
  %v2424 = vsel %vm2360, 1, 0
  %v2425 = vcvt.s32.f32 %v2393
  %v2426 = vcvt.s32.f32 %v2394
  %v2427 = vcvt.s32.f32 %v2395
  %v2428 = vcvt.s32.f32 %v2396
  %v2429 = vcvt.s32.f32 %v2397
  %v2430 = vcvt.s32.f32 %v2398
  %v2431 = vcvt.s32.f32 %v2399
  %v2432 = vcvt.s32.f32 %v2400
  %v2433 = vcvt.s32.f32 %v2401
  %v2434 = vcvt.s32.f32 %v2402
  %v2435 = vcvt.s32.f32 %v2403
  %v2436 = vcvt.s32.f32 %v2404
  %v2437 = vcvt.s32.f32 %v2405
  %v2438 = vcvt.s32.f32 %v2406
  %v2439 = vcvt.s32.f32 %v2407
  %v2440 = vcvt.s32.f32 %v2408
  %v2441 = vcvt.s32.f32 %v2409
  %v2442 = vcvt.s32.f32 %v2410
  %v2443 = vcvt.s32.f32 %v2411
  %v2444 = vcvt.s32.f32 %v2412
  %v2445 = vcvt.s32.f32 %v2413
  %v2446 = vcvt.s32.f32 %v2414
  %v2447 = vcvt.s32.f32 %v2415
  %v2448 = vcvt.s32.f32 %v2416
  %v2449 = vcvt.s32.f32 %v2417
  %v2450 = vcvt.s32.f32 %v2418
  %v2451 = vcvt.s32.f32 %v2419
  %v2452 = vcvt.s32.f32 %v2420
  %v2453 = vcvt.s32.f32 %v2421
  %v2454 = vcvt.s32.f32 %v2422
  %v2455 = vcvt.s32.f32 %v2423
  %v2456 = vcvt.s32.f32 %v2424
  %v2457 = vadd.f32 %v2361, %v2425
  %v2458 = vadd.f32 %v2362, %v2426
  %v2459 = vadd.f32 %v2363, %v2427
  %v2460 = vadd.f32 %v2364, %v2428
  %v2461 = vadd.f32 %v2365, %v2429
  %v2462 = vadd.f32 %v2366, %v2430
  %v2463 = vadd.f32 %v2367, %v2431
  %v2464 = vadd.f32 %v2368, %v2432
  %v2465 = vadd.f32 %v2369, %v2433
  %v2466 = vadd.f32 %v2370, %v2434
  %v2467 = vadd.f32 %v2371, %v2435
  %v2468 = vadd.f32 %v2372, %v2436
  %v2469 = vadd.f32 %v2373, %v2437
  %v2470 = vadd.f32 %v2374, %v2438
  %v2471 = vadd.f32 %v2375, %v2439
  %v2472 = vadd.f32 %v2376, %v2440
  %v2473 = vadd.f32 %v2377, %v2441
  %v2474 = vadd.f32 %v2378, %v2442
  %v2475 = vadd.f32 %v2379, %v2443
  %v2476 = vadd.f32 %v2380, %v2444
  %v2477 = vadd.f32 %v2381, %v2445
  %v2478 = vadd.f32 %v2382, %v2446
  %v2479 = vadd.f32 %v2383, %v2447
  %v2480 = vadd.f32 %v2384, %v2448
  %v2481 = vadd.f32 %v2385, %v2449
  %v2482 = vadd.f32 %v2386, %v2450
  %v2483 = vadd.f32 %v2387, %v2451
  %v2484 = vadd.f32 %v2388, %v2452
  %v2485 = vadd.f32 %v2389, %v2453
  %v2486 = vadd.f32 %v2390, %v2454
  %v2487 = vadd.f32 %v2391, %v2455
  %v2488 = vadd.f32 %v2392, %v2456
  %2489 = vst [vmem:[#allocation2] sm:$0xff] %v2457
  %2490 = vst [vmem:[#allocation2 + $0x8] sm:$0xff] %v2458
  %2491 = vst [vmem:[#allocation2 + $0x10] sm:$0xff] %v2459
  %2492 = vst [vmem:[#allocation2 + $0x18] sm:$0xff] %v2460
  %2493 = vst [vmem:[#allocation2 + $0x20] sm:$0xff] %v2461
  %2494 = vst [vmem:[#allocation2 + $0x28] sm:$0xff] %v2462
  %2495 = vst [vmem:[#allocation2 + $0x30] sm:$0xff] %v2463
  %2496 = vst [vmem:[#allocation2 + $0x38] sm:$0xff] %v2464
  %2497 = vst [vmem:[#allocation2 + $0x40] sm:$0xff] %v2465
  %2498 = vst [vmem:[#allocation2 + $0x48] sm:$0xff] %v2466
  %2499 = vst [vmem:[#allocation2 + $0x50] sm:$0xff] %v2467
  %2500 = vst [vmem:[#allocation2 + $0x58] sm:$0xff] %v2468
  %2501 = vst [vmem:[#allocation2 + $0x60] sm:$0xff] %v2469
  %2502 = vst [vmem:[#allocation2 + $0x68] sm:$0xff] %v2470
  %2503 = vst [vmem:[#allocation2 + $0x70] sm:$0xff] %v2471
  %2504 = vst [vmem:[#allocation2 + $0x78] sm:$0xff] %v2472
  %2505 = vst [vmem:[#allocation2 + $0x80] sm:$0xff] %v2473
  %2506 = vst [vmem:[#allocation2 + $0x88] sm:$0xff] %v2474
  %2507 = vst [vmem:[#allocation2 + $0x90] sm:$0xff] %v2475
  %2508 = vst [vmem:[#allocation2 + $0x98] sm:$0xff] %v2476
  %2509 = vst [vmem:[#allocation2 + $0xa0] sm:$0xff] %v2477
  %2510 = vst [vmem:[#allocation2 + $0xa8] sm:$0xff] %v2478
  %2511 = vst [vmem:[#allocation2 + $0xb0] sm:$0xff] %v2479
  %2512 = vst [vmem:[#allocation2 + $0xb8] sm:$0xff] %v2480
  %2513 = vst [vmem:[#allocation2 + $0xc0] sm:$0xff] %v2481
  %2514 = vst [vmem:[#allocation2 + $0xc8] sm:$0xff] %v2482
  %2515 = vst [vmem:[#allocation2 + $0xd0] sm:$0xff] %v2483
  %2516 = vst [vmem:[#allocation2 + $0xd8] sm:$0xff] %v2484
  %2517 = vst [vmem:[#allocation2 + $0xe0] sm:$0xff] %v2485
  %2518 = vst [vmem:[#allocation2 + $0xe8] sm:$0xff] %v2486
  %2519 = vst [vmem:[#allocation2 + $0xf0] sm:$0xff] %v2487
  %2520 = vst [vmem:[#allocation2 + $0xf8] sm:$0xff] %v2488
  %v2521 = vld [vmem:[%s0] sm:$0xff]
  %v2522 = vld [vmem:[%s0 + $0x8] sm:$0xff]
  %2523 = vset.pattern.permute.xlu0 10
  %2524 = vperm.xlu0 %2523, %v2521
  %v2525 = vpop.permute.xlu0 %2524
  %2526 = vset.pattern.permute.xlu0 10
  %2527 = vperm.xlu0 %2526, %v2522
  %v2528 = vpop.permute.xlu0 %2527
  %vm2529 = vcmp.eq.s32.totalorder %v31, %v2525
  %vm2530 = vcmp.eq.s32.totalorder %v32, %v2525
  %vm2531 = vcmp.eq.s32.totalorder %v33, %v2525
  %vm2532 = vcmp.eq.s32.totalorder %v34, %v2525
  %vm2533 = vcmp.eq.s32.totalorder %v35, %v2525
  %vm2534 = vcmp.eq.s32.totalorder %v36, %v2525
  %vm2535 = vcmp.eq.s32.totalorder %v37, %v2525
  %vm2536 = vcmp.eq.s32.totalorder %v38, %v2525
  %vm2537 = vcmp.eq.s32.totalorder %v39, %v2525
  %vm2538 = vcmp.eq.s32.totalorder %v40, %v2525
  %vm2539 = vcmp.eq.s32.totalorder %v41, %v2525
  %vm2540 = vcmp.eq.s32.totalorder %v42, %v2525
  %vm2541 = vcmp.eq.s32.totalorder %v43, %v2525
  %vm2542 = vcmp.eq.s32.totalorder %v44, %v2525
  %vm2543 = vcmp.eq.s32.totalorder %v45, %v2525
  %vm2544 = vcmp.eq.s32.totalorder %v46, %v2525
  %vm2545 = vcmp.eq.s32.totalorder %v31, %v2528
  %vm2546 = vcmp.eq.s32.totalorder %v32, %v2528
  %vm2547 = vcmp.eq.s32.totalorder %v33, %v2528
  %vm2548 = vcmp.eq.s32.totalorder %v34, %v2528
  %vm2549 = vcmp.eq.s32.totalorder %v35, %v2528
  %vm2550 = vcmp.eq.s32.totalorder %v36, %v2528
  %vm2551 = vcmp.eq.s32.totalorder %v37, %v2528
  %vm2552 = vcmp.eq.s32.totalorder %v38, %v2528
  %vm2553 = vcmp.eq.s32.totalorder %v39, %v2528
  %vm2554 = vcmp.eq.s32.totalorder %v40, %v2528
  %vm2555 = vcmp.eq.s32.totalorder %v41, %v2528
  %vm2556 = vcmp.eq.s32.totalorder %v42, %v2528
  %vm2557 = vcmp.eq.s32.totalorder %v43, %v2528
  %vm2558 = vcmp.eq.s32.totalorder %v44, %v2528
  %vm2559 = vcmp.eq.s32.totalorder %v45, %v2528
  %vm2560 = vcmp.eq.s32.totalorder %v46, %v2528
  %vm2561 = vcmp.gt.s32.totalorder %v47, 10
  %vm2562 = vcmp.gt.s32.totalorder %v48, 10
  %v2563 = vsel %vm2561, 1, 0
  %v2564 = vsel %vm2562, 1, 0
  %2565 = vset.pattern.permute.xlu0 0
  %2566 = vperm.xlu0 %2565, %v2563
  %v2567 = vpop.permute.xlu0 %2566
  %2568 = vset.pattern.permute.xlu0 0
  %2569 = vperm.xlu0 %2568, %v2564
  %v2570 = vpop.permute.xlu0 %2569
  %vm2571 = vcmp.eq.s32.totalorder %v2567, 1
  %vm2572 = vcmp.eq.s32.totalorder %v2570, 1
  %vm2573 = vmand %vm2529, %vm2571
  %vm2574 = vmand %vm2530, %vm2571
  %vm2575 = vmand %vm2531, %vm2571
  %vm2576 = vmand %vm2532, %vm2571
  %vm2577 = vmand %vm2533, %vm2571
  %vm2578 = vmand %vm2534, %vm2571
  %vm2579 = vmand %vm2535, %vm2571
  %vm2580 = vmand %vm2536, %vm2571
  %vm2581 = vmand %vm2537, %vm2571
  %vm2582 = vmand %vm2538, %vm2571
  %vm2583 = vmand %vm2539, %vm2571
  %vm2584 = vmand %vm2540, %vm2571
  %vm2585 = vmand %vm2541, %vm2571
  %vm2586 = vmand %vm2542, %vm2571
  %vm2587 = vmand %vm2543, %vm2571
  %vm2588 = vmand %vm2544, %vm2571
  %vm2589 = vmand %vm2545, %vm2572
  %vm2590 = vmand %vm2546, %vm2572
  %vm2591 = vmand %vm2547, %vm2572
  %vm2592 = vmand %vm2548, %vm2572
  %vm2593 = vmand %vm2549, %vm2572
  %vm2594 = vmand %vm2550, %vm2572
  %vm2595 = vmand %vm2551, %vm2572
  %vm2596 = vmand %vm2552, %vm2572
  %vm2597 = vmand %vm2553, %vm2572
  %vm2598 = vmand %vm2554, %vm2572
  %vm2599 = vmand %vm2555, %vm2572
  %vm2600 = vmand %vm2556, %vm2572
  %vm2601 = vmand %vm2557, %vm2572
  %vm2602 = vmand %vm2558, %vm2572
  %vm2603 = vmand %vm2559, %vm2572
  %vm2604 = vmand %vm2560, %vm2572
  %v2605 = vld [vmem:[#allocation2] sm:$0xff]
  %v2606 = vld [vmem:[#allocation2 + $0x8] sm:$0xff]
  %v2607 = vld [vmem:[#allocation2 + $0x10] sm:$0xff]
  %v2608 = vld [vmem:[#allocation2 + $0x18] sm:$0xff]
  %v2609 = vld [vmem:[#allocation2 + $0x20] sm:$0xff]
  %v2610 = vld [vmem:[#allocation2 + $0x28] sm:$0xff]
  %v2611 = vld [vmem:[#allocation2 + $0x30] sm:$0xff]
  %v2612 = vld [vmem:[#allocation2 + $0x38] sm:$0xff]
  %v2613 = vld [vmem:[#allocation2 + $0x40] sm:$0xff]
  %v2614 = vld [vmem:[#allocation2 + $0x48] sm:$0xff]
  %v2615 = vld [vmem:[#allocation2 + $0x50] sm:$0xff]
  %v2616 = vld [vmem:[#allocation2 + $0x58] sm:$0xff]
  %v2617 = vld [vmem:[#allocation2 + $0x60] sm:$0xff]
  %v2618 = vld [vmem:[#allocation2 + $0x68] sm:$0xff]
  %v2619 = vld [vmem:[#allocation2 + $0x70] sm:$0xff]
  %v2620 = vld [vmem:[#allocation2 + $0x78] sm:$0xff]
  %v2621 = vld [vmem:[#allocation2 + $0x80] sm:$0xff]
  %v2622 = vld [vmem:[#allocation2 + $0x88] sm:$0xff]
  %v2623 = vld [vmem:[#allocation2 + $0x90] sm:$0xff]
  %v2624 = vld [vmem:[#allocation2 + $0x98] sm:$0xff]
  %v2625 = vld [vmem:[#allocation2 + $0xa0] sm:$0xff]
  %v2626 = vld [vmem:[#allocation2 + $0xa8] sm:$0xff]
  %v2627 = vld [vmem:[#allocation2 + $0xb0] sm:$0xff]
  %v2628 = vld [vmem:[#allocation2 + $0xb8] sm:$0xff]
  %v2629 = vld [vmem:[#allocation2 + $0xc0] sm:$0xff]
  %v2630 = vld [vmem:[#allocation2 + $0xc8] sm:$0xff]
  %v2631 = vld [vmem:[#allocation2 + $0xd0] sm:$0xff]
  %v2632 = vld [vmem:[#allocation2 + $0xd8] sm:$0xff]
  %v2633 = vld [vmem:[#allocation2 + $0xe0] sm:$0xff]
  %v2634 = vld [vmem:[#allocation2 + $0xe8] sm:$0xff]
  %v2635 = vld [vmem:[#allocation2 + $0xf0] sm:$0xff]
  %v2636 = vld [vmem:[#allocation2 + $0xf8] sm:$0xff]
  %v2637 = vsel %vm2573, 1, 0
  %v2638 = vsel %vm2574, 1, 0
  %v2639 = vsel %vm2575, 1, 0
  %v2640 = vsel %vm2576, 1, 0
  %v2641 = vsel %vm2577, 1, 0
  %v2642 = vsel %vm2578, 1, 0
  %v2643 = vsel %vm2579, 1, 0
  %v2644 = vsel %vm2580, 1, 0
  %v2645 = vsel %vm2581, 1, 0
  %v2646 = vsel %vm2582, 1, 0
  %v2647 = vsel %vm2583, 1, 0
  %v2648 = vsel %vm2584, 1, 0
  %v2649 = vsel %vm2585, 1, 0
  %v2650 = vsel %vm2586, 1, 0
  %v2651 = vsel %vm2587, 1, 0
  %v2652 = vsel %vm2588, 1, 0
  %v2653 = vsel %vm2589, 1, 0
  %v2654 = vsel %vm2590, 1, 0
  %v2655 = vsel %vm2591, 1, 0
  %v2656 = vsel %vm2592, 1, 0
  %v2657 = vsel %vm2593, 1, 0
  %v2658 = vsel %vm2594, 1, 0
  %v2659 = vsel %vm2595, 1, 0
  %v2660 = vsel %vm2596, 1, 0
  %v2661 = vsel %vm2597, 1, 0
  %v2662 = vsel %vm2598, 1, 0
  %v2663 = vsel %vm2599, 1, 0
  %v2664 = vsel %vm2600, 1, 0
  %v2665 = vsel %vm2601, 1, 0
  %v2666 = vsel %vm2602, 1, 0
  %v2667 = vsel %vm2603, 1, 0
  %v2668 = vsel %vm2604, 1, 0
  %v2669 = vcvt.s32.f32 %v2637
  %v2670 = vcvt.s32.f32 %v2638
  %v2671 = vcvt.s32.f32 %v2639
  %v2672 = vcvt.s32.f32 %v2640
  %v2673 = vcvt.s32.f32 %v2641
  %v2674 = vcvt.s32.f32 %v2642
  %v2675 = vcvt.s32.f32 %v2643
  %v2676 = vcvt.s32.f32 %v2644
  %v2677 = vcvt.s32.f32 %v2645
  %v2678 = vcvt.s32.f32 %v2646
  %v2679 = vcvt.s32.f32 %v2647
  %v2680 = vcvt.s32.f32 %v2648
  %v2681 = vcvt.s32.f32 %v2649
  %v2682 = vcvt.s32.f32 %v2650
  %v2683 = vcvt.s32.f32 %v2651
  %v2684 = vcvt.s32.f32 %v2652
  %v2685 = vcvt.s32.f32 %v2653
  %v2686 = vcvt.s32.f32 %v2654
  %v2687 = vcvt.s32.f32 %v2655
  %v2688 = vcvt.s32.f32 %v2656
  %v2689 = vcvt.s32.f32 %v2657
  %v2690 = vcvt.s32.f32 %v2658
  %v2691 = vcvt.s32.f32 %v2659
  %v2692 = vcvt.s32.f32 %v2660
  %v2693 = vcvt.s32.f32 %v2661
  %v2694 = vcvt.s32.f32 %v2662
  %v2695 = vcvt.s32.f32 %v2663
  %v2696 = vcvt.s32.f32 %v2664
  %v2697 = vcvt.s32.f32 %v2665
  %v2698 = vcvt.s32.f32 %v2666
  %v2699 = vcvt.s32.f32 %v2667
  %v2700 = vcvt.s32.f32 %v2668
  %v2701 = vadd.f32 %v2605, %v2669
  %v2702 = vadd.f32 %v2606, %v2670
  %v2703 = vadd.f32 %v2607, %v2671
  %v2704 = vadd.f32 %v2608, %v2672
  %v2705 = vadd.f32 %v2609, %v2673
  %v2706 = vadd.f32 %v2610, %v2674
  %v2707 = vadd.f32 %v2611, %v2675
  %v2708 = vadd.f32 %v2612, %v2676
  %v2709 = vadd.f32 %v2613, %v2677
  %v2710 = vadd.f32 %v2614, %v2678
  %v2711 = vadd.f32 %v2615, %v2679
  %v2712 = vadd.f32 %v2616, %v2680
  %v2713 = vadd.f32 %v2617, %v2681
  %v2714 = vadd.f32 %v2618, %v2682
  %v2715 = vadd.f32 %v2619, %v2683
  %v2716 = vadd.f32 %v2620, %v2684
  %v2717 = vadd.f32 %v2621, %v2685
  %v2718 = vadd.f32 %v2622, %v2686
  %v2719 = vadd.f32 %v2623, %v2687
  %v2720 = vadd.f32 %v2624, %v2688
  %v2721 = vadd.f32 %v2625, %v2689
  %v2722 = vadd.f32 %v2626, %v2690
  %v2723 = vadd.f32 %v2627, %v2691
  %v2724 = vadd.f32 %v2628, %v2692
  %v2725 = vadd.f32 %v2629, %v2693
  %v2726 = vadd.f32 %v2630, %v2694
  %v2727 = vadd.f32 %v2631, %v2695
  %v2728 = vadd.f32 %v2632, %v2696
  %v2729 = vadd.f32 %v2633, %v2697
  %v2730 = vadd.f32 %v2634, %v2698
  %v2731 = vadd.f32 %v2635, %v2699
  %v2732 = vadd.f32 %v2636, %v2700
  %2733 = vst [vmem:[#allocation2] sm:$0xff] %v2701
  %2734 = vst [vmem:[#allocation2 + $0x8] sm:$0xff] %v2702
  %2735 = vst [vmem:[#allocation2 + $0x10] sm:$0xff] %v2703
  %2736 = vst [vmem:[#allocation2 + $0x18] sm:$0xff] %v2704
  %2737 = vst [vmem:[#allocation2 + $0x20] sm:$0xff] %v2705
  %2738 = vst [vmem:[#allocation2 + $0x28] sm:$0xff] %v2706
  %2739 = vst [vmem:[#allocation2 + $0x30] sm:$0xff] %v2707
  %2740 = vst [vmem:[#allocation2 + $0x38] sm:$0xff] %v2708
  %2741 = vst [vmem:[#allocation2 + $0x40] sm:$0xff] %v2709
  %2742 = vst [vmem:[#allocation2 + $0x48] sm:$0xff] %v2710
  %2743 = vst [vmem:[#allocation2 + $0x50] sm:$0xff] %v2711
  %2744 = vst [vmem:[#allocation2 + $0x58] sm:$0xff] %v2712
  %2745 = vst [vmem:[#allocation2 + $0x60] sm:$0xff] %v2713
  %2746 = vst [vmem:[#allocation2 + $0x68] sm:$0xff] %v2714
  %2747 = vst [vmem:[#allocation2 + $0x70] sm:$0xff] %v2715
  %2748 = vst [vmem:[#allocation2 + $0x78] sm:$0xff] %v2716
  %2749 = vst [vmem:[#allocation2 + $0x80] sm:$0xff] %v2717
  %2750 = vst [vmem:[#allocation2 + $0x88] sm:$0xff] %v2718
  %2751 = vst [vmem:[#allocation2 + $0x90] sm:$0xff] %v2719
  %2752 = vst [vmem:[#allocation2 + $0x98] sm:$0xff] %v2720
  %2753 = vst [vmem:[#allocation2 + $0xa0] sm:$0xff] %v2721
  %2754 = vst [vmem:[#allocation2 + $0xa8] sm:$0xff] %v2722
  %2755 = vst [vmem:[#allocation2 + $0xb0] sm:$0xff] %v2723
  %2756 = vst [vmem:[#allocation2 + $0xb8] sm:$0xff] %v2724
  %2757 = vst [vmem:[#allocation2 + $0xc0] sm:$0xff] %v2725
  %2758 = vst [vmem:[#allocation2 + $0xc8] sm:$0xff] %v2726
  %2759 = vst [vmem:[#allocation2 + $0xd0] sm:$0xff] %v2727
  %2760 = vst [vmem:[#allocation2 + $0xd8] sm:$0xff] %v2728
  %2761 = vst [vmem:[#allocation2 + $0xe0] sm:$0xff] %v2729
  %2762 = vst [vmem:[#allocation2 + $0xe8] sm:$0xff] %v2730
  %2763 = vst [vmem:[#allocation2 + $0xf0] sm:$0xff] %v2731
  %2764 = vst [vmem:[#allocation2 + $0xf8] sm:$0xff] %v2732
  %v2765 = vld [vmem:[%s0] sm:$0xff]
  %v2766 = vld [vmem:[%s0 + $0x8] sm:$0xff]
  %2767 = vset.pattern.permute.xlu0 11
  %2768 = vperm.xlu0 %2767, %v2765
  %v2769 = vpop.permute.xlu0 %2768
  %2770 = vset.pattern.permute.xlu0 11
  %2771 = vperm.xlu0 %2770, %v2766
  %v2772 = vpop.permute.xlu0 %2771
  %vm2773 = vcmp.eq.s32.totalorder %v31, %v2769
  %vm2774 = vcmp.eq.s32.totalorder %v32, %v2769
  %vm2775 = vcmp.eq.s32.totalorder %v33, %v2769
  %vm2776 = vcmp.eq.s32.totalorder %v34, %v2769
  %vm2777 = vcmp.eq.s32.totalorder %v35, %v2769
  %vm2778 = vcmp.eq.s32.totalorder %v36, %v2769
  %vm2779 = vcmp.eq.s32.totalorder %v37, %v2769
  %vm2780 = vcmp.eq.s32.totalorder %v38, %v2769
  %vm2781 = vcmp.eq.s32.totalorder %v39, %v2769
  %vm2782 = vcmp.eq.s32.totalorder %v40, %v2769
  %vm2783 = vcmp.eq.s32.totalorder %v41, %v2769
  %vm2784 = vcmp.eq.s32.totalorder %v42, %v2769
  %vm2785 = vcmp.eq.s32.totalorder %v43, %v2769
  %vm2786 = vcmp.eq.s32.totalorder %v44, %v2769
  %vm2787 = vcmp.eq.s32.totalorder %v45, %v2769
  %vm2788 = vcmp.eq.s32.totalorder %v46, %v2769
  %vm2789 = vcmp.eq.s32.totalorder %v31, %v2772
  %vm2790 = vcmp.eq.s32.totalorder %v32, %v2772
  %vm2791 = vcmp.eq.s32.totalorder %v33, %v2772
  %vm2792 = vcmp.eq.s32.totalorder %v34, %v2772
  %vm2793 = vcmp.eq.s32.totalorder %v35, %v2772
  %vm2794 = vcmp.eq.s32.totalorder %v36, %v2772
  %vm2795 = vcmp.eq.s32.totalorder %v37, %v2772
  %vm2796 = vcmp.eq.s32.totalorder %v38, %v2772
  %vm2797 = vcmp.eq.s32.totalorder %v39, %v2772
  %vm2798 = vcmp.eq.s32.totalorder %v40, %v2772
  %vm2799 = vcmp.eq.s32.totalorder %v41, %v2772
  %vm2800 = vcmp.eq.s32.totalorder %v42, %v2772
  %vm2801 = vcmp.eq.s32.totalorder %v43, %v2772
  %vm2802 = vcmp.eq.s32.totalorder %v44, %v2772
  %vm2803 = vcmp.eq.s32.totalorder %v45, %v2772
  %vm2804 = vcmp.eq.s32.totalorder %v46, %v2772
  %vm2805 = vcmp.gt.s32.totalorder %v47, 11
  %vm2806 = vcmp.gt.s32.totalorder %v48, 11
  %v2807 = vsel %vm2805, 1, 0
  %v2808 = vsel %vm2806, 1, 0
  %2809 = vset.pattern.permute.xlu0 0
  %2810 = vperm.xlu0 %2809, %v2807
  %v2811 = vpop.permute.xlu0 %2810
  %2812 = vset.pattern.permute.xlu0 0
  %2813 = vperm.xlu0 %2812, %v2808
  %v2814 = vpop.permute.xlu0 %2813
  %vm2815 = vcmp.eq.s32.totalorder %v2811, 1
  %vm2816 = vcmp.eq.s32.totalorder %v2814, 1
  %vm2817 = vmand %vm2773, %vm2815
  %vm2818 = vmand %vm2774, %vm2815
  %vm2819 = vmand %vm2775, %vm2815
  %vm2820 = vmand %vm2776, %vm2815
  %vm2821 = vmand %vm2777, %vm2815
  %vm2822 = vmand %vm2778, %vm2815
  %vm2823 = vmand %vm2779, %vm2815
  %vm2824 = vmand %vm2780, %vm2815
  %vm2825 = vmand %vm2781, %vm2815
  %vm2826 = vmand %vm2782, %vm2815
  %vm2827 = vmand %vm2783, %vm2815
  %vm2828 = vmand %vm2784, %vm2815
  %vm2829 = vmand %vm2785, %vm2815
  %vm2830 = vmand %vm2786, %vm2815
  %vm2831 = vmand %vm2787, %vm2815
  %vm2832 = vmand %vm2788, %vm2815
  %vm2833 = vmand %vm2789, %vm2816
  %vm2834 = vmand %vm2790, %vm2816
  %vm2835 = vmand %vm2791, %vm2816
  %vm2836 = vmand %vm2792, %vm2816
  %vm2837 = vmand %vm2793, %vm2816
  %vm2838 = vmand %vm2794, %vm2816
  %vm2839 = vmand %vm2795, %vm2816
  %vm2840 = vmand %vm2796, %vm2816
  %vm2841 = vmand %vm2797, %vm2816
  %vm2842 = vmand %vm2798, %vm2816
  %vm2843 = vmand %vm2799, %vm2816
  %vm2844 = vmand %vm2800, %vm2816
  %vm2845 = vmand %vm2801, %vm2816
  %vm2846 = vmand %vm2802, %vm2816
  %vm2847 = vmand %vm2803, %vm2816
  %vm2848 = vmand %vm2804, %vm2816
  %v2849 = vld [vmem:[#allocation2] sm:$0xff]
  %v2850 = vld [vmem:[#allocation2 + $0x8] sm:$0xff]
  %v2851 = vld [vmem:[#allocation2 + $0x10] sm:$0xff]
  %v2852 = vld [vmem:[#allocation2 + $0x18] sm:$0xff]
  %v2853 = vld [vmem:[#allocation2 + $0x20] sm:$0xff]
  %v2854 = vld [vmem:[#allocation2 + $0x28] sm:$0xff]
  %v2855 = vld [vmem:[#allocation2 + $0x30] sm:$0xff]
  %v2856 = vld [vmem:[#allocation2 + $0x38] sm:$0xff]
  %v2857 = vld [vmem:[#allocation2 + $0x40] sm:$0xff]
  %v2858 = vld [vmem:[#allocation2 + $0x48] sm:$0xff]
  %v2859 = vld [vmem:[#allocation2 + $0x50] sm:$0xff]
  %v2860 = vld [vmem:[#allocation2 + $0x58] sm:$0xff]
  %v2861 = vld [vmem:[#allocation2 + $0x60] sm:$0xff]
  %v2862 = vld [vmem:[#allocation2 + $0x68] sm:$0xff]
  %v2863 = vld [vmem:[#allocation2 + $0x70] sm:$0xff]
  %v2864 = vld [vmem:[#allocation2 + $0x78] sm:$0xff]
  %v2865 = vld [vmem:[#allocation2 + $0x80] sm:$0xff]
  %v2866 = vld [vmem:[#allocation2 + $0x88] sm:$0xff]
  %v2867 = vld [vmem:[#allocation2 + $0x90] sm:$0xff]
  %v2868 = vld [vmem:[#allocation2 + $0x98] sm:$0xff]
  %v2869 = vld [vmem:[#allocation2 + $0xa0] sm:$0xff]
  %v2870 = vld [vmem:[#allocation2 + $0xa8] sm:$0xff]
  %v2871 = vld [vmem:[#allocation2 + $0xb0] sm:$0xff]
  %v2872 = vld [vmem:[#allocation2 + $0xb8] sm:$0xff]
  %v2873 = vld [vmem:[#allocation2 + $0xc0] sm:$0xff]
  %v2874 = vld [vmem:[#allocation2 + $0xc8] sm:$0xff]
  %v2875 = vld [vmem:[#allocation2 + $0xd0] sm:$0xff]
  %v2876 = vld [vmem:[#allocation2 + $0xd8] sm:$0xff]
  %v2877 = vld [vmem:[#allocation2 + $0xe0] sm:$0xff]
  %v2878 = vld [vmem:[#allocation2 + $0xe8] sm:$0xff]
  %v2879 = vld [vmem:[#allocation2 + $0xf0] sm:$0xff]
  %v2880 = vld [vmem:[#allocation2 + $0xf8] sm:$0xff]
  %v2881 = vsel %vm2817, 1, 0
  %v2882 = vsel %vm2818, 1, 0
  %v2883 = vsel %vm2819, 1, 0
  %v2884 = vsel %vm2820, 1, 0
  %v2885 = vsel %vm2821, 1, 0
  %v2886 = vsel %vm2822, 1, 0
  %v2887 = vsel %vm2823, 1, 0
  %v2888 = vsel %vm2824, 1, 0
  %v2889 = vsel %vm2825, 1, 0
  %v2890 = vsel %vm2826, 1, 0
  %v2891 = vsel %vm2827, 1, 0
  %v2892 = vsel %vm2828, 1, 0
  %v2893 = vsel %vm2829, 1, 0
  %v2894 = vsel %vm2830, 1, 0
  %v2895 = vsel %vm2831, 1, 0
  %v2896 = vsel %vm2832, 1, 0
  %v2897 = vsel %vm2833, 1, 0
  %v2898 = vsel %vm2834, 1, 0
  %v2899 = vsel %vm2835, 1, 0
  %v2900 = vsel %vm2836, 1, 0
  %v2901 = vsel %vm2837, 1, 0
  %v2902 = vsel %vm2838, 1, 0
  %v2903 = vsel %vm2839, 1, 0
  %v2904 = vsel %vm2840, 1, 0
  %v2905 = vsel %vm2841, 1, 0
  %v2906 = vsel %vm2842, 1, 0
  %v2907 = vsel %vm2843, 1, 0
  %v2908 = vsel %vm2844, 1, 0
  %v2909 = vsel %vm2845, 1, 0
  %v2910 = vsel %vm2846, 1, 0
  %v2911 = vsel %vm2847, 1, 0
  %v2912 = vsel %vm2848, 1, 0
  %v2913 = vcvt.s32.f32 %v2881
  %v2914 = vcvt.s32.f32 %v2882
  %v2915 = vcvt.s32.f32 %v2883
  %v2916 = vcvt.s32.f32 %v2884
  %v2917 = vcvt.s32.f32 %v2885
  %v2918 = vcvt.s32.f32 %v2886
  %v2919 = vcvt.s32.f32 %v2887
  %v2920 = vcvt.s32.f32 %v2888
  %v2921 = vcvt.s32.f32 %v2889
  %v2922 = vcvt.s32.f32 %v2890
  %v2923 = vcvt.s32.f32 %v2891
  %v2924 = vcvt.s32.f32 %v2892
  %v2925 = vcvt.s32.f32 %v2893
  %v2926 = vcvt.s32.f32 %v2894
  %v2927 = vcvt.s32.f32 %v2895
  %v2928 = vcvt.s32.f32 %v2896
  %v2929 = vcvt.s32.f32 %v2897
  %v2930 = vcvt.s32.f32 %v2898
  %v2931 = vcvt.s32.f32 %v2899
  %v2932 = vcvt.s32.f32 %v2900
  %v2933 = vcvt.s32.f32 %v2901
  %v2934 = vcvt.s32.f32 %v2902
  %v2935 = vcvt.s32.f32 %v2903
  %v2936 = vcvt.s32.f32 %v2904
  %v2937 = vcvt.s32.f32 %v2905
  %v2938 = vcvt.s32.f32 %v2906
  %v2939 = vcvt.s32.f32 %v2907
  %v2940 = vcvt.s32.f32 %v2908
  %v2941 = vcvt.s32.f32 %v2909
  %v2942 = vcvt.s32.f32 %v2910
  %v2943 = vcvt.s32.f32 %v2911
  %v2944 = vcvt.s32.f32 %v2912
  %v2945 = vadd.f32 %v2849, %v2913
  %v2946 = vadd.f32 %v2850, %v2914
  %v2947 = vadd.f32 %v2851, %v2915
  %v2948 = vadd.f32 %v2852, %v2916
  %v2949 = vadd.f32 %v2853, %v2917
  %v2950 = vadd.f32 %v2854, %v2918
  %v2951 = vadd.f32 %v2855, %v2919
  %v2952 = vadd.f32 %v2856, %v2920
  %v2953 = vadd.f32 %v2857, %v2921
  %v2954 = vadd.f32 %v2858, %v2922
  %v2955 = vadd.f32 %v2859, %v2923
  %v2956 = vadd.f32 %v2860, %v2924
  %v2957 = vadd.f32 %v2861, %v2925
  %v2958 = vadd.f32 %v2862, %v2926
  %v2959 = vadd.f32 %v2863, %v2927
  %v2960 = vadd.f32 %v2864, %v2928
  %v2961 = vadd.f32 %v2865, %v2929
  %v2962 = vadd.f32 %v2866, %v2930
  %v2963 = vadd.f32 %v2867, %v2931
  %v2964 = vadd.f32 %v2868, %v2932
  %v2965 = vadd.f32 %v2869, %v2933
  %v2966 = vadd.f32 %v2870, %v2934
  %v2967 = vadd.f32 %v2871, %v2935
  %v2968 = vadd.f32 %v2872, %v2936
  %v2969 = vadd.f32 %v2873, %v2937
  %v2970 = vadd.f32 %v2874, %v2938
  %v2971 = vadd.f32 %v2875, %v2939
  %v2972 = vadd.f32 %v2876, %v2940
  %v2973 = vadd.f32 %v2877, %v2941
  %v2974 = vadd.f32 %v2878, %v2942
  %v2975 = vadd.f32 %v2879, %v2943
  %v2976 = vadd.f32 %v2880, %v2944
  %2977 = vst [vmem:[#allocation2] sm:$0xff] %v2945
  %2978 = vst [vmem:[#allocation2 + $0x8] sm:$0xff] %v2946
  %2979 = vst [vmem:[#allocation2 + $0x10] sm:$0xff] %v2947
  %2980 = vst [vmem:[#allocation2 + $0x18] sm:$0xff] %v2948
  %2981 = vst [vmem:[#allocation2 + $0x20] sm:$0xff] %v2949
  %2982 = vst [vmem:[#allocation2 + $0x28] sm:$0xff] %v2950
  %2983 = vst [vmem:[#allocation2 + $0x30] sm:$0xff] %v2951
  %2984 = vst [vmem:[#allocation2 + $0x38] sm:$0xff] %v2952
  %2985 = vst [vmem:[#allocation2 + $0x40] sm:$0xff] %v2953
  %2986 = vst [vmem:[#allocation2 + $0x48] sm:$0xff] %v2954
  %2987 = vst [vmem:[#allocation2 + $0x50] sm:$0xff] %v2955
  %2988 = vst [vmem:[#allocation2 + $0x58] sm:$0xff] %v2956
  %2989 = vst [vmem:[#allocation2 + $0x60] sm:$0xff] %v2957
  %2990 = vst [vmem:[#allocation2 + $0x68] sm:$0xff] %v2958
  %2991 = vst [vmem:[#allocation2 + $0x70] sm:$0xff] %v2959
  %2992 = vst [vmem:[#allocation2 + $0x78] sm:$0xff] %v2960
  %2993 = vst [vmem:[#allocation2 + $0x80] sm:$0xff] %v2961
  %2994 = vst [vmem:[#allocation2 + $0x88] sm:$0xff] %v2962
  %2995 = vst [vmem:[#allocation2 + $0x90] sm:$0xff] %v2963
  %2996 = vst [vmem:[#allocation2 + $0x98] sm:$0xff] %v2964
  %2997 = vst [vmem:[#allocation2 + $0xa0] sm:$0xff] %v2965
  %2998 = vst [vmem:[#allocation2 + $0xa8] sm:$0xff] %v2966
  %2999 = vst [vmem:[#allocation2 + $0xb0] sm:$0xff] %v2967
  %3000 = vst [vmem:[#allocation2 + $0xb8] sm:$0xff] %v2968
  %3001 = vst [vmem:[#allocation2 + $0xc0] sm:$0xff] %v2969
  %3002 = vst [vmem:[#allocation2 + $0xc8] sm:$0xff] %v2970
  %3003 = vst [vmem:[#allocation2 + $0xd0] sm:$0xff] %v2971
  %3004 = vst [vmem:[#allocation2 + $0xd8] sm:$0xff] %v2972
  %3005 = vst [vmem:[#allocation2 + $0xe0] sm:$0xff] %v2973
  %3006 = vst [vmem:[#allocation2 + $0xe8] sm:$0xff] %v2974
  %3007 = vst [vmem:[#allocation2 + $0xf0] sm:$0xff] %v2975
  %3008 = vst [vmem:[#allocation2 + $0xf8] sm:$0xff] %v2976
  %v3009 = vld [vmem:[#allocation2] sm:$0xff]
  %v3010 = vld [vmem:[#allocation2 + $0x8] sm:$0xff]
  %v3011 = vld [vmem:[#allocation2 + $0x10] sm:$0xff]
  %v3012 = vld [vmem:[#allocation2 + $0x18] sm:$0xff]
  %v3013 = vld [vmem:[#allocation2 + $0x20] sm:$0xff]
  %v3014 = vld [vmem:[#allocation2 + $0x28] sm:$0xff]
  %v3015 = vld [vmem:[#allocation2 + $0x30] sm:$0xff]
  %v3016 = vld [vmem:[#allocation2 + $0x38] sm:$0xff]
  %v3017 = vld [vmem:[#allocation2 + $0x40] sm:$0xff]
  %v3018 = vld [vmem:[#allocation2 + $0x48] sm:$0xff]
  %v3019 = vld [vmem:[#allocation2 + $0x50] sm:$0xff]
  %v3020 = vld [vmem:[#allocation2 + $0x58] sm:$0xff]
  %v3021 = vld [vmem:[#allocation2 + $0x60] sm:$0xff]
  %v3022 = vld [vmem:[#allocation2 + $0x68] sm:$0xff]
  %v3023 = vld [vmem:[#allocation2 + $0x70] sm:$0xff]
  %v3024 = vld [vmem:[#allocation2 + $0x78] sm:$0xff]
  %v3025 = vld [vmem:[#allocation2 + $0x80] sm:$0xff]
  %v3026 = vld [vmem:[#allocation2 + $0x88] sm:$0xff]
  %v3027 = vld [vmem:[#allocation2 + $0x90] sm:$0xff]
  %v3028 = vld [vmem:[#allocation2 + $0x98] sm:$0xff]
  %v3029 = vld [vmem:[#allocation2 + $0xa0] sm:$0xff]
  %v3030 = vld [vmem:[#allocation2 + $0xa8] sm:$0xff]
  %v3031 = vld [vmem:[#allocation2 + $0xb0] sm:$0xff]
  %v3032 = vld [vmem:[#allocation2 + $0xb8] sm:$0xff]
  %v3033 = vld [vmem:[#allocation2 + $0xc0] sm:$0xff]
  %v3034 = vld [vmem:[#allocation2 + $0xc8] sm:$0xff]
  %v3035 = vld [vmem:[#allocation2 + $0xd0] sm:$0xff]
  %v3036 = vld [vmem:[#allocation2 + $0xd8] sm:$0xff]
  %v3037 = vld [vmem:[#allocation2 + $0xe0] sm:$0xff]
  %v3038 = vld [vmem:[#allocation2 + $0xe8] sm:$0xff]
  %v3039 = vld [vmem:[#allocation2 + $0xf0] sm:$0xff]
  %v3040 = vld [vmem:[#allocation2 + $0xf8] sm:$0xff]
  %v3041 = vpack.c.bf16 %v3025, %v3009
  %v3042 = vpack.c.bf16 %v3026, %v3010
  %v3043 = vpack.c.bf16 %v3027, %v3011
  %v3044 = vpack.c.bf16 %v3028, %v3012
  %v3045 = vpack.c.bf16 %v3029, %v3013
  %v3046 = vpack.c.bf16 %v3030, %v3014
  %v3047 = vpack.c.bf16 %v3031, %v3015
  %v3048 = vpack.c.bf16 %v3032, %v3016
  %v3049 = vpack.c.bf16 %v3033, %v3017
  %v3050 = vpack.c.bf16 %v3034, %v3018
  %v3051 = vpack.c.bf16 %v3035, %v3019
  %v3052 = vpack.c.bf16 %v3036, %v3020
  %v3053 = vpack.c.bf16 %v3037, %v3021
  %v3054 = vpack.c.bf16 %v3038, %v3022
  %v3055 = vpack.c.bf16 %v3039, %v3023
  %v3056 = vpack.c.bf16 %v3040, %v3024
  %v3057 = vld [vmem:[%s2] sm:$0xf]
  %v3058 = vld [vmem:[%s2 + $0x4] sm:$0xf]
  %v3059 = vld [vmem:[%s2 + $0x8] sm:$0xf]
  %v3060 = vld [vmem:[%s2 + $0xc] sm:$0xf]
  %v3061 = vld [vmem:[%s2 + $0x10] sm:$0xf]
  %v3062 = vld [vmem:[%s2 + $0x14] sm:$0xf]
  %v3063 = vld [vmem:[%s2 + $0x18] sm:$0xf]
  %v3064 = vld [vmem:[%s2 + $0x1c] sm:$0xf]
  %v3065 = vld [vmem:[%s2 + $0x20] sm:$0xf]
  %v3066 = vld [vmem:[%s2 + $0x24] sm:$0xf]
  %v3067 = vld [vmem:[%s2 + $0x28] sm:$0xf]
  %v3068 = vld [vmem:[%s2 + $0x2c] sm:$0xf]
  %v3069 = vld [vmem:[%s2 + $0x30] sm:$0xf]
  %v3070 = vld [vmem:[%s2 + $0x34] sm:$0xf]
  %v3071 = vld [vmem:[%s2 + $0x38] sm:$0xf]
  %v3072 = vld [vmem:[%s2 + $0x3c] sm:$0xf]
  %v3073 = vld [vmem:[%s2 + $0x40] sm:$0xf]
  %v3074 = vld [vmem:[%s2 + $0x44] sm:$0xf]
  %v3075 = vld [vmem:[%s2 + $0x48] sm:$0xf]
  %v3076 = vld [vmem:[%s2 + $0x4c] sm:$0xf]
  %v3077 = vld [vmem:[%s2 + $0x50] sm:$0xf]
  %v3078 = vld [vmem:[%s2 + $0x54] sm:$0xf]
  %v3079 = vld [vmem:[%s2 + $0x58] sm:$0xf]
  %v3080 = vld [vmem:[%s2 + $0x5c] sm:$0xf]
  %v3081 = vld [vmem:[%s2 + $0x60] sm:$0xf]
  %v3082 = vld [vmem:[%s2 + $0x64] sm:$0xf]
  %v3083 = vld [vmem:[%s2 + $0x68] sm:$0xf]
  %v3084 = vld [vmem:[%s2 + $0x6c] sm:$0xf]
  %v3085 = vld [vmem:[%s2 + $0x70] sm:$0xf]
  %v3086 = vld [vmem:[%s2 + $0x74] sm:$0xf]
  %v3087 = vld [vmem:[%s2 + $0x78] sm:$0xf]
  %v3088 = vld [vmem:[%s2 + $0x7c] sm:$0xf]
  %v3089 = vld [vmem:[%s2 + $0x80] sm:$0xf]
  %v3090 = vld [vmem:[%s2 + $0x84] sm:$0xf]
  %v3091 = vld [vmem:[%s2 + $0x88] sm:$0xf]
  %v3092 = vld [vmem:[%s2 + $0x8c] sm:$0xf]
  %v3093 = vld [vmem:[%s2 + $0x90] sm:$0xf]
  %v3094 = vld [vmem:[%s2 + $0x94] sm:$0xf]
  %v3095 = vld [vmem:[%s2 + $0x98] sm:$0xf]
  %v3096 = vld [vmem:[%s2 + $0x9c] sm:$0xf]
  %v3097 = vld [vmem:[%s2 + $0xa0] sm:$0xf]
  %v3098 = vld [vmem:[%s2 + $0xa4] sm:$0xf]
  %v3099 = vld [vmem:[%s2 + $0xa8] sm:$0xf]
  %v3100 = vld [vmem:[%s2 + $0xac] sm:$0xf]
  %v3101 = vld [vmem:[%s2 + $0xb0] sm:$0xf]
  %v3102 = vld [vmem:[%s2 + $0xb4] sm:$0xf]
  %v3103 = vld [vmem:[%s2 + $0xb8] sm:$0xf]
  %v3104 = vld [vmem:[%s2 + $0xbc] sm:$0xf]
  %v3105 = vld [vmem:[%s2 + $0xc0] sm:$0xf]
  %v3106 = vld [vmem:[%s2 + $0xc4] sm:$0xf]
  %v3107 = vld [vmem:[%s2 + $0xc8] sm:$0xf]
  %v3108 = vld [vmem:[%s2 + $0xcc] sm:$0xf]
  %v3109 = vld [vmem:[%s2 + $0xd0] sm:$0xf]
  %v3110 = vld [vmem:[%s2 + $0xd4] sm:$0xf]
  %v3111 = vld [vmem:[%s2 + $0xd8] sm:$0xf]
  %v3112 = vld [vmem:[%s2 + $0xdc] sm:$0xf]
  %v3113 = vld [vmem:[%s2 + $0xe0] sm:$0xf]
  %v3114 = vld [vmem:[%s2 + $0xe4] sm:$0xf]
  %v3115 = vld [vmem:[%s2 + $0xe8] sm:$0xf]
  %v3116 = vld [vmem:[%s2 + $0xec] sm:$0xf]
  %v3117 = vld [vmem:[%s2 + $0xf0] sm:$0xf]
  %v3118 = vld [vmem:[%s2 + $0xf4] sm:$0xf]
  %v3119 = vld [vmem:[%s2 + $0xf8] sm:$0xf]
  %v3120 = vld [vmem:[%s2 + $0xfc] sm:$0xf]
  %v3121 = vld [vmem:[%s2 + $0x100] sm:$0xf]
  %v3122 = vld [vmem:[%s2 + $0x104] sm:$0xf]
  %v3123 = vld [vmem:[%s2 + $0x108] sm:$0xf]
  %v3124 = vld [vmem:[%s2 + $0x10c] sm:$0xf]
  %v3125 = vld [vmem:[%s2 + $0x110] sm:$0xf]
  %v3126 = vld [vmem:[%s2 + $0x114] sm:$0xf]
  %v3127 = vld [vmem:[%s2 + $0x118] sm:$0xf]
  %v3128 = vld [vmem:[%s2 + $0x11c] sm:$0xf]
  %v3129 = vld [vmem:[%s2 + $0x120] sm:$0xf]
  %v3130 = vld [vmem:[%s2 + $0x124] sm:$0xf]
  %v3131 = vld [vmem:[%s2 + $0x128] sm:$0xf]
  %v3132 = vld [vmem:[%s2 + $0x12c] sm:$0xf]
  %v3133 = vld [vmem:[%s2 + $0x130] sm:$0xf]
  %v3134 = vld [vmem:[%s2 + $0x134] sm:$0xf]
  %v3135 = vld [vmem:[%s2 + $0x138] sm:$0xf]
  %v3136 = vld [vmem:[%s2 + $0x13c] sm:$0xf]
  %v3137 = vld [vmem:[%s2 + $0x140] sm:$0xf]
  %v3138 = vld [vmem:[%s2 + $0x144] sm:$0xf]
  %v3139 = vld [vmem:[%s2 + $0x148] sm:$0xf]
  %v3140 = vld [vmem:[%s2 + $0x14c] sm:$0xf]
  %v3141 = vld [vmem:[%s2 + $0x150] sm:$0xf]
  %v3142 = vld [vmem:[%s2 + $0x154] sm:$0xf]
  %v3143 = vld [vmem:[%s2 + $0x158] sm:$0xf]
  %v3144 = vld [vmem:[%s2 + $0x15c] sm:$0xf]
  %v3145 = vld [vmem:[%s2 + $0x160] sm:$0xf]
  %v3146 = vld [vmem:[%s2 + $0x164] sm:$0xf]
  %v3147 = vld [vmem:[%s2 + $0x168] sm:$0xf]
  %v3148 = vld [vmem:[%s2 + $0x16c] sm:$0xf]
  %v3149 = vld [vmem:[%s2 + $0x170] sm:$0xf]
  %v3150 = vld [vmem:[%s2 + $0x174] sm:$0xf]
  %v3151 = vld [vmem:[%s2 + $0x178] sm:$0xf]
  %v3152 = vld [vmem:[%s2 + $0x17c] sm:$0xf]
  %v3153 = vld [vmem:[%s2 + $0x180] sm:$0xf]
  %v3154 = vld [vmem:[%s2 + $0x184] sm:$0xf]
  %v3155 = vld [vmem:[%s2 + $0x188] sm:$0xf]
  %v3156 = vld [vmem:[%s2 + $0x18c] sm:$0xf]
  %v3157 = vld [vmem:[%s2 + $0x190] sm:$0xf]
  %v3158 = vld [vmem:[%s2 + $0x194] sm:$0xf]
  %v3159 = vld [vmem:[%s2 + $0x198] sm:$0xf]
  %v3160 = vld [vmem:[%s2 + $0x19c] sm:$0xf]
  %v3161 = vld [vmem:[%s2 + $0x1a0] sm:$0xf]
  %v3162 = vld [vmem:[%s2 + $0x1a4] sm:$0xf]
  %v3163 = vld [vmem:[%s2 + $0x1a8] sm:$0xf]
  %v3164 = vld [vmem:[%s2 + $0x1ac] sm:$0xf]
  %v3165 = vld [vmem:[%s2 + $0x1b0] sm:$0xf]
  %v3166 = vld [vmem:[%s2 + $0x1b4] sm:$0xf]
  %v3167 = vld [vmem:[%s2 + $0x1b8] sm:$0xf]
  %v3168 = vld [vmem:[%s2 + $0x1bc] sm:$0xf]
  %v3169 = vld [vmem:[%s2 + $0x1c0] sm:$0xf]
  %v3170 = vld [vmem:[%s2 + $0x1c4] sm:$0xf]
  %v3171 = vld [vmem:[%s2 + $0x1c8] sm:$0xf]
  %v3172 = vld [vmem:[%s2 + $0x1cc] sm:$0xf]
  %v3173 = vld [vmem:[%s2 + $0x1d0] sm:$0xf]
  %v3174 = vld [vmem:[%s2 + $0x1d4] sm:$0xf]
  %v3175 = vld [vmem:[%s2 + $0x1d8] sm:$0xf]
  %v3176 = vld [vmem:[%s2 + $0x1dc] sm:$0xf]
  %v3177 = vld [vmem:[%s2 + $0x1e0] sm:$0xf]
  %v3178 = vld [vmem:[%s2 + $0x1e4] sm:$0xf]
  %v3179 = vld [vmem:[%s2 + $0x1e8] sm:$0xf]
  %v3180 = vld [vmem:[%s2 + $0x1ec] sm:$0xf]
  %v3181 = vld [vmem:[%s2 + $0x1f0] sm:$0xf]
  %v3182 = vld [vmem:[%s2 + $0x1f4] sm:$0xf]
  %v3183 = vld [vmem:[%s2 + $0x1f8] sm:$0xf]
  %v3184 = vld [vmem:[%s2 + $0x1fc] sm:$0xf]
  %v3185 = vld [vmem:[%s2 + $0x200] sm:$0xf]
  %v3186 = vld [vmem:[%s2 + $0x204] sm:$0xf]
  %v3187 = vld [vmem:[%s2 + $0x208] sm:$0xf]
  %v3188 = vld [vmem:[%s2 + $0x20c] sm:$0xf]
  %v3189 = vld [vmem:[%s2 + $0x210] sm:$0xf]
  %v3190 = vld [vmem:[%s2 + $0x214] sm:$0xf]
  %v3191 = vld [vmem:[%s2 + $0x218] sm:$0xf]
  %v3192 = vld [vmem:[%s2 + $0x21c] sm:$0xf]
  %v3193 = vld [vmem:[%s2 + $0x220] sm:$0xf]
  %v3194 = vld [vmem:[%s2 + $0x224] sm:$0xf]
  %v3195 = vld [vmem:[%s2 + $0x228] sm:$0xf]
  %v3196 = vld [vmem:[%s2 + $0x22c] sm:$0xf]
  %v3197 = vld [vmem:[%s2 + $0x230] sm:$0xf]
  %v3198 = vld [vmem:[%s2 + $0x234] sm:$0xf]
  %v3199 = vld [vmem:[%s2 + $0x238] sm:$0xf]
  %v3200 = vld [vmem:[%s2 + $0x23c] sm:$0xf]
  %v3201 = vld [vmem:[%s2 + $0x240] sm:$0xf]
  %v3202 = vld [vmem:[%s2 + $0x244] sm:$0xf]
  %v3203 = vld [vmem:[%s2 + $0x248] sm:$0xf]
  %v3204 = vld [vmem:[%s2 + $0x24c] sm:$0xf]
  %v3205 = vld [vmem:[%s2 + $0x250] sm:$0xf]
  %v3206 = vld [vmem:[%s2 + $0x254] sm:$0xf]
  %v3207 = vld [vmem:[%s2 + $0x258] sm:$0xf]
  %v3208 = vld [vmem:[%s2 + $0x25c] sm:$0xf]
  %v3209 = vld [vmem:[%s2 + $0x260] sm:$0xf]
  %v3210 = vld [vmem:[%s2 + $0x264] sm:$0xf]
  %v3211 = vld [vmem:[%s2 + $0x268] sm:$0xf]
  %v3212 = vld [vmem:[%s2 + $0x26c] sm:$0xf]
  %v3213 = vld [vmem:[%s2 + $0x270] sm:$0xf]
  %v3214 = vld [vmem:[%s2 + $0x274] sm:$0xf]
  %v3215 = vld [vmem:[%s2 + $0x278] sm:$0xf]
  %v3216 = vld [vmem:[%s2 + $0x27c] sm:$0xf]
  %v3217 = vld [vmem:[%s2 + $0x280] sm:$0xf]
  %v3218 = vld [vmem:[%s2 + $0x284] sm:$0xf]
  %v3219 = vld [vmem:[%s2 + $0x288] sm:$0xf]
  %v3220 = vld [vmem:[%s2 + $0x28c] sm:$0xf]
  %v3221 = vld [vmem:[%s2 + $0x290] sm:$0xf]
  %v3222 = vld [vmem:[%s2 + $0x294] sm:$0xf]
  %v3223 = vld [vmem:[%s2 + $0x298] sm:$0xf]
  %v3224 = vld [vmem:[%s2 + $0x29c] sm:$0xf]
  %v3225 = vld [vmem:[%s2 + $0x2a0] sm:$0xf]
  %v3226 = vld [vmem:[%s2 + $0x2a4] sm:$0xf]
  %v3227 = vld [vmem:[%s2 + $0x2a8] sm:$0xf]
  %v3228 = vld [vmem:[%s2 + $0x2ac] sm:$0xf]
  %v3229 = vld [vmem:[%s2 + $0x2b0] sm:$0xf]
  %v3230 = vld [vmem:[%s2 + $0x2b4] sm:$0xf]
  %v3231 = vld [vmem:[%s2 + $0x2b8] sm:$0xf]
  %v3232 = vld [vmem:[%s2 + $0x2bc] sm:$0xf]
  %v3233 = vld [vmem:[%s2 + $0x2c0] sm:$0xf]
  %v3234 = vld [vmem:[%s2 + $0x2c4] sm:$0xf]
  %v3235 = vld [vmem:[%s2 + $0x2c8] sm:$0xf]
  %v3236 = vld [vmem:[%s2 + $0x2cc] sm:$0xf]
  %v3237 = vld [vmem:[%s2 + $0x2d0] sm:$0xf]
  %v3238 = vld [vmem:[%s2 + $0x2d4] sm:$0xf]
  %v3239 = vld [vmem:[%s2 + $0x2d8] sm:$0xf]
  %v3240 = vld [vmem:[%s2 + $0x2dc] sm:$0xf]
  %v3241 = vld [vmem:[%s2 + $0x2e0] sm:$0xf]
  %v3242 = vld [vmem:[%s2 + $0x2e4] sm:$0xf]
  %v3243 = vld [vmem:[%s2 + $0x2e8] sm:$0xf]
  %v3244 = vld [vmem:[%s2 + $0x2ec] sm:$0xf]
  %v3245 = vld [vmem:[%s2 + $0x2f0] sm:$0xf]
  %v3246 = vld [vmem:[%s2 + $0x2f4] sm:$0xf]
  %v3247 = vld [vmem:[%s2 + $0x2f8] sm:$0xf]
  %v3248 = vld [vmem:[%s2 + $0x2fc] sm:$0xf]
  %v3249 = vld [vmem:[%s2 + $0x300] sm:$0xf]
  %v3250 = vld [vmem:[%s2 + $0x304] sm:$0xf]
  %v3251 = vld [vmem:[%s2 + $0x308] sm:$0xf]
  %v3252 = vld [vmem:[%s2 + $0x30c] sm:$0xf]
  %v3253 = vld [vmem:[%s2 + $0x310] sm:$0xf]
  %v3254 = vld [vmem:[%s2 + $0x314] sm:$0xf]
  %v3255 = vld [vmem:[%s2 + $0x318] sm:$0xf]
  %v3256 = vld [vmem:[%s2 + $0x31c] sm:$0xf]
  %v3257 = vld [vmem:[%s2 + $0x320] sm:$0xf]
  %v3258 = vld [vmem:[%s2 + $0x324] sm:$0xf]
  %v3259 = vld [vmem:[%s2 + $0x328] sm:$0xf]
  %v3260 = vld [vmem:[%s2 + $0x32c] sm:$0xf]
  %v3261 = vld [vmem:[%s2 + $0x330] sm:$0xf]
  %v3262 = vld [vmem:[%s2 + $0x334] sm:$0xf]
  %v3263 = vld [vmem:[%s2 + $0x338] sm:$0xf]
  %v3264 = vld [vmem:[%s2 + $0x33c] sm:$0xf]
  %v3265 = vld [vmem:[%s2 + $0x340] sm:$0xf]
  %v3266 = vld [vmem:[%s2 + $0x344] sm:$0xf]
  %v3267 = vld [vmem:[%s2 + $0x348] sm:$0xf]
  %v3268 = vld [vmem:[%s2 + $0x34c] sm:$0xf]
  %v3269 = vld [vmem:[%s2 + $0x350] sm:$0xf]
  %v3270 = vld [vmem:[%s2 + $0x354] sm:$0xf]
  %v3271 = vld [vmem:[%s2 + $0x358] sm:$0xf]
  %v3272 = vld [vmem:[%s2 + $0x35c] sm:$0xf]
  %v3273 = vld [vmem:[%s2 + $0x360] sm:$0xf]
  %v3274 = vld [vmem:[%s2 + $0x364] sm:$0xf]
  %v3275 = vld [vmem:[%s2 + $0x368] sm:$0xf]
  %v3276 = vld [vmem:[%s2 + $0x36c] sm:$0xf]
  %v3277 = vld [vmem:[%s2 + $0x370] sm:$0xf]
  %v3278 = vld [vmem:[%s2 + $0x374] sm:$0xf]
  %v3279 = vld [vmem:[%s2 + $0x378] sm:$0xf]
  %v3280 = vld [vmem:[%s2 + $0x37c] sm:$0xf]
  %v3281 = vld [vmem:[%s2 + $0x380] sm:$0xf]
  %v3282 = vld [vmem:[%s2 + $0x384] sm:$0xf]
  %v3283 = vld [vmem:[%s2 + $0x388] sm:$0xf]
  %v3284 = vld [vmem:[%s2 + $0x38c] sm:$0xf]
  %v3285 = vld [vmem:[%s2 + $0x390] sm:$0xf]
  %v3286 = vld [vmem:[%s2 + $0x394] sm:$0xf]
  %v3287 = vld [vmem:[%s2 + $0x398] sm:$0xf]
  %v3288 = vld [vmem:[%s2 + $0x39c] sm:$0xf]
  %v3289 = vld [vmem:[%s2 + $0x3a0] sm:$0xf]
  %v3290 = vld [vmem:[%s2 + $0x3a4] sm:$0xf]
  %v3291 = vld [vmem:[%s2 + $0x3a8] sm:$0xf]
  %v3292 = vld [vmem:[%s2 + $0x3ac] sm:$0xf]
  %v3293 = vld [vmem:[%s2 + $0x3b0] sm:$0xf]
  %v3294 = vld [vmem:[%s2 + $0x3b4] sm:$0xf]
  %v3295 = vld [vmem:[%s2 + $0x3b8] sm:$0xf]
  %v3296 = vld [vmem:[%s2 + $0x3bc] sm:$0xf]
  %v3297 = vld [vmem:[%s2 + $0x3c0] sm:$0xf]
  %v3298 = vld [vmem:[%s2 + $0x3c4] sm:$0xf]
  %v3299 = vld [vmem:[%s2 + $0x3c8] sm:$0xf]
  %v3300 = vld [vmem:[%s2 + $0x3cc] sm:$0xf]
  %v3301 = vld [vmem:[%s2 + $0x3d0] sm:$0xf]
  %v3302 = vld [vmem:[%s2 + $0x3d4] sm:$0xf]
  %v3303 = vld [vmem:[%s2 + $0x3d8] sm:$0xf]
  %v3304 = vld [vmem:[%s2 + $0x3dc] sm:$0xf]
  %v3305 = vld [vmem:[%s2 + $0x3e0] sm:$0xf]
  %v3306 = vld [vmem:[%s2 + $0x3e4] sm:$0xf]
  %v3307 = vld [vmem:[%s2 + $0x3e8] sm:$0xf]
  %v3308 = vld [vmem:[%s2 + $0x3ec] sm:$0xf]
  %v3309 = vld [vmem:[%s2 + $0x3f0] sm:$0xf]
  %v3310 = vld [vmem:[%s2 + $0x3f4] sm:$0xf]
  %v3311 = vld [vmem:[%s2 + $0x3f8] sm:$0xf]
  %v3312 = vld [vmem:[%s2 + $0x3fc] sm:$0xf]
  %v3313 = vld [vmem:[%s3] sm:$0x1]
  %v3315 = vlaneseq
  %v3316 = vshrl.u32 %v3315, 7
  %v3317 = vsub.s32 0, %v3316
  %v3318 = vrot.slane %v3313, %v3317
  %v3576 = vunpack.c.l.b16 %v3057
  %v3577 = vunpack.c.l.b16 %v3058
  %v3578 = vunpack.c.l.b16 %v3059
  %v3579 = vunpack.c.l.b16 %v3060
  %v3580 = vunpack.c.l.b16 %v3061
  %v3581 = vunpack.c.l.b16 %v3062
  %v3582 = vunpack.c.l.b16 %v3063
  %v3583 = vunpack.c.l.b16 %v3064
  %v3584 = vunpack.c.l.b16 %v3065
  %v3585 = vunpack.c.l.b16 %v3066
  %v3586 = vunpack.c.l.b16 %v3067
  %v3587 = vunpack.c.l.b16 %v3068
  %v3588 = vunpack.c.l.b16 %v3069
  %v3589 = vunpack.c.l.b16 %v3070
  %v3590 = vunpack.c.l.b16 %v3071
  %v3591 = vunpack.c.l.b16 %v3072
  %v3592 = vunpack.c.l.b16 %v3073
  %v3593 = vunpack.c.l.b16 %v3074
  %v3594 = vunpack.c.l.b16 %v3075
  %v3595 = vunpack.c.l.b16 %v3076
  %v3596 = vunpack.c.l.b16 %v3077
  %v3597 = vunpack.c.l.b16 %v3078
  %v3598 = vunpack.c.l.b16 %v3079
  %v3599 = vunpack.c.l.b16 %v3080
  %v3600 = vunpack.c.l.b16 %v3081
  %v3601 = vunpack.c.l.b16 %v3082
  %v3602 = vunpack.c.l.b16 %v3083
  %v3603 = vunpack.c.l.b16 %v3084
  %v3604 = vunpack.c.l.b16 %v3085
  %v3605 = vunpack.c.l.b16 %v3086
  %v3606 = vunpack.c.l.b16 %v3087
  %v3607 = vunpack.c.l.b16 %v3088
  %v3608 = vunpack.c.l.b16 %v3089
  %v3609 = vunpack.c.l.b16 %v3090
  %v3610 = vunpack.c.l.b16 %v3091
  %v3611 = vunpack.c.l.b16 %v3092
  %v3612 = vunpack.c.l.b16 %v3093
  %v3613 = vunpack.c.l.b16 %v3094
  %v3614 = vunpack.c.l.b16 %v3095
  %v3615 = vunpack.c.l.b16 %v3096
  %v3616 = vunpack.c.l.b16 %v3097
  %v3617 = vunpack.c.l.b16 %v3098
  %v3618 = vunpack.c.l.b16 %v3099
  %v3619 = vunpack.c.l.b16 %v3100
  %v3620 = vunpack.c.l.b16 %v3101
  %v3621 = vunpack.c.l.b16 %v3102
  %v3622 = vunpack.c.l.b16 %v3103
  %v3623 = vunpack.c.l.b16 %v3104
  %v3624 = vunpack.c.l.b16 %v3105
  %v3625 = vunpack.c.l.b16 %v3106
  %v3626 = vunpack.c.l.b16 %v3107
  %v3627 = vunpack.c.l.b16 %v3108
  %v3628 = vunpack.c.l.b16 %v3109
  %v3629 = vunpack.c.l.b16 %v3110
  %v3630 = vunpack.c.l.b16 %v3111
  %v3631 = vunpack.c.l.b16 %v3112
  %v3632 = vunpack.c.l.b16 %v3113
  %v3633 = vunpack.c.l.b16 %v3114
  %v3634 = vunpack.c.l.b16 %v3115
  %v3635 = vunpack.c.l.b16 %v3116
  %v3636 = vunpack.c.l.b16 %v3117
  %v3637 = vunpack.c.l.b16 %v3118
  %v3638 = vunpack.c.l.b16 %v3119
  %v3639 = vunpack.c.l.b16 %v3120
  %v3640 = vunpack.c.l.b16 %v3121
  %v3641 = vunpack.c.l.b16 %v3122
  %v3642 = vunpack.c.l.b16 %v3123
  %v3643 = vunpack.c.l.b16 %v3124
  %v3644 = vunpack.c.l.b16 %v3125
  %v3645 = vunpack.c.l.b16 %v3126
  %v3646 = vunpack.c.l.b16 %v3127
  %v3647 = vunpack.c.l.b16 %v3128
  %v3648 = vunpack.c.l.b16 %v3129
  %v3649 = vunpack.c.l.b16 %v3130
  %v3650 = vunpack.c.l.b16 %v3131
  %v3651 = vunpack.c.l.b16 %v3132
  %v3652 = vunpack.c.l.b16 %v3133
  %v3653 = vunpack.c.l.b16 %v3134
  %v3654 = vunpack.c.l.b16 %v3135
  %v3655 = vunpack.c.l.b16 %v3136
  %v3656 = vunpack.c.l.b16 %v3137
  %v3657 = vunpack.c.l.b16 %v3138
  %v3658 = vunpack.c.l.b16 %v3139
  %v3659 = vunpack.c.l.b16 %v3140
  %v3660 = vunpack.c.l.b16 %v3141
  %v3661 = vunpack.c.l.b16 %v3142
  %v3662 = vunpack.c.l.b16 %v3143
  %v3663 = vunpack.c.l.b16 %v3144
  %v3664 = vunpack.c.l.b16 %v3145
  %v3665 = vunpack.c.l.b16 %v3146
  %v3666 = vunpack.c.l.b16 %v3147
  %v3667 = vunpack.c.l.b16 %v3148
  %v3668 = vunpack.c.l.b16 %v3149
  %v3669 = vunpack.c.l.b16 %v3150
  %v3670 = vunpack.c.l.b16 %v3151
  %v3671 = vunpack.c.l.b16 %v3152
  %v3672 = vunpack.c.l.b16 %v3153
  %v3673 = vunpack.c.l.b16 %v3154
  %v3674 = vunpack.c.l.b16 %v3155
  %v3675 = vunpack.c.l.b16 %v3156
  %v3676 = vunpack.c.l.b16 %v3157
  %v3677 = vunpack.c.l.b16 %v3158
  %v3678 = vunpack.c.l.b16 %v3159
  %v3679 = vunpack.c.l.b16 %v3160
  %v3680 = vunpack.c.l.b16 %v3161
  %v3681 = vunpack.c.l.b16 %v3162
  %v3682 = vunpack.c.l.b16 %v3163
  %v3683 = vunpack.c.l.b16 %v3164
  %v3684 = vunpack.c.l.b16 %v3165
  %v3685 = vunpack.c.l.b16 %v3166
  %v3686 = vunpack.c.l.b16 %v3167
  %v3687 = vunpack.c.l.b16 %v3168
  %v3688 = vunpack.c.l.b16 %v3169
  %v3689 = vunpack.c.l.b16 %v3170
  %v3690 = vunpack.c.l.b16 %v3171
  %v3691 = vunpack.c.l.b16 %v3172
  %v3692 = vunpack.c.l.b16 %v3173
  %v3693 = vunpack.c.l.b16 %v3174
  %v3694 = vunpack.c.l.b16 %v3175
  %v3695 = vunpack.c.l.b16 %v3176
  %v3696 = vunpack.c.l.b16 %v3177
  %v3697 = vunpack.c.l.b16 %v3178
  %v3698 = vunpack.c.l.b16 %v3179
  %v3699 = vunpack.c.l.b16 %v3180
  %v3700 = vunpack.c.l.b16 %v3181
  %v3701 = vunpack.c.l.b16 %v3182
  %v3702 = vunpack.c.l.b16 %v3183
  %v3703 = vunpack.c.l.b16 %v3184
  %v3704 = vunpack.c.l.b16 %v3185
  %v3705 = vunpack.c.l.b16 %v3186
  %v3706 = vunpack.c.l.b16 %v3187
  %v3707 = vunpack.c.l.b16 %v3188
  %v3708 = vunpack.c.l.b16 %v3189
  %v3709 = vunpack.c.l.b16 %v3190
  %v3710 = vunpack.c.l.b16 %v3191
  %v3711 = vunpack.c.l.b16 %v3192
  %v3712 = vunpack.c.l.b16 %v3193
  %v3713 = vunpack.c.l.b16 %v3194
  %v3714 = vunpack.c.l.b16 %v3195
  %v3715 = vunpack.c.l.b16 %v3196
  %v3716 = vunpack.c.l.b16 %v3197
  %v3717 = vunpack.c.l.b16 %v3198
  %v3718 = vunpack.c.l.b16 %v3199
  %v3719 = vunpack.c.l.b16 %v3200
  %v3720 = vunpack.c.l.b16 %v3201
  %v3721 = vunpack.c.l.b16 %v3202
  %v3722 = vunpack.c.l.b16 %v3203
  %v3723 = vunpack.c.l.b16 %v3204
  %v3724 = vunpack.c.l.b16 %v3205
  %v3725 = vunpack.c.l.b16 %v3206
  %v3726 = vunpack.c.l.b16 %v3207
  %v3727 = vunpack.c.l.b16 %v3208
  %v3728 = vunpack.c.l.b16 %v3209
  %v3729 = vunpack.c.l.b16 %v3210
  %v3730 = vunpack.c.l.b16 %v3211
  %v3731 = vunpack.c.l.b16 %v3212
  %v3732 = vunpack.c.l.b16 %v3213
  %v3733 = vunpack.c.l.b16 %v3214
  %v3734 = vunpack.c.l.b16 %v3215
  %v3735 = vunpack.c.l.b16 %v3216
  %v3736 = vunpack.c.l.b16 %v3217
  %v3737 = vunpack.c.l.b16 %v3218
  %v3738 = vunpack.c.l.b16 %v3219
  %v3739 = vunpack.c.l.b16 %v3220
  %v3740 = vunpack.c.l.b16 %v3221
  %v3741 = vunpack.c.l.b16 %v3222
  %v3742 = vunpack.c.l.b16 %v3223
  %v3743 = vunpack.c.l.b16 %v3224
  %v3744 = vunpack.c.l.b16 %v3225
  %v3745 = vunpack.c.l.b16 %v3226
  %v3746 = vunpack.c.l.b16 %v3227
  %v3747 = vunpack.c.l.b16 %v3228
  %v3748 = vunpack.c.l.b16 %v3229
  %v3749 = vunpack.c.l.b16 %v3230
  %v3750 = vunpack.c.l.b16 %v3231
  %v3751 = vunpack.c.l.b16 %v3232
  %v3752 = vunpack.c.l.b16 %v3233
  %v3753 = vunpack.c.l.b16 %v3234
  %v3754 = vunpack.c.l.b16 %v3235
  %v3755 = vunpack.c.l.b16 %v3236
  %v3756 = vunpack.c.l.b16 %v3237
  %v3757 = vunpack.c.l.b16 %v3238
  %v3758 = vunpack.c.l.b16 %v3239
  %v3759 = vunpack.c.l.b16 %v3240
  %v3760 = vunpack.c.l.b16 %v3241
  %v3761 = vunpack.c.l.b16 %v3242
  %v3762 = vunpack.c.l.b16 %v3243
  %v3763 = vunpack.c.l.b16 %v3244
  %v3764 = vunpack.c.l.b16 %v3245
  %v3765 = vunpack.c.l.b16 %v3246
  %v3766 = vunpack.c.l.b16 %v3247
  %v3767 = vunpack.c.l.b16 %v3248
  %v3768 = vunpack.c.l.b16 %v3249
  %v3769 = vunpack.c.l.b16 %v3250
  %v3770 = vunpack.c.l.b16 %v3251
  %v3771 = vunpack.c.l.b16 %v3252
  %v3772 = vunpack.c.l.b16 %v3253
  %v3773 = vunpack.c.l.b16 %v3254
  %v3774 = vunpack.c.l.b16 %v3255
  %v3775 = vunpack.c.l.b16 %v3256
  %v3776 = vunpack.c.l.b16 %v3257
  %v3777 = vunpack.c.l.b16 %v3258
  %v3778 = vunpack.c.l.b16 %v3259
  %v3779 = vunpack.c.l.b16 %v3260
  %v3780 = vunpack.c.l.b16 %v3261
  %v3781 = vunpack.c.l.b16 %v3262
  %v3782 = vunpack.c.l.b16 %v3263
  %v3783 = vunpack.c.l.b16 %v3264
  %v3784 = vunpack.c.l.b16 %v3265
  %v3785 = vunpack.c.l.b16 %v3266
  %v3786 = vunpack.c.l.b16 %v3267
  %v3787 = vunpack.c.l.b16 %v3268
  %v3788 = vunpack.c.l.b16 %v3269
  %v3789 = vunpack.c.l.b16 %v3270
  %v3790 = vunpack.c.l.b16 %v3271
  %v3791 = vunpack.c.l.b16 %v3272
  %v3792 = vunpack.c.l.b16 %v3273
  %v3793 = vunpack.c.l.b16 %v3274
  %v3794 = vunpack.c.l.b16 %v3275
  %v3795 = vunpack.c.l.b16 %v3276
  %v3796 = vunpack.c.l.b16 %v3277
  %v3797 = vunpack.c.l.b16 %v3278
  %v3798 = vunpack.c.l.b16 %v3279
  %v3799 = vunpack.c.l.b16 %v3280
  %v3800 = vunpack.c.l.b16 %v3281
  %v3801 = vunpack.c.l.b16 %v3282
  %v3802 = vunpack.c.l.b16 %v3283
  %v3803 = vunpack.c.l.b16 %v3284
  %v3804 = vunpack.c.l.b16 %v3285
  %v3805 = vunpack.c.l.b16 %v3286
  %v3806 = vunpack.c.l.b16 %v3287
  %v3807 = vunpack.c.l.b16 %v3288
  %v3808 = vunpack.c.l.b16 %v3289
  %v3809 = vunpack.c.l.b16 %v3290
  %v3810 = vunpack.c.l.b16 %v3291
  %v3811 = vunpack.c.l.b16 %v3292
  %v3812 = vunpack.c.l.b16 %v3293
  %v3813 = vunpack.c.l.b16 %v3294
  %v3814 = vunpack.c.l.b16 %v3295
  %v3815 = vunpack.c.l.b16 %v3296
  %v3816 = vunpack.c.l.b16 %v3297
  %v3817 = vunpack.c.l.b16 %v3298
  %v3818 = vunpack.c.l.b16 %v3299
  %v3819 = vunpack.c.l.b16 %v3300
  %v3820 = vunpack.c.l.b16 %v3301
  %v3821 = vunpack.c.l.b16 %v3302
  %v3822 = vunpack.c.l.b16 %v3303
  %v3823 = vunpack.c.l.b16 %v3304
  %v3824 = vunpack.c.l.b16 %v3305
  %v3825 = vunpack.c.l.b16 %v3306
  %v3826 = vunpack.c.l.b16 %v3307
  %v3827 = vunpack.c.l.b16 %v3308
  %v3828 = vunpack.c.l.b16 %v3309
  %v3829 = vunpack.c.l.b16 %v3310
  %v3830 = vunpack.c.l.b16 %v3311
  %v3831 = vunpack.c.l.b16 %v3312
  %v3832 = vpack.c.b16 %v3577, %v3576
  %v3833 = vpack.c.b16 %v3579, %v3578
  %v3834 = vpack.c.b16 %v3581, %v3580
  %v3835 = vpack.c.b16 %v3583, %v3582
  %v3836 = vpack.c.b16 %v3585, %v3584
  %v3837 = vpack.c.b16 %v3587, %v3586
  %v3838 = vpack.c.b16 %v3589, %v3588
  %v3839 = vpack.c.b16 %v3591, %v3590
  %v3840 = vpack.c.b16 %v3593, %v3592
  %v3841 = vpack.c.b16 %v3595, %v3594
  %v3842 = vpack.c.b16 %v3597, %v3596
  %v3843 = vpack.c.b16 %v3599, %v3598
  %v3844 = vpack.c.b16 %v3601, %v3600
  %v3845 = vpack.c.b16 %v3603, %v3602
  %v3846 = vpack.c.b16 %v3605, %v3604
  %v3847 = vpack.c.b16 %v3607, %v3606
  %v3848 = vpack.c.b16 %v3609, %v3608
  %v3849 = vpack.c.b16 %v3611, %v3610
  %v3850 = vpack.c.b16 %v3613, %v3612
  %v3851 = vpack.c.b16 %v3615, %v3614
  %v3852 = vpack.c.b16 %v3617, %v3616
  %v3853 = vpack.c.b16 %v3619, %v3618
  %v3854 = vpack.c.b16 %v3621, %v3620
  %v3855 = vpack.c.b16 %v3623, %v3622
  %v3856 = vpack.c.b16 %v3625, %v3624
  %v3857 = vpack.c.b16 %v3627, %v3626
  %v3858 = vpack.c.b16 %v3629, %v3628
  %v3859 = vpack.c.b16 %v3631, %v3630
  %v3860 = vpack.c.b16 %v3633, %v3632
  %v3861 = vpack.c.b16 %v3635, %v3634
  %v3862 = vpack.c.b16 %v3637, %v3636
  %v3863 = vpack.c.b16 %v3639, %v3638
  %v3864 = vpack.c.b16 %v3641, %v3640
  %v3865 = vpack.c.b16 %v3643, %v3642
  %v3866 = vpack.c.b16 %v3645, %v3644
  %v3867 = vpack.c.b16 %v3647, %v3646
  %v3868 = vpack.c.b16 %v3649, %v3648
  %v3869 = vpack.c.b16 %v3651, %v3650
  %v3870 = vpack.c.b16 %v3653, %v3652
  %v3871 = vpack.c.b16 %v3655, %v3654
  %v3872 = vpack.c.b16 %v3657, %v3656
  %v3873 = vpack.c.b16 %v3659, %v3658
  %v3874 = vpack.c.b16 %v3661, %v3660
  %v3875 = vpack.c.b16 %v3663, %v3662
  %v3876 = vpack.c.b16 %v3665, %v3664
  %v3877 = vpack.c.b16 %v3667, %v3666
  %v3878 = vpack.c.b16 %v3669, %v3668
  %v3879 = vpack.c.b16 %v3671, %v3670
  %v3880 = vpack.c.b16 %v3673, %v3672
  %v3881 = vpack.c.b16 %v3675, %v3674
  %v3882 = vpack.c.b16 %v3677, %v3676
  %v3883 = vpack.c.b16 %v3679, %v3678
  %v3884 = vpack.c.b16 %v3681, %v3680
  %v3885 = vpack.c.b16 %v3683, %v3682
  %v3886 = vpack.c.b16 %v3685, %v3684
  %v3887 = vpack.c.b16 %v3687, %v3686
  %v3888 = vpack.c.b16 %v3689, %v3688
  %v3889 = vpack.c.b16 %v3691, %v3690
  %v3890 = vpack.c.b16 %v3693, %v3692
  %v3891 = vpack.c.b16 %v3695, %v3694
  %v3892 = vpack.c.b16 %v3697, %v3696
  %v3893 = vpack.c.b16 %v3699, %v3698
  %v3894 = vpack.c.b16 %v3701, %v3700
  %v3895 = vpack.c.b16 %v3703, %v3702
  %v3896 = vpack.c.b16 %v3705, %v3704
  %v3897 = vpack.c.b16 %v3707, %v3706
  %v3898 = vpack.c.b16 %v3709, %v3708
  %v3899 = vpack.c.b16 %v3711, %v3710
  %v3900 = vpack.c.b16 %v3713, %v3712
  %v3901 = vpack.c.b16 %v3715, %v3714
  %v3902 = vpack.c.b16 %v3717, %v3716
  %v3903 = vpack.c.b16 %v3719, %v3718
  %v3904 = vpack.c.b16 %v3721, %v3720
  %v3905 = vpack.c.b16 %v3723, %v3722
  %v3906 = vpack.c.b16 %v3725, %v3724
  %v3907 = vpack.c.b16 %v3727, %v3726
  %v3908 = vpack.c.b16 %v3729, %v3728
  %v3909 = vpack.c.b16 %v3731, %v3730
  %v3910 = vpack.c.b16 %v3733, %v3732
  %v3911 = vpack.c.b16 %v3735, %v3734
  %v3912 = vpack.c.b16 %v3737, %v3736
  %v3913 = vpack.c.b16 %v3739, %v3738
  %v3914 = vpack.c.b16 %v3741, %v3740
  %v3915 = vpack.c.b16 %v3743, %v3742
  %v3916 = vpack.c.b16 %v3745, %v3744
  %v3917 = vpack.c.b16 %v3747, %v3746
  %v3918 = vpack.c.b16 %v3749, %v3748
  %v3919 = vpack.c.b16 %v3751, %v3750
  %v3920 = vpack.c.b16 %v3753, %v3752
  %v3921 = vpack.c.b16 %v3755, %v3754
  %v3922 = vpack.c.b16 %v3757, %v3756
  %v3923 = vpack.c.b16 %v3759, %v3758
  %v3924 = vpack.c.b16 %v3761, %v3760
  %v3925 = vpack.c.b16 %v3763, %v3762
  %v3926 = vpack.c.b16 %v3765, %v3764
  %v3927 = vpack.c.b16 %v3767, %v3766
  %v3928 = vpack.c.b16 %v3769, %v3768
  %v3929 = vpack.c.b16 %v3771, %v3770
  %v3930 = vpack.c.b16 %v3773, %v3772
  %v3931 = vpack.c.b16 %v3775, %v3774
  %v3932 = vpack.c.b16 %v3777, %v3776
  %v3933 = vpack.c.b16 %v3779, %v3778
  %v3934 = vpack.c.b16 %v3781, %v3780
  %v3935 = vpack.c.b16 %v3783, %v3782
  %v3936 = vpack.c.b16 %v3785, %v3784
  %v3937 = vpack.c.b16 %v3787, %v3786
  %v3938 = vpack.c.b16 %v3789, %v3788
  %v3939 = vpack.c.b16 %v3791, %v3790
  %v3940 = vpack.c.b16 %v3793, %v3792
  %v3941 = vpack.c.b16 %v3795, %v3794
  %v3942 = vpack.c.b16 %v3797, %v3796
  %v3943 = vpack.c.b16 %v3799, %v3798
  %v3944 = vpack.c.b16 %v3801, %v3800
  %v3945 = vpack.c.b16 %v3803, %v3802
  %v3946 = vpack.c.b16 %v3805, %v3804
  %v3947 = vpack.c.b16 %v3807, %v3806
  %v3948 = vpack.c.b16 %v3809, %v3808
  %v3949 = vpack.c.b16 %v3811, %v3810
  %v3950 = vpack.c.b16 %v3813, %v3812
  %v3951 = vpack.c.b16 %v3815, %v3814
  %v3952 = vpack.c.b16 %v3817, %v3816
  %v3953 = vpack.c.b16 %v3819, %v3818
  %v3954 = vpack.c.b16 %v3821, %v3820
  %v3955 = vpack.c.b16 %v3823, %v3822
  %v3956 = vpack.c.b16 %v3825, %v3824
  %v3957 = vpack.c.b16 %v3827, %v3826
  %v3958 = vpack.c.b16 %v3829, %v3828
  %v3959 = vpack.c.b16 %v3831, %v3830
  %4088 = vmatprep.subr.bf16.mxu0 0
  %4089 = vmatpush1.bf16.msra.mxu0 %v3832
  %4090 = vmatprep.subr.bf16.mxu0 0
  %4091 = vmatpush1.bf16.msra.mxu0 %v3833
  %4092 = vmatprep.subr.bf16.mxu0 0
  %4093 = vmatpush1.bf16.msra.mxu0 %v3834
  %4094 = vmatprep.subr.bf16.mxu0 0
  %4095 = vmatpush1.bf16.msra.mxu0 %v3835
  %4096 = vmatprep.subr.bf16.mxu0 0
  %4097 = vmatpush1.bf16.msra.mxu0 %v3836
  %4098 = vmatprep.subr.bf16.mxu0 0
  %4099 = vmatpush1.bf16.msra.mxu0 %v3837
  %4100 = vmatprep.subr.bf16.mxu0 0
  %4101 = vmatpush1.bf16.msra.mxu0 %v3838
  %4102 = vmatprep.subr.bf16.mxu0 0
  %4103 = vmatpush1.bf16.msra.mxu0 %v3839
  %4104 = vmatprep.subr.bf16.mxu0 0
  %4105 = vmatpush1.bf16.msra.mxu0 %v3840
  %4106 = vmatprep.subr.bf16.mxu0 0
  %4107 = vmatpush1.bf16.msra.mxu0 %v3841
  %4108 = vmatprep.subr.bf16.mxu0 0
  %4109 = vmatpush1.bf16.msra.mxu0 %v3842
  %4110 = vmatprep.subr.bf16.mxu0 0
  %4111 = vmatpush1.bf16.msra.mxu0 %v3843
  %4112 = vmatprep.subr.bf16.mxu0 0
  %4113 = vmatpush1.bf16.msra.mxu0 %v3844
  %4114 = vmatprep.subr.bf16.mxu0 0
  %4115 = vmatpush1.bf16.msra.mxu0 %v3845
  %4116 = vmatprep.subr.bf16.mxu0 0
  %4117 = vmatpush1.bf16.msra.mxu0 %v3846
  %4118 = vmatprep.subr.bf16.mxu0 0
  %4119 = vmatpush1.bf16.msra.mxu0 %v3847
  %4120 = vmatprep.mubr.bf16.mxu0 %v3042
  %4121 = vmatmul.mubr.bf16.gmra.mrb[0].mxu0 %v3041
  %v4122 = vpop.f32.mrb[0].mxu0
  %v4123 = vadd.f32 %v3318, %v4122
  %v4124 = vpop.f32.mrb[0].mxu0
  %v4125 = vpop.f32.mrb[0].mxu0
  %v4126 = vadd.f32 %v3318, %v4125
  %v4127 = vpop.f32.mrb[0].mxu0
  %4128 = vdwg.mxu0
  %4129 = vmatprep.subr.bf16.mxu0 0
  %4130 = vmatpush1.bf16.msra.mxu0 %v3848
  %4131 = vmatprep.subr.bf16.mxu0 0
  %4132 = vmatpush1.bf16.msra.mxu0 %v3849
  %4133 = vmatprep.subr.bf16.mxu0 0
  %4134 = vmatpush1.bf16.msra.mxu0 %v3850
  %4135 = vmatprep.subr.bf16.mxu0 0
  %4136 = vmatpush1.bf16.msra.mxu0 %v3851
  %4137 = vmatprep.subr.bf16.mxu0 0
  %4138 = vmatpush1.bf16.msra.mxu0 %v3852
  %4139 = vmatprep.subr.bf16.mxu0 0
  %4140 = vmatpush1.bf16.msra.mxu0 %v3853
  %4141 = vmatprep.subr.bf16.mxu0 0
  %4142 = vmatpush1.bf16.msra.mxu0 %v3854
  %4143 = vmatprep.subr.bf16.mxu0 0
  %4144 = vmatpush1.bf16.msra.mxu0 %v3855
  %4145 = vmatprep.subr.bf16.mxu0 0
  %4146 = vmatpush1.bf16.msra.mxu0 %v3856
  %4147 = vmatprep.subr.bf16.mxu0 0
  %4148 = vmatpush1.bf16.msra.mxu0 %v3857
  %4149 = vmatprep.subr.bf16.mxu0 0
  %4150 = vmatpush1.bf16.msra.mxu0 %v3858
  %4151 = vmatprep.subr.bf16.mxu0 0
  %4152 = vmatpush1.bf16.msra.mxu0 %v3859
  %4153 = vmatprep.subr.bf16.mxu0 0
  %4154 = vmatpush1.bf16.msra.mxu0 %v3860
  %4155 = vmatprep.subr.bf16.mxu0 0
  %4156 = vmatpush1.bf16.msra.mxu0 %v3861
  %4157 = vmatprep.subr.bf16.mxu0 0
  %4158 = vmatpush1.bf16.msra.mxu0 %v3862
  %4159 = vmatprep.subr.bf16.mxu0 0
  %4160 = vmatpush1.bf16.msra.mxu0 %v3863
  %4161 = vmatprep.mubr.bf16.mxu0 %v3044
  %4162 = vmatmul.mubr.bf16.gmra.mrb[0].mxu0 %v3043
  %v4163 = vpop.f32.mrb[0].mxu0
  %v4164 = vadd.f32 %v4123, %v4163
  %v4165 = vpop.f32.mrb[0].mxu0
  %v4166 = vpop.f32.mrb[0].mxu0
  %v4167 = vadd.f32 %v4126, %v4166
  %v4168 = vpop.f32.mrb[0].mxu0
  %4169 = vdwg.mxu0
  %4170 = vmatprep.subr.bf16.mxu0 0
  %4171 = vmatpush1.bf16.msra.mxu0 %v3864
  %4172 = vmatprep.subr.bf16.mxu0 0
  %4173 = vmatpush1.bf16.msra.mxu0 %v3865
  %4174 = vmatprep.subr.bf16.mxu0 0
  %4175 = vmatpush1.bf16.msra.mxu0 %v3866
  %4176 = vmatprep.subr.bf16.mxu0 0
  %4177 = vmatpush1.bf16.msra.mxu0 %v3867
  %4178 = vmatprep.subr.bf16.mxu0 0
  %4179 = vmatpush1.bf16.msra.mxu0 %v3868
  %4180 = vmatprep.subr.bf16.mxu0 0
  %4181 = vmatpush1.bf16.msra.mxu0 %v3869
  %4182 = vmatprep.subr.bf16.mxu0 0
  %4183 = vmatpush1.bf16.msra.mxu0 %v3870
  %4184 = vmatprep.subr.bf16.mxu0 0
  %4185 = vmatpush1.bf16.msra.mxu0 %v3871
  %4186 = vmatprep.subr.bf16.mxu0 0
  %4187 = vmatpush1.bf16.msra.mxu0 %v3872
  %4188 = vmatprep.subr.bf16.mxu0 0
  %4189 = vmatpush1.bf16.msra.mxu0 %v3873
  %4190 = vmatprep.subr.bf16.mxu0 0
  %4191 = vmatpush1.bf16.msra.mxu0 %v3874
  %4192 = vmatprep.subr.bf16.mxu0 0
  %4193 = vmatpush1.bf16.msra.mxu0 %v3875
  %4194 = vmatprep.subr.bf16.mxu0 0
  %4195 = vmatpush1.bf16.msra.mxu0 %v3876
  %4196 = vmatprep.subr.bf16.mxu0 0
  %4197 = vmatpush1.bf16.msra.mxu0 %v3877
  %4198 = vmatprep.subr.bf16.mxu0 0
  %4199 = vmatpush1.bf16.msra.mxu0 %v3878
  %4200 = vmatprep.subr.bf16.mxu0 0
  %4201 = vmatpush1.bf16.msra.mxu0 %v3879
  %4202 = vmatprep.mubr.bf16.mxu0 %v3046
  %4203 = vmatmul.mubr.bf16.gmra.mrb[0].mxu0 %v3045
  %v4204 = vpop.f32.mrb[0].mxu0
  %v4205 = vadd.f32 %v4164, %v4204
  %v4206 = vpop.f32.mrb[0].mxu0
  %v4207 = vpop.f32.mrb[0].mxu0
  %v4208 = vadd.f32 %v4167, %v4207
  %v4209 = vpop.f32.mrb[0].mxu0
  %4210 = vdwg.mxu0
  %4211 = vmatprep.subr.bf16.mxu0 0
  %4212 = vmatpush1.bf16.msra.mxu0 %v3880
  %4213 = vmatprep.subr.bf16.mxu0 0
  %4214 = vmatpush1.bf16.msra.mxu0 %v3881
  %4215 = vmatprep.subr.bf16.mxu0 0
  %4216 = vmatpush1.bf16.msra.mxu0 %v3882
  %4217 = vmatprep.subr.bf16.mxu0 0
  %4218 = vmatpush1.bf16.msra.mxu0 %v3883
  %4219 = vmatprep.subr.bf16.mxu0 0
  %4220 = vmatpush1.bf16.msra.mxu0 %v3884
  %4221 = vmatprep.subr.bf16.mxu0 0
  %4222 = vmatpush1.bf16.msra.mxu0 %v3885
  %4223 = vmatprep.subr.bf16.mxu0 0
  %4224 = vmatpush1.bf16.msra.mxu0 %v3886
  %4225 = vmatprep.subr.bf16.mxu0 0
  %4226 = vmatpush1.bf16.msra.mxu0 %v3887
  %4227 = vmatprep.subr.bf16.mxu0 0
  %4228 = vmatpush1.bf16.msra.mxu0 %v3888
  %4229 = vmatprep.subr.bf16.mxu0 0
  %4230 = vmatpush1.bf16.msra.mxu0 %v3889
  %4231 = vmatprep.subr.bf16.mxu0 0
  %4232 = vmatpush1.bf16.msra.mxu0 %v3890
  %4233 = vmatprep.subr.bf16.mxu0 0
  %4234 = vmatpush1.bf16.msra.mxu0 %v3891
  %4235 = vmatprep.subr.bf16.mxu0 0
  %4236 = vmatpush1.bf16.msra.mxu0 %v3892
  %4237 = vmatprep.subr.bf16.mxu0 0
  %4238 = vmatpush1.bf16.msra.mxu0 %v3893
  %4239 = vmatprep.subr.bf16.mxu0 0
  %4240 = vmatpush1.bf16.msra.mxu0 %v3894
  %4241 = vmatprep.subr.bf16.mxu0 0
  %4242 = vmatpush1.bf16.msra.mxu0 %v3895
  %4243 = vmatprep.mubr.bf16.mxu0 %v3048
  %4244 = vmatmul.mubr.bf16.gmra.mrb[0].mxu0 %v3047
  %v4245 = vpop.f32.mrb[0].mxu0
  %v4246 = vadd.f32 %v4205, %v4245
  %v4247 = vpop.f32.mrb[0].mxu0
  %v4248 = vpop.f32.mrb[0].mxu0
  %v4249 = vadd.f32 %v4208, %v4248
  %v4250 = vpop.f32.mrb[0].mxu0
  %4251 = vdwg.mxu0
  %4252 = vmatprep.subr.bf16.mxu0 0
  %4253 = vmatpush1.bf16.msra.mxu0 %v3896
  %4254 = vmatprep.subr.bf16.mxu0 0
  %4255 = vmatpush1.bf16.msra.mxu0 %v3897
  %4256 = vmatprep.subr.bf16.mxu0 0
  %4257 = vmatpush1.bf16.msra.mxu0 %v3898
  %4258 = vmatprep.subr.bf16.mxu0 0
  %4259 = vmatpush1.bf16.msra.mxu0 %v3899
  %4260 = vmatprep.subr.bf16.mxu0 0
  %4261 = vmatpush1.bf16.msra.mxu0 %v3900
  %4262 = vmatprep.subr.bf16.mxu0 0
  %4263 = vmatpush1.bf16.msra.mxu0 %v3901
  %4264 = vmatprep.subr.bf16.mxu0 0
  %4265 = vmatpush1.bf16.msra.mxu0 %v3902
  %4266 = vmatprep.subr.bf16.mxu0 0
  %4267 = vmatpush1.bf16.msra.mxu0 %v3903
  %4268 = vmatprep.subr.bf16.mxu0 0
  %4269 = vmatpush1.bf16.msra.mxu0 %v3904
  %4270 = vmatprep.subr.bf16.mxu0 0
  %4271 = vmatpush1.bf16.msra.mxu0 %v3905
  %4272 = vmatprep.subr.bf16.mxu0 0
  %4273 = vmatpush1.bf16.msra.mxu0 %v3906
  %4274 = vmatprep.subr.bf16.mxu0 0
  %4275 = vmatpush1.bf16.msra.mxu0 %v3907
  %4276 = vmatprep.subr.bf16.mxu0 0
  %4277 = vmatpush1.bf16.msra.mxu0 %v3908
  %4278 = vmatprep.subr.bf16.mxu0 0
  %4279 = vmatpush1.bf16.msra.mxu0 %v3909
  %4280 = vmatprep.subr.bf16.mxu0 0
  %4281 = vmatpush1.bf16.msra.mxu0 %v3910
  %4282 = vmatprep.subr.bf16.mxu0 0
  %4283 = vmatpush1.bf16.msra.mxu0 %v3911
  %4284 = vmatprep.mubr.bf16.mxu0 %v3050
  %4285 = vmatmul.mubr.bf16.gmra.mrb[0].mxu0 %v3049
  %v4286 = vpop.f32.mrb[0].mxu0
  %v4287 = vadd.f32 %v4246, %v4286
  %v4288 = vpop.f32.mrb[0].mxu0
  %v4289 = vpop.f32.mrb[0].mxu0
  %v4290 = vadd.f32 %v4249, %v4289
  %v4291 = vpop.f32.mrb[0].mxu0
  %4292 = vdwg.mxu0
  %4293 = vmatprep.subr.bf16.mxu0 0
  %4294 = vmatpush1.bf16.msra.mxu0 %v3912
  %4295 = vmatprep.subr.bf16.mxu0 0
  %4296 = vmatpush1.bf16.msra.mxu0 %v3913
  %4297 = vmatprep.subr.bf16.mxu0 0
  %4298 = vmatpush1.bf16.msra.mxu0 %v3914
  %4299 = vmatprep.subr.bf16.mxu0 0
  %4300 = vmatpush1.bf16.msra.mxu0 %v3915
  %4301 = vmatprep.subr.bf16.mxu0 0
  %4302 = vmatpush1.bf16.msra.mxu0 %v3916
  %4303 = vmatprep.subr.bf16.mxu0 0
  %4304 = vmatpush1.bf16.msra.mxu0 %v3917
  %4305 = vmatprep.subr.bf16.mxu0 0
  %4306 = vmatpush1.bf16.msra.mxu0 %v3918
  %4307 = vmatprep.subr.bf16.mxu0 0
  %4308 = vmatpush1.bf16.msra.mxu0 %v3919
  %4309 = vmatprep.subr.bf16.mxu0 0
  %4310 = vmatpush1.bf16.msra.mxu0 %v3920
  %4311 = vmatprep.subr.bf16.mxu0 0
  %4312 = vmatpush1.bf16.msra.mxu0 %v3921
  %4313 = vmatprep.subr.bf16.mxu0 0
  %4314 = vmatpush1.bf16.msra.mxu0 %v3922
  %4315 = vmatprep.subr.bf16.mxu0 0
  %4316 = vmatpush1.bf16.msra.mxu0 %v3923
  %4317 = vmatprep.subr.bf16.mxu0 0
  %4318 = vmatpush1.bf16.msra.mxu0 %v3924
  %4319 = vmatprep.subr.bf16.mxu0 0
  %4320 = vmatpush1.bf16.msra.mxu0 %v3925
  %4321 = vmatprep.subr.bf16.mxu0 0
  %4322 = vmatpush1.bf16.msra.mxu0 %v3926
  %4323 = vmatprep.subr.bf16.mxu0 0
  %4324 = vmatpush1.bf16.msra.mxu0 %v3927
  %4325 = vmatprep.mubr.bf16.mxu0 %v3052
  %4326 = vmatmul.mubr.bf16.gmra.mrb[0].mxu0 %v3051
  %v4327 = vpop.f32.mrb[0].mxu0
  %v4328 = vadd.f32 %v4287, %v4327
  %v4329 = vpop.f32.mrb[0].mxu0
  %v4330 = vpop.f32.mrb[0].mxu0
  %v4331 = vadd.f32 %v4290, %v4330
  %v4332 = vpop.f32.mrb[0].mxu0
  %4333 = vdwg.mxu0
  %4334 = vmatprep.subr.bf16.mxu0 0
  %4335 = vmatpush1.bf16.msra.mxu0 %v3928
  %4336 = vmatprep.subr.bf16.mxu0 0
  %4337 = vmatpush1.bf16.msra.mxu0 %v3929
  %4338 = vmatprep.subr.bf16.mxu0 0
  %4339 = vmatpush1.bf16.msra.mxu0 %v3930
  %4340 = vmatprep.subr.bf16.mxu0 0
  %4341 = vmatpush1.bf16.msra.mxu0 %v3931
  %4342 = vmatprep.subr.bf16.mxu0 0
  %4343 = vmatpush1.bf16.msra.mxu0 %v3932
  %4344 = vmatprep.subr.bf16.mxu0 0
  %4345 = vmatpush1.bf16.msra.mxu0 %v3933
  %4346 = vmatprep.subr.bf16.mxu0 0
  %4347 = vmatpush1.bf16.msra.mxu0 %v3934
  %4348 = vmatprep.subr.bf16.mxu0 0
  %4349 = vmatpush1.bf16.msra.mxu0 %v3935
  %4350 = vmatprep.subr.bf16.mxu0 0
  %4351 = vmatpush1.bf16.msra.mxu0 %v3936
  %4352 = vmatprep.subr.bf16.mxu0 0
  %4353 = vmatpush1.bf16.msra.mxu0 %v3937
  %4354 = vmatprep.subr.bf16.mxu0 0
  %4355 = vmatpush1.bf16.msra.mxu0 %v3938
  %4356 = vmatprep.subr.bf16.mxu0 0
  %4357 = vmatpush1.bf16.msra.mxu0 %v3939
  %4358 = vmatprep.subr.bf16.mxu0 0
  %4359 = vmatpush1.bf16.msra.mxu0 %v3940
  %4360 = vmatprep.subr.bf16.mxu0 0
  %4361 = vmatpush1.bf16.msra.mxu0 %v3941
  %4362 = vmatprep.subr.bf16.mxu0 0
  %4363 = vmatpush1.bf16.msra.mxu0 %v3942
  %4364 = vmatprep.subr.bf16.mxu0 0
  %4365 = vmatpush1.bf16.msra.mxu0 %v3943
  %4366 = vmatprep.mubr.bf16.mxu0 %v3054
  %4367 = vmatmul.mubr.bf16.gmra.mrb[0].mxu0 %v3053
  %v4368 = vpop.f32.mrb[0].mxu0
  %v4369 = vadd.f32 %v4328, %v4368
  %v4370 = vpop.f32.mrb[0].mxu0
  %v4371 = vpop.f32.mrb[0].mxu0
  %v4372 = vadd.f32 %v4331, %v4371
  %v4373 = vpop.f32.mrb[0].mxu0
  %4374 = vdwg.mxu0
  %4375 = vmatprep.subr.bf16.mxu0 0
  %4376 = vmatpush1.bf16.msra.mxu0 %v3944
  %4377 = vmatprep.subr.bf16.mxu0 0
  %4378 = vmatpush1.bf16.msra.mxu0 %v3945
  %4379 = vmatprep.subr.bf16.mxu0 0
  %4380 = vmatpush1.bf16.msra.mxu0 %v3946
  %4381 = vmatprep.subr.bf16.mxu0 0
  %4382 = vmatpush1.bf16.msra.mxu0 %v3947
  %4383 = vmatprep.subr.bf16.mxu0 0
  %4384 = vmatpush1.bf16.msra.mxu0 %v3948
  %4385 = vmatprep.subr.bf16.mxu0 0
  %4386 = vmatpush1.bf16.msra.mxu0 %v3949
  %4387 = vmatprep.subr.bf16.mxu0 0
  %4388 = vmatpush1.bf16.msra.mxu0 %v3950
  %4389 = vmatprep.subr.bf16.mxu0 0
  %4390 = vmatpush1.bf16.msra.mxu0 %v3951
  %4391 = vmatprep.subr.bf16.mxu0 0
  %4392 = vmatpush1.bf16.msra.mxu0 %v3952
  %4393 = vmatprep.subr.bf16.mxu0 0
  %4394 = vmatpush1.bf16.msra.mxu0 %v3953
  %4395 = vmatprep.subr.bf16.mxu0 0
  %4396 = vmatpush1.bf16.msra.mxu0 %v3954
  %4397 = vmatprep.subr.bf16.mxu0 0
  %4398 = vmatpush1.bf16.msra.mxu0 %v3955
  %4399 = vmatprep.subr.bf16.mxu0 0
  %4400 = vmatpush1.bf16.msra.mxu0 %v3956
  %4401 = vmatprep.subr.bf16.mxu0 0
  %4402 = vmatpush1.bf16.msra.mxu0 %v3957
  %4403 = vmatprep.subr.bf16.mxu0 0
  %4404 = vmatpush1.bf16.msra.mxu0 %v3958
  %4405 = vmatprep.subr.bf16.mxu0 0
  %4406 = vmatpush1.bf16.msra.mxu0 %v3959
  %4407 = vmatprep.mubr.bf16.mxu0 %v3056
  %4408 = vmatmul.mubr.bf16.gmra.mrb[0].mxu0 %v3055
  %v4409 = vpop.f32.mrb[0].mxu0
  %v4410 = vadd.f32 %v4369, %v4409
  %v4411 = vpop.f32.mrb[0].mxu0
  %v4412 = vpop.f32.mrb[0].mxu0
  %v4413 = vadd.f32 %v4372, %v4412
  %v4414 = vpop.f32.mrb[0].mxu0
  %4415 = vdwg.mxu0
  %v4416 = vmax.f32 %v4410, 0.0
  %v4417 = vmax.f32 %v4413, 0.0
  %v4418 = vpack.c.bf16 %v4417, %v4416
  %v4419 = vld [vmem:[%s4] sm:$0xf]
  %v4420 = vld [vmem:[%s4 + $0x4] sm:$0xf]
  %v4421 = vld [vmem:[%s4 + $0x8] sm:$0xf]
  %v4422 = vld [vmem:[%s4 + $0xc] sm:$0xf]
  %v4423 = vld [vmem:[%s4 + $0x10] sm:$0xf]
  %v4424 = vld [vmem:[%s4 + $0x14] sm:$0xf]
  %v4425 = vld [vmem:[%s4 + $0x18] sm:$0xf]
  %v4426 = vld [vmem:[%s4 + $0x1c] sm:$0xf]
  %v4427 = vld [vmem:[%s5] sm:$0x1]
  %v4429 = vlaneseq
  %v4430 = vshrl.u32 %v4429, 7
  %v4431 = vsub.s32 0, %v4430
  %v4432 = vrot.slane %v4427, %v4431
  %v4442 = vunpack.c.l.b16 %v4419
  %v4443 = vunpack.c.l.b16 %v4420
  %v4444 = vunpack.c.l.b16 %v4421
  %v4445 = vunpack.c.l.b16 %v4422
  %v4446 = vunpack.c.l.b16 %v4423
  %v4447 = vunpack.c.l.b16 %v4424
  %v4448 = vunpack.c.l.b16 %v4425
  %v4449 = vunpack.c.l.b16 %v4426
  %v4450 = vpack.c.b16 %v4443, %v4442
  %v4451 = vpack.c.b16 %v4445, %v4444
  %v4452 = vpack.c.b16 %v4447, %v4446
  %v4453 = vpack.c.b16 %v4449, %v4448
  %vm4458 = vcmask 523264
  %v4460 = vsel %vm4458, %v4418, 0
  %4462 = vmatprep.subr.bf16.mxu0 0
  %4463 = vmatpush1.bf16.msra.mxu0 %v4450
  %4464 = vmatprep.subr.bf16.mxu0 0
  %4465 = vmatpush1.bf16.msra.mxu0 %v4451
  %4466 = vmatprep.subr.bf16.mxu0 0
  %4467 = vmatpush1.bf16.msra.mxu0 %v4452
  %4468 = vmatprep.subr.bf16.mxu0 0
  %4469 = vmatpush1.bf16.msra.mxu0 %v4453
  %4470 = vmatprep.subr.bf16.mxu0 0
  %4471 = vmatpush1.bf16.msra.mxu0 0
  %4472 = vmatprep.subr.bf16.mxu0 0
  %4473 = vmatpush1.bf16.msra.mxu0 0
  %4474 = vmatprep.subr.bf16.mxu0 0
  %4475 = vmatpush1.bf16.msra.mxu0 0
  %4476 = vmatprep.subr.bf16.mxu0 0
  %4477 = vmatpush1.bf16.msra.mxu0 0
  %4478 = vmatprep.subr.bf16.mxu0 0
  %4479 = vmatpush1.bf16.msra.mxu0 0
  %4480 = vmatprep.subr.bf16.mxu0 0
  %4481 = vmatpush1.bf16.msra.mxu0 0
  %4482 = vmatprep.subr.bf16.mxu0 0
  %4483 = vmatpush1.bf16.msra.mxu0 0
  %4484 = vmatprep.subr.bf16.mxu0 0
  %4485 = vmatpush1.bf16.msra.mxu0 0
  %4486 = vmatprep.subr.bf16.mxu0 0
  %4487 = vmatpush1.bf16.msra.mxu0 0
  %4488 = vmatprep.subr.bf16.mxu0 0
  %4489 = vmatpush1.bf16.msra.mxu0 0
  %4490 = vmatprep.subr.bf16.mxu0 0
  %4491 = vmatpush1.bf16.msra.mxu0 0
  %4492 = vmatprep.subr.bf16.mxu0 0
  %4493 = vmatpush1.bf16.msra.mxu0 0
  %4494 = vmatprep.mubr.bf16.mxu0 0
  %4495 = vmatmul.mubr.bf16.gmra.mrb[0].mxu0 %v4460
  %v4496 = vpop.f32.mrb[0].mxu0
  %v4497 = vadd.f32 %v4432, %v4496
  %v4498 = vpop.f32.mrb[0].mxu0
  %v4499 = vpop.f32.mrb[0].mxu0
  %v4500 = vadd.f32 %v4432, %v4499
  %v4501 = vpop.f32.mrb[0].mxu0
  %4502 = vdwg.mxu0
  %v4503 = vmax.f32 %v4497, 0.0
  %v4504 = vmax.f32 %v4500, 0.0
  %v4505 = vpack.c.bf16 %v4504, %v4503
  %v4506 = vld [vmem:[%s6] sm:$0xf]
  %v4507 = vld [vmem:[%s6 + $0x4] sm:$0xf]
  %v4508 = vld [vmem:[%s6 + $0x8] sm:$0xf]
  %v4509 = vld [vmem:[%s6 + $0xc] sm:$0xf]
  %v4510 = vld [vmem:[%s7] sm:$0x1]
  %v4512 = vlaneseq
  %v4513 = vshrl.u32 %v4512, 7
  %v4514 = vsub.s32 0, %v4513
  %v4515 = vrot.slane %v4510, %v4514
  %v4521 = vunpack.c.l.b16 %v4506
  %v4522 = vunpack.c.l.b16 %v4507
  %v4523 = vunpack.c.l.b16 %v4508
  %v4524 = vunpack.c.l.b16 %v4509
  %v4525 = vpack.c.b16 %v4522, %v4521
  %v4526 = vpack.c.b16 %v4524, %v4523
  %vm4529 = vcmask 261120
  %v4531 = vsel %vm4529, %v4505, 0
  %4533 = vmatprep.subr.bf16.mxu0 0
  %4534 = vmatpush1.bf16.msra.mxu0 %v4525
  %4535 = vmatprep.subr.bf16.mxu0 0
  %4536 = vmatpush1.bf16.msra.mxu0 %v4526
  %4537 = vmatprep.subr.bf16.mxu0 0
  %4538 = vmatpush1.bf16.msra.mxu0 0
  %4539 = vmatprep.subr.bf16.mxu0 0
  %4540 = vmatpush1.bf16.msra.mxu0 0
  %4541 = vmatprep.subr.bf16.mxu0 0
  %4542 = vmatpush1.bf16.msra.mxu0 0
  %4543 = vmatprep.subr.bf16.mxu0 0
  %4544 = vmatpush1.bf16.msra.mxu0 0
  %4545 = vmatprep.subr.bf16.mxu0 0
  %4546 = vmatpush1.bf16.msra.mxu0 0
  %4547 = vmatprep.subr.bf16.mxu0 0
  %4548 = vmatpush1.bf16.msra.mxu0 0
  %4549 = vmatprep.subr.bf16.mxu0 0
  %4550 = vmatpush1.bf16.msra.mxu0 0
  %4551 = vmatprep.subr.bf16.mxu0 0
  %4552 = vmatpush1.bf16.msra.mxu0 0
  %4553 = vmatprep.subr.bf16.mxu0 0
  %4554 = vmatpush1.bf16.msra.mxu0 0
  %4555 = vmatprep.subr.bf16.mxu0 0
  %4556 = vmatpush1.bf16.msra.mxu0 0
  %4557 = vmatprep.subr.bf16.mxu0 0
  %4558 = vmatpush1.bf16.msra.mxu0 0
  %4559 = vmatprep.subr.bf16.mxu0 0
  %4560 = vmatpush1.bf16.msra.mxu0 0
  %4561 = vmatprep.subr.bf16.mxu0 0
  %4562 = vmatpush1.bf16.msra.mxu0 0
  %4563 = vmatprep.subr.bf16.mxu0 0
  %4564 = vmatpush1.bf16.msra.mxu0 0
  %4565 = vmatprep.mubr.bf16.mxu0 0
  %4566 = vmatmul.mubr.bf16.gmra.mrb[0].mxu0 %v4531
  %v4567 = vpop.f32.mrb[0].mxu0
  %v4568 = vadd.f32 %v4515, %v4567
  %v4569 = vpop.f32.mrb[0].mxu0
  %v4570 = vpop.f32.mrb[0].mxu0
  %v4571 = vadd.f32 %v4515, %v4570
  %v4572 = vpop.f32.mrb[0].mxu0
  %4573 = vdwg.mxu0
  %vm4574 = vcmask 31744
  %4575 = vst.msk [vmem:[%s8] sm:$0xff] %vm4574, %v4568
  %4576 = vst.msk [vmem:[%s8 + $0x8] sm:$0xff] %vm4574, %v4571
  // Predicated region
  $region34: #{mlp_forward.1} parent=0 // pred_check
    _
  $region35: #{mlp_forward.1} parent=0 // pred_check_branch
    %4578 = sbr.rel (0) target = $region37
  $region36: #{mlp_forward.1} parent=0 // pred_region
    _
  $region37: #{mlp_forward.1} parent=0 // pred_fallthru
    _
  // Predicated region
  $region38: #{mlp_forward.1} parent=0 // pred_check
    _
  $region39: #{mlp_forward.1} parent=0 // pred_check_branch
    %4580 = sbr.rel (0) target = $region41
  $region40: #{mlp_forward.1} parent=0 // pred_region
    _
  $region41: #{mlp_forward.1} parent=0 // pred_fallthru
    _

</llo_original>
